<compile_context>
chip_gen: v7x
topology: tpu7x:2x2x1
jax: 0.10.0
libtpu: 0.0.40
codegen_flags: <defaults>
</compile_context>

<pallas_src>
import functools

import jax
import jax.numpy as jnp
from jax.experimental import pallas as pl
from jax.experimental.pallas import tpu as pltpu


C = 3                       # in/out channels of every conv
NUM_BLOCKS = 10
NUM_LAYERS = 2 * NUM_BLOCKS  # 20 pointwise convs total
LANES = 128
MAX_TILE_ROWS = 256          # rows of 128 pixels per grid step (bounds VMEM)


def _round_up(a, b):
    return pl.cdiv(a, b) * b


def _fused_blocks_kernel(w_ref, b_ref, ring_ref, x_ref, o_ref, *, num_layers):
    """All `num_layers` 1x1 convs (padding=1; ReLU after the first conv of each
    block) on a lane-dense, VMEM-resident pixel slab, updated in place.

    w_ref    : (num_layers*C*C,) f32 SMEM, layout [layer, out_ch, in_ch]
    b_ref    : (num_layers*C,)   f32 SMEM, layout [layer, out_ch]
    ring_ref : (TR, LANES) f32 VMEM  -- per-pixel activation ring index
    x_ref    : (C, TR, LANES) f32 VMEM (one image's pixel tile, batch squeezed)
    o_ref    : (C, TR, LANES) f32 VMEM (written by every layer, in place)
    """
    ring = ring_ref[...]
    for l in range(num_layers):
        src = x_ref if l == 0 else o_ref
        # Load every input channel before any store: for l > 0, src IS o_ref.
        x0 = src[0]
        x1 = src[1]
        x2 = src[2]
        # Pixels become active one ring per layer; outside the active region the
        # value must stay 0 so the next layer's implicit zero padding is right.
        active = ring <= jnp.float32(l + 1)
        apply_relu = (l % 2 == 0)  # conv1 of each block is followed by ReLU
        wbase = l * C * C
        for o in range(C):
            y = (x0 * w_ref[wbase + o * C + 0]
                 + x1 * w_ref[wbase + o * C + 1]
                 + x2 * w_ref[wbase + o * C + 2]
                 + jnp.where(active, b_ref[l * C + o], 0.0))
            if apply_relu:
                y = jnp.maximum(y, 0.0)
            o_ref[o] = y


def model_with_blocks_forward(x, w_all, b_all, *, num_layers=NUM_LAYERS):
    """x: (N, C, H, W) f32 -> (N, C, H + 2*num_layers, W + 2*num_layers) f32."""
    N, Cc, H, W = x.shape
    assert Cc == C
    off = num_layers                   # placement offset of the image in canvas
    hf = H + 2 * num_layers            # final output height
    wf = W + 2 * num_layers            # final output width
    P = hf * wf                        # valid pixels per image
    R = _round_up(pl.cdiv(P, LANES), 8)        # packed rows of 128 lanes
    TR = min(R, MAX_TILE_ROWS)                 # rows per grid step
    R = _round_up(R, TR)                       # make the row-tile grid exact
    num_tiles = R // TR

    # Ring index: Chebyshev distance (in conv-padding steps) of every canvas
    # pixel to the original HxW region; flat-padding pixels get num_layers+1 so
    # they are never active.  Layer l's active region is exactly {ring <= l+1}.
    r_idx = jnp.arange(hf)
    c_idx = jnp.arange(wf)
    dr = jnp.maximum(jnp.maximum(off - r_idx, r_idx - (off + H - 1)), 0)
    dc = jnp.maximum(jnp.maximum(off - c_idx, c_idx - (off + W - 1)), 0)
    ring = jnp.maximum(dr[:, None], dc[None, :]).astype(jnp.float32).reshape(-1)
    ring = jnp.pad(ring, (0, R * LANES - P),
                   constant_values=float(num_layers + 1)).reshape(R, LANES)

    # Lane-dense canvas, batch-major (no transpose): centre the image inside the
    # (hf, wf) canvas (so every layer's +1 zero pad stays inside), then flatten
    # each (image, channel) pixel plane into R rows of 128 lanes.
    canvas = jnp.pad(x, ((0, 0), (0, 0),
                         (off, hf - off - H), (off, wf - off - W)))
    canvas = canvas.reshape(N, C, P)
    canvas = jnp.pad(canvas, ((0, 0), (0, 0), (0, R * LANES - P)))
    canvas = canvas.reshape(N, C, R, LANES)

    kernel = functools.partial(_fused_blocks_kernel, num_layers=num_layers)

    out = pl.pallas_call(
        kernel,
        out_shape=jax.ShapeDtypeStruct((N, C, R, LANES), jnp.float32),
        grid=(N, num_tiles),
        in_specs=[
            pl.BlockSpec(memory_space=pltpu.MemorySpace.SMEM),        # weights
            pl.BlockSpec(memory_space=pltpu.MemorySpace.SMEM),        # biases
            pl.BlockSpec((TR, LANES), lambda n, t: (t, 0)),           # ring map
            pl.BlockSpec((None, C, TR, LANES), lambda n, t: (n, 0, t, 0)),
        ],
        out_specs=pl.BlockSpec((None, C, TR, LANES), lambda n, t: (n, 0, t, 0)),
        compiler_params=pltpu.CompilerParams(
            dimension_semantics=("parallel", "parallel")),
    )(w_all, b_all, ring, canvas)

    out = out.reshape(N, C, R * LANES)[:, :, :P]
    return out.reshape(N, C, hf, wf)


def init_params(key, num_blocks=NUM_BLOCKS):
    """PyTorch Conv2d default init: U(-1/sqrt(fan_in), 1/sqrt(fan_in)), fan_in=C.
    Returns per-block params (for the reference) and flat stacked arrays
    (for the fused kernel, layout [layer, out_ch, in_ch] / [layer, out_ch])."""
    bound = 1.0 / jnp.sqrt(jnp.float32(C))
    blocks = []
    for _ in range(num_blocks):
        key, k1, k2, k3, k4 = jax.random.split(key, 5)
        w1 = jax.random.uniform(k1, (C, C), jnp.float32, -bound, bound)
        b1 = jax.random.uniform(k2, (C,), jnp.float32, -bound, bound)
        w2 = jax.random.uniform(k3, (C, C), jnp.float32, -bound, bound)
        b2 = jax.random.uniform(k4, (C,), jnp.float32, -bound, bound)
        blocks.append((w1, b1, w2, b2))
    ws, bs = [], []
    for (w1, b1, w2, b2) in blocks:
        ws += [w1, w2]
        bs += [b1, b2]
    w_all = jnp.stack(ws).reshape(-1)   # (num_layers*C*C,)
    b_all = jnp.stack(bs).reshape(-1)   # (num_layers*C,)
    return blocks, w_all, b_all


def reference_forward(x, blocks):
    """Pure-JAX reference with the same semantics (for correctness check)."""
    def conv(x, w, b, relu):
        xp = jnp.pad(x, ((0, 0), (0, 0), (1, 1), (1, 1)))
        y = jnp.einsum("oi,nihw->nohw", w, xp) + b[None, :, None, None]
        return jnp.maximum(y, 0.0) if relu else y
    for (w1, b1, w2, b2) in blocks:
        x = conv(x, w1, b1, True)
        x = conv(x, w2, b2, False)
    return x


if __name__ == "__main__":
    key = jax.random.PRNGKey(0)
    key, xk = jax.random.split(key)
    # Small NCHW input consistent with the module (3 input channels required).
    x = jax.random.normal(xk, (2, 3, 16, 16), jnp.float32)
    blocks, w_all, b_all = init_params(key)

    forward = jax.jit(model_with_blocks_forward)
    out = jax.block_until_ready(forward(x, w_all, b_all))

    ref = reference_forward(x, blocks)
    assert out.shape == (2, 3, 56, 56), out.shape  # spatial grows +4 per block
    assert jnp.allclose(out, ref, atol=1e-4, rtol=1e-4)

    print("KERNEL_OK")
</pallas_src>

<mosaic_0001>
module attributes {stable_mosaic.version = 11 : i64} {
  func.func @_fused_blocks_kernel(%arg0: i32, %arg1: i32, %arg2: memref<180xf32, #tpu.memory_space<smem>>, %arg3: memref<60xf32, #tpu.memory_space<smem>>, %arg4: memref<32x128xf32, #tpu.memory_space<vmem>>, %arg5: memref<1x3x32x128xf32, #tpu.memory_space<vmem>>, %arg6: memref<1x3x32x128xf32, #tpu.memory_space<vmem>>) attributes {dimension_semantics = [#tpu.dimension_semantics<parallel>, #tpu.dimension_semantics<parallel>], iteration_bounds = array<i64: 2, 1>, scalar_prefetch = 0 : i64, scratch_operands = 0 : i64, tpu.core_type = #tpu.core_type<tc>, window_params = [{transform_indices = @transform_0, window_bounds = array<i64: 180>}, {transform_indices = @transform_1, window_bounds = array<i64: 60>}, {transform_indices = @transform_2, window_bounds = array<i64: 32, 128>}, {transform_indices = @transform_3, window_bounds = array<i64: 1, 3, 32, 128>}, {transform_indices = @transform_4, window_bounds = array<i64: 1, 3, 32, 128>}]} {
    %c0 = arith.constant 0 : index
    %c0_0 = arith.constant 0 : index
    %0 = vector.load %arg4[%c0, %c0_0] : memref<32x128xf32, #tpu.memory_space<vmem>>, vector<32x128xf32>
    %c0_1 = arith.constant 0 : index
    %c0_2 = arith.constant 0 : index
    %c0_3 = arith.constant 0 : index
    %c0_4 = arith.constant 0 : index
    %1 = vector.load %arg5[%c0_1, %c0_2, %c0_3, %c0_4] : memref<1x3x32x128xf32, #tpu.memory_space<vmem>>, vector<1x1x32x128xf32>
    %2 = vector.shape_cast %1 : vector<1x1x32x128xf32> to vector<32x128xf32>
    %c0_5 = arith.constant 0 : index
    %c1 = arith.constant 1 : index
    %c0_6 = arith.constant 0 : index
    %c0_7 = arith.constant 0 : index
    %3 = vector.load %arg5[%c0_5, %c1, %c0_6, %c0_7] : memref<1x3x32x128xf32, #tpu.memory_space<vmem>>, vector<1x1x32x128xf32>
    %4 = vector.shape_cast %3 : vector<1x1x32x128xf32> to vector<32x128xf32>
    %c0_8 = arith.constant 0 : index
    %c2 = arith.constant 2 : index
    %c0_9 = arith.constant 0 : index
    %c0_10 = arith.constant 0 : index
    %5 = vector.load %arg5[%c0_8, %c2, %c0_9, %c0_10] : memref<1x3x32x128xf32, #tpu.memory_space<vmem>>, vector<1x1x32x128xf32>
    %6 = vector.shape_cast %5 : vector<1x1x32x128xf32> to vector<32x128xf32>
    %cst = arith.constant 1.000000e+00 : f32
    %7 = vector.broadcast %cst : f32 to vector<32x128xf32>
    %8 = arith.cmpf ole, %0, %7 : vector<32x128xf32>
    %c0_11 = arith.constant 0 : index
    %9 = memref.load %arg2[%c0_11] : memref<180xf32, #tpu.memory_space<smem>>
    %10 = vector.broadcast %9 : f32 to vector<32x128xf32>
    %11 = arith.mulf %2, %10 : vector<32x128xf32>
    %c1_12 = arith.constant 1 : index
    %12 = memref.load %arg2[%c1_12] : memref<180xf32, #tpu.memory_space<smem>>
    %13 = vector.broadcast %12 : f32 to vector<32x128xf32>
    %14 = arith.mulf %4, %13 : vector<32x128xf32>
    %15 = arith.addf %11, %14 : vector<32x128xf32>
    %c2_13 = arith.constant 2 : index
    %16 = memref.load %arg2[%c2_13] : memref<180xf32, #tpu.memory_space<smem>>
    %17 = vector.broadcast %16 : f32 to vector<32x128xf32>
    %18 = arith.mulf %6, %17 : vector<32x128xf32>
    %19 = arith.addf %15, %18 : vector<32x128xf32>
    %c0_14 = arith.constant 0 : index
    %20 = memref.load %arg3[%c0_14] : memref<60xf32, #tpu.memory_space<smem>>
    %cst_15 = arith.constant 0.000000e+00 : f32
    %21 = vector.broadcast %20 : f32 to vector<32x128xf32>
    %22 = vector.broadcast %cst_15 : f32 to vector<32x128xf32>
    %23 = arith.select %8, %21, %22 : vector<32x128xi1>, vector<32x128xf32>
    %24 = arith.addf %19, %23 : vector<32x128xf32>
    %cst_16 = arith.constant 0.000000e+00 : f32
    %25 = vector.broadcast %cst_16 : f32 to vector<32x128xf32>
    %26 = arith.maximumf %24, %25 : vector<32x128xf32>
    %c0_17 = arith.constant 0 : index
    %c0_18 = arith.constant 0 : index
    %c0_19 = arith.constant 0 : index
    %c0_20 = arith.constant 0 : index
    %27 = vector.load %arg6[%c0_17, %c0_18, %c0_19, %c0_20] : memref<1x3x32x128xf32, #tpu.memory_space<vmem>>, vector<1x1x32x128xf32>
    %28 = vector.shape_cast %27 : vector<1x1x32x128xf32> to vector<32x128xf32>
    %29 = vector.shape_cast %26 : vector<32x128xf32> to vector<1x1x32x128xf32>
    tpu.vector_store %arg6[%c0_17, %c0_18, %c0_19, %c0_20], %29 {strides = array<i32>} : memref<1x3x32x128xf32, #tpu.memory_space<vmem>>, vector<1x1x32x128xf32>,
    %c3 = arith.constant 3 : index
    %30 = memref.load %arg2[%c3] : memref<180xf32, #tpu.memory_space<smem>>
    %31 = vector.broadcast %30 : f32 to vector<32x128xf32>
    %32 = arith.mulf %2, %31 : vector<32x128xf32>
    %c4 = arith.constant 4 : index
    %33 = memref.load %arg2[%c4] : memref<180xf32, #tpu.memory_space<smem>>
    %34 = vector.broadcast %33 : f32 to vector<32x128xf32>
    %35 = arith.mulf %4, %34 : vector<32x128xf32>
    %36 = arith.addf %32, %35 : vector<32x128xf32>
    %c5 = arith.constant 5 : index
    %37 = memref.load %arg2[%c5] : memref<180xf32, #tpu.memory_space<smem>>
    %38 = vector.broadcast %37 : f32 to vector<32x128xf32>
    %39 = arith.mulf %6, %38 : vector<32x128xf32>
    %40 = arith.addf %36, %39 : vector<32x128xf32>
    %c1_21 = arith.constant 1 : index
    %41 = memref.load %arg3[%c1_21] : memref<60xf32, #tpu.memory_space<smem>>
    %cst_22 = arith.constant 0.000000e+00 : f32
    %42 = vector.broadcast %41 : f32 to vector<32x128xf32>
    %43 = vector.broadcast %cst_22 : f32 to vector<32x128xf32>
    %44 = arith.select %8, %42, %43 : vector<32x128xi1>, vector<32x128xf32>
    %45 = arith.addf %40, %44 : vector<32x128xf32>
    %cst_23 = arith.constant 0.000000e+00 : f32
    %46 = vector.broadcast %cst_23 : f32 to vector<32x128xf32>
    %47 = arith.maximumf %45, %46 : vector<32x128xf32>
    %c0_24 = arith.constant 0 : index
    %c1_25 = arith.constant 1 : index
    %c0_26 = arith.constant 0 : index
    %c0_27 = arith.constant 0 : index
    %48 = vector.load %arg6[%c0_24, %c1_25, %c0_26, %c0_27] : memref<1x3x32x128xf32, #tpu.memory_space<vmem>>, vector<1x1x32x128xf32>
    %49 = vector.shape_cast %48 : vector<1x1x32x128xf32> to vector<32x128xf32>
    %50 = vector.shape_cast %47 : vector<32x128xf32> to vector<1x1x32x128xf32>
    tpu.vector_store %arg6[%c0_24, %c1_25, %c0_26, %c0_27], %50 {strides = array<i32>} : memref<1x3x32x128xf32, #tpu.memory_space<vmem>>, vector<1x1x32x128xf32>,
    %c6 = arith.constant 6 : index
    %51 = memref.load %arg2[%c6] : memref<180xf32, #tpu.memory_space<smem>>
    %52 = vector.broadcast %51 : f32 to vector<32x128xf32>
    %53 = arith.mulf %2, %52 : vector<32x128xf32>
    %c7 = arith.constant 7 : index
    %54 = memref.load %arg2[%c7] : memref<180xf32, #tpu.memory_space<smem>>
    %55 = vector.broadcast %54 : f32 to vector<32x128xf32>
    %56 = arith.mulf %4, %55 : vector<32x128xf32>
    %57 = arith.addf %53, %56 : vector<32x128xf32>
    %c8 = arith.constant 8 : index
    %58 = memref.load %arg2[%c8] : memref<180xf32, #tpu.memory_space<smem>>
    %59 = vector.broadcast %58 : f32 to vector<32x128xf32>
    %60 = arith.mulf %6, %59 : vector<32x128xf32>
    %61 = arith.addf %57, %60 : vector<32x128xf32>
    %c2_28 = arith.constant 2 : index
    %62 = memref.load %arg3[%c2_28] : memref<60xf32, #tpu.memory_space<smem>>
    %cst_29 = arith.constant 0.000000e+00 : f32
    %63 = vector.broadcast %62 : f32 to vector<32x128xf32>
    %64 = vector.broadcast %cst_29 : f32 to vector<32x128xf32>
    %65 = arith.select %8, %63, %64 : vector<32x128xi1>, vector<32x128xf32>
    %66 = arith.addf %61, %65 : vector<32x128xf32>
    %cst_30 = arith.constant 0.000000e+00 : f32
    %67 = vector.broadcast %cst_30 : f32 to vector<32x128xf32>
    %68 = arith.maximumf %66, %67 : vector<32x128xf32>
    %c0_31 = arith.constant 0 : index
    %c2_32 = arith.constant 2 : index
    %c0_33 = arith.constant 0 : index
    %c0_34 = arith.constant 0 : index
    %69 = vector.load %arg6[%c0_31, %c2_32, %c0_33, %c0_34] : memref<1x3x32x128xf32, #tpu.memory_space<vmem>>, vector<1x1x32x128xf32>
    %70 = vector.shape_cast %69 : vector<1x1x32x128xf32> to vector<32x128xf32>
    %71 = vector.shape_cast %68 : vector<32x128xf32> to vector<1x1x32x128xf32>
    tpu.vector_store %arg6[%c0_31, %c2_32, %c0_33, %c0_34], %71 {strides = array<i32>} : memref<1x3x32x128xf32, #tpu.memory_space<vmem>>, vector<1x1x32x128xf32>,
    %c0_35 = arith.constant 0 : index
    %c0_36 = arith.constant 0 : index
    %c0_37 = arith.constant 0 : index
    %c0_38 = arith.constant 0 : index
    %72 = vector.load %arg6[%c0_35, %c0_36, %c0_37, %c0_38] : memref<1x3x32x128xf32, #tpu.memory_space<vmem>>, vector<1x1x32x128xf32>
    %73 = vector.shape_cast %72 : vector<1x1x32x128xf32> to vector<32x128xf32>
    %c0_39 = arith.constant 0 : index
    %c1_40 = arith.constant 1 : index
    %c0_41 = arith.constant 0 : index
    %c0_42 = arith.constant 0 : index
    %74 = vector.load %arg6[%c0_39, %c1_40, %c0_41, %c0_42] : memref<1x3x32x128xf32, #tpu.memory_space<vmem>>, vector<1x1x32x128xf32>
    %75 = vector.shape_cast %74 : vector<1x1x32x128xf32> to vector<32x128xf32>
    %c0_43 = arith.constant 0 : index
    %c2_44 = arith.constant 2 : index
    %c0_45 = arith.constant 0 : index
    %c0_46 = arith.constant 0 : index
    %76 = vector.load %arg6[%c0_43, %c2_44, %c0_45, %c0_46] : memref<1x3x32x128xf32, #tpu.memory_space<vmem>>, vector<1x1x32x128xf32>
    %77 = vector.shape_cast %76 : vector<1x1x32x128xf32> to vector<32x128xf32>
    %cst_47 = arith.constant 2.000000e+00 : f32
    %78 = vector.broadcast %cst_47 : f32 to vector<32x128xf32>
    %79 = arith.cmpf ole, %0, %78 : vector<32x128xf32>
    %c9 = arith.constant 9 : index
    %80 = memref.load %arg2[%c9] : memref<180xf32, #tpu.memory_space<smem>>
    %81 = vector.broadcast %80 : f32 to vector<32x128xf32>
    %82 = arith.mulf %73, %81 : vector<32x128xf32>
    %c10 = arith.constant 10 : index
    %83 = memref.load %arg2[%c10] : memref<180xf32, #tpu.memory_space<smem>>
    %84 = vector.broadcast %83 : f32 to vector<32x128xf32>
    %85 = arith.mulf %75, %84 : vector<32x128xf32>
    %86 = arith.addf %82, %85 : vector<32x128xf32>
    %c11 = arith.constant 11 : index
    %87 = memref.load %arg2[%c11] : memref<180xf32, #tpu.memory_space<smem>>
    %88 = vector.broadcast %87 : f32 to vector<32x128xf32>
    %89 = arith.mulf %77, %88 : vector<32x128xf32>
    %90 = arith.addf %86, %89 : vector<32x128xf32>
    %c3_48 = arith.constant 3 : index
    %91 = memref.load %arg3[%c3_48] : memref<60xf32, #tpu.memory_space<smem>>
    %cst_49 = arith.constant 0.000000e+00 : f32
    %92 = vector.broadcast %91 : f32 to vector<32x128xf32>
    %93 = vector.broadcast %cst_49 : f32 to vector<32x128xf32>
    %94 = arith.select %79, %92, %93 : vector<32x128xi1>, vector<32x128xf32>
    %95 = arith.addf %90, %94 : vector<32x128xf32>
    %c0_50 = arith.constant 0 : index
    %c0_51 = arith.constant 0 : index
    %c0_52 = arith.constant 0 : index
    %c0_53 = arith.constant 0 : index
    %96 = vector.load %arg6[%c0_50, %c0_51, %c0_52, %c0_53] : memref<1x3x32x128xf32, #tpu.memory_space<vmem>>, vector<1x1x32x128xf32>
    %97 = vector.shape_cast %96 : vector<1x1x32x128xf32> to vector<32x128xf32>
    %98 = vector.shape_cast %95 : vector<32x128xf32> to vector<1x1x32x128xf32>
    tpu.vector_store %arg6[%c0_50, %c0_51, %c0_52, %c0_53], %98 {strides = array<i32>} : memref<1x3x32x128xf32, #tpu.memory_space<vmem>>, vector<1x1x32x128xf32>,
    %c12 = arith.constant 12 : index
    %99 = memref.load %arg2[%c12] : memref<180xf32, #tpu.memory_space<smem>>
    %100 = vector.broadcast %99 : f32 to vector<32x128xf32>
    %101 = arith.mulf %73, %100 : vector<32x128xf32>
    %c13 = arith.constant 13 : index
    %102 = memref.load %arg2[%c13] : memref<180xf32, #tpu.memory_space<smem>>
    %103 = vector.broadcast %102 : f32 to vector<32x128xf32>
    %104 = arith.mulf %75, %103 : vector<32x128xf32>
    %105 = arith.addf %101, %104 : vector<32x128xf32>
    %c14 = arith.constant 14 : index
    %106 = memref.load %arg2[%c14] : memref<180xf32, #tpu.memory_space<smem>>
    %107 = vector.broadcast %106 : f32 to vector<32x128xf32>
    %108 = arith.mulf %77, %107 : vector<32x128xf32>
    %109 = arith.addf %105, %108 : vector<32x128xf32>
    %c4_54 = arith.constant 4 : index
    %110 = memref.load %arg3[%c4_54] : memref<60xf32, #tpu.memory_space<smem>>
    %cst_55 = arith.constant 0.000000e+00 : f32
    %111 = vector.broadcast %110 : f32 to vector<32x128xf32>
    %112 = vector.broadcast %cst_55 : f32 to vector<32x128xf32>
    %113 = arith.select %79, %111, %112 : vector<32x128xi1>, vector<32x128xf32>
    %114 = arith.addf %109, %113 : vector<32x128xf32>
    %c0_56 = arith.constant 0 : index
    %c1_57 = arith.constant 1 : index
    %c0_58 = arith.constant 0 : index
    %c0_59 = arith.constant 0 : index
    %115 = vector.load %arg6[%c0_56, %c1_57, %c0_58, %c0_59] : memref<1x3x32x128xf32, #tpu.memory_space<vmem>>, vector<1x1x32x128xf32>
    %116 = vector.shape_cast %115 : vector<1x1x32x128xf32> to vector<32x128xf32>
    %117 = vector.shape_cast %114 : vector<32x128xf32> to vector<1x1x32x128xf32>
    tpu.vector_store %arg6[%c0_56, %c1_57, %c0_58, %c0_59], %117 {strides = array<i32>} : memref<1x3x32x128xf32, #tpu.memory_space<vmem>>, vector<1x1x32x128xf32>,
    %c15 = arith.constant 15 : index
    %118 = memref.load %arg2[%c15] : memref<180xf32, #tpu.memory_space<smem>>
    %119 = vector.broadcast %118 : f32 to vector<32x128xf32>
    %120 = arith.mulf %73, %119 : vector<32x128xf32>
    %c16 = arith.constant 16 : index
    %121 = memref.load %arg2[%c16] : memref<180xf32, #tpu.memory_space<smem>>
    %122 = vector.broadcast %121 : f32 to vector<32x128xf32>
    %123 = arith.mulf %75, %122 : vector<32x128xf32>
    %124 = arith.addf %120, %123 : vector<32x128xf32>
    %c17 = arith.constant 17 : index
    %125 = memref.load %arg2[%c17] : memref<180xf32, #tpu.memory_space<smem>>
    %126 = vector.broadcast %125 : f32 to vector<32x128xf32>
    %127 = arith.mulf %77, %126 : vector<32x128xf32>
    %128 = arith.addf %124, %127 : vector<32x128xf32>
    %c5_60 = arith.constant 5 : index
    %129 = memref.load %arg3[%c5_60] : memref<60xf32, #tpu.memory_space<smem>>
    %cst_61 = arith.constant 0.000000e+00 : f32
    %130 = vector.broadcast %129 : f32 to vector<32x128xf32>
    %131 = vector.broadcast %cst_61 : f32 to vector<32x128xf32>
    %132 = arith.select %79, %130, %131 : vector<32x128xi1>, vector<32x128xf32>
    %133 = arith.addf %128, %132 : vector<32x128xf32>
    %c0_62 = arith.constant 0 : index
    %c2_63 = arith.constant 2 : index
    %c0_64 = arith.constant 0 : index
    %c0_65 = arith.constant 0 : index
    %134 = vector.load %arg6[%c0_62, %c2_63, %c0_64, %c0_65] : memref<1x3x32x128xf32, #tpu.memory_space<vmem>>, vector<1x1x32x128xf32>
    %135 = vector.shape_cast %134 : vector<1x1x32x128xf32> to vector<32x128xf32>
    %136 = vector.shape_cast %133 : vector<32x128xf32> to vector<1x1x32x128xf32>
    tpu.vector_store %arg6[%c0_62, %c2_63, %c0_64, %c0_65], %136 {strides = array<i32>} : memref<1x3x32x128xf32, #tpu.memory_space<vmem>>, vector<1x1x32x128xf32>,
    %c0_66 = arith.constant 0 : index
    %c0_67 = arith.constant 0 : index
    %c0_68 = arith.constant 0 : index
    %c0_69 = arith.constant 0 : index
    %137 = vector.load %arg6[%c0_66, %c0_67, %c0_68, %c0_69] : memref<1x3x32x128xf32, #tpu.memory_space<vmem>>, vector<1x1x32x128xf32>
    %138 = vector.shape_cast %137 : vector<1x1x32x128xf32> to vector<32x128xf32>
    %c0_70 = arith.constant 0 : index
    %c1_71 = arith.constant 1 : index
    %c0_72 = arith.constant 0 : index
    %c0_73 = arith.constant 0 : index
    %139 = vector.load %arg6[%c0_70, %c1_71, %c0_72, %c0_73] : memref<1x3x32x128xf32, #tpu.memory_space<vmem>>, vector<1x1x32x128xf32>
    %140 = vector.shape_cast %139 : vector<1x1x32x128xf32> to vector<32x128xf32>
    %c0_74 = arith.constant 0 : index
    %c2_75 = arith.constant 2 : index
    %c0_76 = arith.constant 0 : index
    %c0_77 = arith.constant 0 : index
    %141 = vector.load %arg6[%c0_74, %c2_75, %c0_76, %c0_77] : memref<1x3x32x128xf32, #tpu.memory_space<vmem>>, vector<1x1x32x128xf32>
    %142 = vector.shape_cast %141 : vector<1x1x32x128xf32> to vector<32x128xf32>
    %cst_78 = arith.constant 3.000000e+00 : f32
    %143 = vector.broadcast %cst_78 : f32 to vector<32x128xf32>
    %144 = arith.cmpf ole, %0, %143 : vector<32x128xf32>
    %c18 = arith.constant 18 : index
    %145 = memref.load %arg2[%c18] : memref<180xf32, #tpu.memory_space<smem>>
    %146 = vector.broadcast %145 : f32 to vector<32x128xf32>
    %147 = arith.mulf %138, %146 : vector<32x128xf32>
    %c19 = arith.constant 19 : index
    %148 = memref.load %arg2[%c19] : memref<180xf32, #tpu.memory_space<smem>>
    %149 = vector.broadcast %148 : f32 to vector<32x128xf32>
    %150 = arith.mulf %140, %149 : vector<32x128xf32>
    %151 = arith.addf %147, %150 : vector<32x128xf32>
    %c20 = arith.constant 20 : index
    %152 = memref.load %arg2[%c20] : memref<180xf32, #tpu.memory_space<smem>>
    %153 = vector.broadcast %152 : f32 to vector<32x128xf32>
    %154 = arith.mulf %142, %153 : vector<32x128xf32>
    %155 = arith.addf %151, %154 : vector<32x128xf32>
    %c6_79 = arith.constant 6 : index
    %156 = memref.load %arg3[%c6_79] : memref<60xf32, #tpu.memory_space<smem>>
    %cst_80 = arith.constant 0.000000e+00 : f32
    %157 = vector.broadcast %156 : f32 to vector<32x128xf32>
    %158 = vector.broadcast %cst_80 : f32 to vector<32x128xf32>
    %159 = arith.select %144, %157, %158 : vector<32x128xi1>, vector<32x128xf32>
    %160 = arith.addf %155, %159 : vector<32x128xf32>
    %cst_81 = arith.constant 0.000000e+00 : f32
    %161 = vector.broadcast %cst_81 : f32 to vector<32x128xf32>
    %162 = arith.maximumf %160, %161 : vector<32x128xf32>
    %c0_82 = arith.constant 0 : index
    %c0_83 = arith.constant 0 : index
    %c0_84 = arith.constant 0 : index
    %c0_85 = arith.constant 0 : index
    %163 = vector.load %arg6[%c0_82, %c0_83, %c0_84, %c0_85] : memref<1x3x32x128xf32, #tpu.memory_space<vmem>>, vector<1x1x32x128xf32>
    %164 = vector.shape_cast %163 : vector<1x1x32x128xf32> to vector<32x128xf32>
    %165 = vector.shape_cast %162 : vector<32x128xf32> to vector<1x1x32x128xf32>
    tpu.vector_store %arg6[%c0_82, %c0_83, %c0_84, %c0_85], %165 {strides = array<i32>} : memref<1x3x32x128xf32, #tpu.memory_space<vmem>>, vector<1x1x32x128xf32>,
    %c21 = arith.constant 21 : index
    %166 = memref.load %arg2[%c21] : memref<180xf32, #tpu.memory_space<smem>>
    %167 = vector.broadcast %166 : f32 to vector<32x128xf32>
    %168 = arith.mulf %138, %167 : vector<32x128xf32>
    %c22 = arith.constant 22 : index
    %169 = memref.load %arg2[%c22] : memref<180xf32, #tpu.memory_space<smem>>
    %170 = vector.broadcast %169 : f32 to vector<32x128xf32>
    %171 = arith.mulf %140, %170 : vector<32x128xf32>
    %172 = arith.addf %168, %171 : vector<32x128xf32>
    %c23 = arith.constant 23 : index
    %173 = memref.load %arg2[%c23] : memref<180xf32, #tpu.memory_space<smem>>
    %174 = vector.broadcast %173 : f32 to vector<32x128xf32>
    %175 = arith.mulf %142, %174 : vector<32x128xf32>
    %176 = arith.addf %172, %175 : vector<32x128xf32>
    %c7_86 = arith.constant 7 : index
    %177 = memref.load %arg3[%c7_86] : memref<60xf32, #tpu.memory_space<smem>>
    %cst_87 = arith.constant 0.000000e+00 : f32
    %178 = vector.broadcast %177 : f32 to vector<32x128xf32>
    %179 = vector.broadcast %cst_87 : f32 to vector<32x128xf32>
    %180 = arith.select %144, %178, %179 : vector<32x128xi1>, vector<32x128xf32>
    %181 = arith.addf %176, %180 : vector<32x128xf32>
    %cst_88 = arith.constant 0.000000e+00 : f32
    %182 = vector.broadcast %cst_88 : f32 to vector<32x128xf32>
    %183 = arith.maximumf %181, %182 : vector<32x128xf32>
    %c0_89 = arith.constant 0 : index
    %c1_90 = arith.constant 1 : index
    %c0_91 = arith.constant 0 : index
    %c0_92 = arith.constant 0 : index
    %184 = vector.load %arg6[%c0_89, %c1_90, %c0_91, %c0_92] : memref<1x3x32x128xf32, #tpu.memory_space<vmem>>, vector<1x1x32x128xf32>
    %185 = vector.shape_cast %184 : vector<1x1x32x128xf32> to vector<32x128xf32>
    %186 = vector.shape_cast %183 : vector<32x128xf32> to vector<1x1x32x128xf32>
    tpu.vector_store %arg6[%c0_89, %c1_90, %c0_91, %c0_92], %186 {strides = array<i32>} : memref<1x3x32x128xf32, #tpu.memory_space<vmem>>, vector<1x1x32x128xf32>,
    %c24 = arith.constant 24 : index
    %187 = memref.load %arg2[%c24] : memref<180xf32, #tpu.memory_space<smem>>
    %188 = vector.broadcast %187 : f32 to vector<32x128xf32>
    %189 = arith.mulf %138, %188 : vector<32x128xf32>
    %c25 = arith.constant 25 : index
    %190 = memref.load %arg2[%c25] : memref<180xf32, #tpu.memory_space<smem>>
    %191 = vector.broadcast %190 : f32 to vector<32x128xf32>
    %192 = arith.mulf %140, %191 : vector<32x128xf32>
    %193 = arith.addf %189, %192 : vector<32x128xf32>
    %c26 = arith.constant 26 : index
    %194 = memref.load %arg2[%c26] : memref<180xf32, #tpu.memory_space<smem>>
    %195 = vector.broadcast %194 : f32 to vector<32x128xf32>
    %196 = arith.mulf %142, %195 : vector<32x128xf32>
    %197 = arith.addf %193, %196 : vector<32x128xf32>
    %c8_93 = arith.constant 8 : index
    %198 = memref.load %arg3[%c8_93] : memref<60xf32, #tpu.memory_space<smem>>
    %cst_94 = arith.constant 0.000000e+00 : f32
    %199 = vector.broadcast %198 : f32 to vector<32x128xf32>
    %200 = vector.broadcast %cst_94 : f32 to vector<32x128xf32>
    %201 = arith.select %144, %199, %200 : vector<32x128xi1>, vector<32x128xf32>
    %202 = arith.addf %197, %201 : vector<32x128xf32>
    %cst_95 = arith.constant 0.000000e+00 : f32
    %203 = vector.broadcast %cst_95 : f32 to vector<32x128xf32>
    %204 = arith.maximumf %202, %203 : vector<32x128xf32>
    %c0_96 = arith.constant 0 : index
    %c2_97 = arith.constant 2 : index
    %c0_98 = arith.constant 0 : index
    %c0_99 = arith.constant 0 : index
    %205 = vector.load %arg6[%c0_96, %c2_97, %c0_98, %c0_99] : memref<1x3x32x128xf32, #tpu.memory_space<vmem>>, vector<1x1x32x128xf32>
    %206 = vector.shape_cast %205 : vector<1x1x32x128xf32> to vector<32x128xf32>
    %207 = vector.shape_cast %204 : vector<32x128xf32> to vector<1x1x32x128xf32>
    tpu.vector_store %arg6[%c0_96, %c2_97, %c0_98, %c0_99], %207 {strides = array<i32>} : memref<1x3x32x128xf32, #tpu.memory_space<vmem>>, vector<1x1x32x128xf32>,
    %c0_100 = arith.constant 0 : index
    %c0_101 = arith.constant 0 : index
    %c0_102 = arith.constant 0 : index
    %c0_103 = arith.constant 0 : index
    %208 = vector.load %arg6[%c0_100, %c0_101, %c0_102, %c0_103] : memref<1x3x32x128xf32, #tpu.memory_space<vmem>>, vector<1x1x32x128xf32>
    %209 = vector.shape_cast %208 : vector<1x1x32x128xf32> to vector<32x128xf32>
    %c0_104 = arith.constant 0 : index
    %c1_105 = arith.constant 1 : index
    %c0_106 = arith.constant 0 : index
    %c0_107 = arith.constant 0 : index
    %210 = vector.load %arg6[%c0_104, %c1_105, %c0_106, %c0_107] : memref<1x3x32x128xf32, #tpu.memory_space<vmem>>, vector<1x1x32x128xf32>
    %211 = vector.shape_cast %210 : vector<1x1x32x128xf32> to vector<32x128xf32>
    %c0_108 = arith.constant 0 : index
    %c2_109 = arith.constant 2 : index
    %c0_110 = arith.constant 0 : index
    %c0_111 = arith.constant 0 : index
    %212 = vector.load %arg6[%c0_108, %c2_109, %c0_110, %c0_111] : memref<1x3x32x128xf32, #tpu.memory_space<vmem>>, vector<1x1x32x128xf32>
    %213 = vector.shape_cast %212 : vector<1x1x32x128xf32> to vector<32x128xf32>
    %cst_112 = arith.constant 4.000000e+00 : f32
    %214 = vector.broadcast %cst_112 : f32 to vector<32x128xf32>
    %215 = arith.cmpf ole, %0, %214 : vector<32x128xf32>
    %c27 = arith.constant 27 : index
    %216 = memref.load %arg2[%c27] : memref<180xf32, #tpu.memory_space<smem>>
    %217 = vector.broadcast %216 : f32 to vector<32x128xf32>
    %218 = arith.mulf %209, %217 : vector<32x128xf32>
    %c28 = arith.constant 28 : index
    %219 = memref.load %arg2[%c28] : memref<180xf32, #tpu.memory_space<smem>>
    %220 = vector.broadcast %219 : f32 to vector<32x128xf32>
    %221 = arith.mulf %211, %220 : vector<32x128xf32>
    %222 = arith.addf %218, %221 : vector<32x128xf32>
    %c29 = arith.constant 29 : index
    %223 = memref.load %arg2[%c29] : memref<180xf32, #tpu.memory_space<smem>>
    %224 = vector.broadcast %223 : f32 to vector<32x128xf32>
    %225 = arith.mulf %213, %224 : vector<32x128xf32>
    %226 = arith.addf %222, %225 : vector<32x128xf32>
    %c9_113 = arith.constant 9 : index
    %227 = memref.load %arg3[%c9_113] : memref<60xf32, #tpu.memory_space<smem>>
    %cst_114 = arith.constant 0.000000e+00 : f32
    %228 = vector.broadcast %227 : f32 to vector<32x128xf32>
    %229 = vector.broadcast %cst_114 : f32 to vector<32x128xf32>
    %230 = arith.select %215, %228, %229 : vector<32x128xi1>, vector<32x128xf32>
    %231 = arith.addf %226, %230 : vector<32x128xf32>
    %c0_115 = arith.constant 0 : index
    %c0_116 = arith.constant 0 : index
    %c0_117 = arith.constant 0 : index
    %c0_118 = arith.constant 0 : index
    %232 = vector.load %arg6[%c0_115, %c0_116, %c0_117, %c0_118] : memref<1x3x32x128xf32, #tpu.memory_space<vmem>>, vector<1x1x32x128xf32>
    %233 = vector.shape_cast %232 : vector<1x1x32x128xf32> to vector<32x128xf32>
    %234 = vector.shape_cast %231 : vector<32x128xf32> to vector<1x1x32x128xf32>
    tpu.vector_store %arg6[%c0_115, %c0_116, %c0_117, %c0_118], %234 {strides = array<i32>} : memref<1x3x32x128xf32, #tpu.memory_space<vmem>>, vector<1x1x32x128xf32>,
    %c30 = arith.constant 30 : index
    %235 = memref.load %arg2[%c30] : memref<180xf32, #tpu.memory_space<smem>>
    %236 = vector.broadcast %235 : f32 to vector<32x128xf32>
    %237 = arith.mulf %209, %236 : vector<32x128xf32>
    %c31 = arith.constant 31 : index
    %238 = memref.load %arg2[%c31] : memref<180xf32, #tpu.memory_space<smem>>
    %239 = vector.broadcast %238 : f32 to vector<32x128xf32>
    %240 = arith.mulf %211, %239 : vector<32x128xf32>
    %241 = arith.addf %237, %240 : vector<32x128xf32>
    %c32 = arith.constant 32 : index
    %242 = memref.load %arg2[%c32] : memref<180xf32, #tpu.memory_space<smem>>
    %243 = vector.broadcast %242 : f32 to vector<32x128xf32>
    %244 = arith.mulf %213, %243 : vector<32x128xf32>
    %245 = arith.addf %241, %244 : vector<32x128xf32>
    %c10_119 = arith.constant 10 : index
    %246 = memref.load %arg3[%c10_119] : memref<60xf32, #tpu.memory_space<smem>>
    %cst_120 = arith.constant 0.000000e+00 : f32
    %247 = vector.broadcast %246 : f32 to vector<32x128xf32>
    %248 = vector.broadcast %cst_120 : f32 to vector<32x128xf32>
    %249 = arith.select %215, %247, %248 : vector<32x128xi1>, vector<32x128xf32>
    %250 = arith.addf %245, %249 : vector<32x128xf32>
    %c0_121 = arith.constant 0 : index
    %c1_122 = arith.constant 1 : index
    %c0_123 = arith.constant 0 : index
    %c0_124 = arith.constant 0 : index
    %251 = vector.load %arg6[%c0_121, %c1_122, %c0_123, %c0_124] : memref<1x3x32x128xf32, #tpu.memory_space<vmem>>, vector<1x1x32x128xf32>
    %252 = vector.shape_cast %251 : vector<1x1x32x128xf32> to vector<32x128xf32>
    %253 = vector.shape_cast %250 : vector<32x128xf32> to vector<1x1x32x128xf32>
    tpu.vector_store %arg6[%c0_121, %c1_122, %c0_123, %c0_124], %253 {strides = array<i32>} : memref<1x3x32x128xf32, #tpu.memory_space<vmem>>, vector<1x1x32x128xf32>,
    %c33 = arith.constant 33 : index
    %254 = memref.load %arg2[%c33] : memref<180xf32, #tpu.memory_space<smem>>
    %255 = vector.broadcast %254 : f32 to vector<32x128xf32>
    %256 = arith.mulf %209, %255 : vector<32x128xf32>
    %c34 = arith.constant 34 : index
    %257 = memref.load %arg2[%c34] : memref<180xf32, #tpu.memory_space<smem>>
    %258 = vector.broadcast %257 : f32 to vector<32x128xf32>
    %259 = arith.mulf %211, %258 : vector<32x128xf32>
    %260 = arith.addf %256, %259 : vector<32x128xf32>
    %c35 = arith.constant 35 : index
    %261 = memref.load %arg2[%c35] : memref<180xf32, #tpu.memory_space<smem>>
    %262 = vector.broadcast %261 : f32 to vector<32x128xf32>
    %263 = arith.mulf %213, %262 : vector<32x128xf32>
    %264 = arith.addf %260, %263 : vector<32x128xf32>
    %c11_125 = arith.constant 11 : index
    %265 = memref.load %arg3[%c11_125] : memref<60xf32, #tpu.memory_space<smem>>
    %cst_126 = arith.constant 0.000000e+00 : f32
    %266 = vector.broadcast %265 : f32 to vector<32x128xf32>
    %267 = vector.broadcast %cst_126 : f32 to vector<32x128xf32>
    %268 = arith.select %215, %266, %267 : vector<32x128xi1>, vector<32x128xf32>
    %269 = arith.addf %264, %268 : vector<32x128xf32>
    %c0_127 = arith.constant 0 : index
    %c2_128 = arith.constant 2 : index
    %c0_129 = arith.constant 0 : index
    %c0_130 = arith.constant 0 : index
    %270 = vector.load %arg6[%c0_127, %c2_128, %c0_129, %c0_130] : memref<1x3x32x128xf32, #tpu.memory_space<vmem>>, vector<1x1x32x128xf32>
    %271 = vector.shape_cast %270 : vector<1x1x32x128xf32> to vector<32x128xf32>
    %272 = vector.shape_cast %269 : vector<32x128xf32> to vector<1x1x32x128xf32>
    tpu.vector_store %arg6[%c0_127, %c2_128, %c0_129, %c0_130], %272 {strides = array<i32>} : memref<1x3x32x128xf32, #tpu.memory_space<vmem>>, vector<1x1x32x128xf32>,
    %c0_131 = arith.constant 0 : index
    %c0_132 = arith.constant 0 : index
    %c0_133 = arith.constant 0 : index
    %c0_134 = arith.constant 0 : index
    %273 = vector.load %arg6[%c0_131, %c0_132, %c0_133, %c0_134] : memref<1x3x32x128xf32, #tpu.memory_space<vmem>>, vector<1x1x32x128xf32>
    %274 = vector.shape_cast %273 : vector<1x1x32x128xf32> to vector<32x128xf32>
    %c0_135 = arith.constant 0 : index
    %c1_136 = arith.constant 1 : index
    %c0_137 = arith.constant 0 : index
    %c0_138 = arith.constant 0 : index
    %275 = vector.load %arg6[%c0_135, %c1_136, %c0_137, %c0_138] : memref<1x3x32x128xf32, #tpu.memory_space<vmem>>, vector<1x1x32x128xf32>
    %276 = vector.shape_cast %275 : vector<1x1x32x128xf32> to vector<32x128xf32>
    %c0_139 = arith.constant 0 : index
    %c2_140 = arith.constant 2 : index
    %c0_141 = arith.constant 0 : index
    %c0_142 = arith.constant 0 : index
    %277 = vector.load %arg6[%c0_139, %c2_140, %c0_141, %c0_142] : memref<1x3x32x128xf32, #tpu.memory_space<vmem>>, vector<1x1x32x128xf32>
    %278 = vector.shape_cast %277 : vector<1x1x32x128xf32> to vector<32x128xf32>
    %cst_143 = arith.constant 5.000000e+00 : f32
    %279 = vector.broadcast %cst_143 : f32 to vector<32x128xf32>
    %280 = arith.cmpf ole, %0, %279 : vector<32x128xf32>
    %c36 = arith.constant 36 : index
    %281 = memref.load %arg2[%c36] : memref<180xf32, #tpu.memory_space<smem>>
    %282 = vector.broadcast %281 : f32 to vector<32x128xf32>
    %283 = arith.mulf %274, %282 : vector<32x128xf32>
    %c37 = arith.constant 37 : index
    %284 = memref.load %arg2[%c37] : memref<180xf32, #tpu.memory_space<smem>>
    %285 = vector.broadcast %284 : f32 to vector<32x128xf32>
    %286 = arith.mulf %276, %285 : vector<32x128xf32>
    %287 = arith.addf %283, %286 : vector<32x128xf32>
    %c38 = arith.constant 38 : index
    %288 = memref.load %arg2[%c38] : memref<180xf32, #tpu.memory_space<smem>>
    %289 = vector.broadcast %288 : f32 to vector<32x128xf32>
    %290 = arith.mulf %278, %289 : vector<32x128xf32>
    %291 = arith.addf %287, %290 : vector<32x128xf32>
    %c12_144 = arith.constant 12 : index
    %292 = memref.load %arg3[%c12_144] : memref<60xf32, #tpu.memory_space<smem>>
    %cst_145 = arith.constant 0.000000e+00 : f32
    %293 = vector.broadcast %292 : f32 to vector<32x128xf32>
    %294 = vector.broadcast %cst_145 : f32 to vector<32x128xf32>
    %295 = arith.select %280, %293, %294 : vector<32x128xi1>, vector<32x128xf32>
    %296 = arith.addf %291, %295 : vector<32x128xf32>
    %cst_146 = arith.constant 0.000000e+00 : f32
    %297 = vector.broadcast %cst_146 : f32 to vector<32x128xf32>
    %298 = arith.maximumf %296, %297 : vector<32x128xf32>
    %c0_147 = arith.constant 0 : index
    %c0_148 = arith.constant 0 : index
    %c0_149 = arith.constant 0 : index
    %c0_150 = arith.constant 0 : index
    %299 = vector.load %arg6[%c0_147, %c0_148, %c0_149, %c0_150] : memref<1x3x32x128xf32, #tpu.memory_space<vmem>>, vector<1x1x32x128xf32>
    %300 = vector.shape_cast %299 : vector<1x1x32x128xf32> to vector<32x128xf32>
    %301 = vector.shape_cast %298 : vector<32x128xf32> to vector<1x1x32x128xf32>
    tpu.vector_store %arg6[%c0_147, %c0_148, %c0_149, %c0_150], %301 {strides = array<i32>} : memref<1x3x32x128xf32, #tpu.memory_space<vmem>>, vector<1x1x32x128xf32>,
    %c39 = arith.constant 39 : index
    %302 = memref.load %arg2[%c39] : memref<180xf32, #tpu.memory_space<smem>>
    %303 = vector.broadcast %302 : f32 to vector<32x128xf32>
    %304 = arith.mulf %274, %303 : vector<32x128xf32>
    %c40 = arith.constant 40 : index
    %305 = memref.load %arg2[%c40] : memref<180xf32, #tpu.memory_space<smem>>
    %306 = vector.broadcast %305 : f32 to vector<32x128xf32>
    %307 = arith.mulf %276, %306 : vector<32x128xf32>
    %308 = arith.addf %304, %307 : vector<32x128xf32>
    %c41 = arith.constant 41 : index
    %309 = memref.load %arg2[%c41] : memref<180xf32, #tpu.memory_space<smem>>
    %310 = vector.broadcast %309 : f32 to vector<32x128xf32>
    %311 = arith.mulf %278, %310 : vector<32x128xf32>
    %312 = arith.addf %308, %311 : vector<32x128xf32>
    %c13_151 = arith.constant 13 : index
    %313 = memref.load %arg3[%c13_151] : memref<60xf32, #tpu.memory_space<smem>>
    %cst_152 = arith.constant 0.000000e+00 : f32
    %314 = vector.broadcast %313 : f32 to vector<32x128xf32>
    %315 = vector.broadcast %cst_152 : f32 to vector<32x128xf32>
    %316 = arith.select %280, %314, %315 : vector<32x128xi1>, vector<32x128xf32>
    %317 = arith.addf %312, %316 : vector<32x128xf32>
    %cst_153 = arith.constant 0.000000e+00 : f32
    %318 = vector.broadcast %cst_153 : f32 to vector<32x128xf32>
    %319 = arith.maximumf %317, %318 : vector<32x128xf32>
    %c0_154 = arith.constant 0 : index
    %c1_155 = arith.constant 1 : index
    %c0_156 = arith.constant 0 : index
    %c0_157 = arith.constant 0 : index
    %320 = vector.load %arg6[%c0_154, %c1_155, %c0_156, %c0_157] : memref<1x3x32x128xf32, #tpu.memory_space<vmem>>, vector<1x1x32x128xf32>
    %321 = vector.shape_cast %320 : vector<1x1x32x128xf32> to vector<32x128xf32>
    %322 = vector.shape_cast %319 : vector<32x128xf32> to vector<1x1x32x128xf32>
    tpu.vector_store %arg6[%c0_154, %c1_155, %c0_156, %c0_157], %322 {strides = array<i32>} : memref<1x3x32x128xf32, #tpu.memory_space<vmem>>, vector<1x1x32x128xf32>,
    %c42 = arith.constant 42 : index
    %323 = memref.load %arg2[%c42] : memref<180xf32, #tpu.memory_space<smem>>
    %324 = vector.broadcast %323 : f32 to vector<32x128xf32>
    %325 = arith.mulf %274, %324 : vector<32x128xf32>
    %c43 = arith.constant 43 : index
    %326 = memref.load %arg2[%c43] : memref<180xf32, #tpu.memory_space<smem>>
    %327 = vector.broadcast %326 : f32 to vector<32x128xf32>
    %328 = arith.mulf %276, %327 : vector<32x128xf32>
    %329 = arith.addf %325, %328 : vector<32x128xf32>
    %c44 = arith.constant 44 : index
    %330 = memref.load %arg2[%c44] : memref<180xf32, #tpu.memory_space<smem>>
    %331 = vector.broadcast %330 : f32 to vector<32x128xf32>
    %332 = arith.mulf %278, %331 : vector<32x128xf32>
    %333 = arith.addf %329, %332 : vector<32x128xf32>
    %c14_158 = arith.constant 14 : index
    %334 = memref.load %arg3[%c14_158] : memref<60xf32, #tpu.memory_space<smem>>
    %cst_159 = arith.constant 0.000000e+00 : f32
    %335 = vector.broadcast %334 : f32 to vector<32x128xf32>
    %336 = vector.broadcast %cst_159 : f32 to vector<32x128xf32>
    %337 = arith.select %280, %335, %336 : vector<32x128xi1>, vector<32x128xf32>
    %338 = arith.addf %333, %337 : vector<32x128xf32>
    %cst_160 = arith.constant 0.000000e+00 : f32
    %339 = vector.broadcast %cst_160 : f32 to vector<32x128xf32>
    %340 = arith.maximumf %338, %339 : vector<32x128xf32>
    %c0_161 = arith.constant 0 : index
    %c2_162 = arith.constant 2 : index
    %c0_163 = arith.constant 0 : index
    %c0_164 = arith.constant 0 : index
    %341 = vector.load %arg6[%c0_161, %c2_162, %c0_163, %c0_164] : memref<1x3x32x128xf32, #tpu.memory_space<vmem>>, vector<1x1x32x128xf32>
    %342 = vector.shape_cast %341 : vector<1x1x32x128xf32> to vector<32x128xf32>
    %343 = vector.shape_cast %340 : vector<32x128xf32> to vector<1x1x32x128xf32>
    tpu.vector_store %arg6[%c0_161, %c2_162, %c0_163, %c0_164], %343 {strides = array<i32>} : memref<1x3x32x128xf32, #tpu.memory_space<vmem>>, vector<1x1x32x128xf32>,
    %c0_165 = arith.constant 0 : index
    %c0_166 = arith.constant 0 : index
    %c0_167 = arith.constant 0 : index
    %c0_168 = arith.constant 0 : index
    %344 = vector.load %arg6[%c0_165, %c0_166, %c0_167, %c0_168] : memref<1x3x32x128xf32, #tpu.memory_space<vmem>>, vector<1x1x32x128xf32>
    %345 = vector.shape_cast %344 : vector<1x1x32x128xf32> to vector<32x128xf32>
    %c0_169 = arith.constant 0 : index
    %c1_170 = arith.constant 1 : index
    %c0_171 = arith.constant 0 : index
    %c0_172 = arith.constant 0 : index
    %346 = vector.load %arg6[%c0_169, %c1_170, %c0_171, %c0_172] : memref<1x3x32x128xf32, #tpu.memory_space<vmem>>, vector<1x1x32x128xf32>
    %347 = vector.shape_cast %346 : vector<1x1x32x128xf32> to vector<32x128xf32>
    %c0_173 = arith.constant 0 : index
    %c2_174 = arith.constant 2 : index
    %c0_175 = arith.constant 0 : index
    %c0_176 = arith.constant 0 : index
    %348 = vector.load %arg6[%c0_173, %c2_174, %c0_175, %c0_176] : memref<1x3x32x128xf32, #tpu.memory_space<vmem>>, vector<1x1x32x128xf32>
    %349 = vector.shape_cast %348 : vector<1x1x32x128xf32> to vector<32x128xf32>
    %cst_177 = arith.constant 6.000000e+00 : f32
    %350 = vector.broadcast %cst_177 : f32 to vector<32x128xf32>
    %351 = arith.cmpf ole, %0, %350 : vector<32x128xf32>
    %c45 = arith.constant 45 : index
    %352 = memref.load %arg2[%c45] : memref<180xf32, #tpu.memory_space<smem>>
    %353 = vector.broadcast %352 : f32 to vector<32x128xf32>
    %354 = arith.mulf %345, %353 : vector<32x128xf32>
    %c46 = arith.constant 46 : index
    %355 = memref.load %arg2[%c46] : memref<180xf32, #tpu.memory_space<smem>>
    %356 = vector.broadcast %355 : f32 to vector<32x128xf32>
    %357 = arith.mulf %347, %356 : vector<32x128xf32>
    %358 = arith.addf %354, %357 : vector<32x128xf32>
    %c47 = arith.constant 47 : index
    %359 = memref.load %arg2[%c47] : memref<180xf32, #tpu.memory_space<smem>>
    %360 = vector.broadcast %359 : f32 to vector<32x128xf32>
    %361 = arith.mulf %349, %360 : vector<32x128xf32>
    %362 = arith.addf %358, %361 : vector<32x128xf32>
    %c15_178 = arith.constant 15 : index
    %363 = memref.load %arg3[%c15_178] : memref<60xf32, #tpu.memory_space<smem>>
    %cst_179 = arith.constant 0.000000e+00 : f32
    %364 = vector.broadcast %363 : f32 to vector<32x128xf32>
    %365 = vector.broadcast %cst_179 : f32 to vector<32x128xf32>
    %366 = arith.select %351, %364, %365 : vector<32x128xi1>, vector<32x128xf32>
    %367 = arith.addf %362, %366 : vector<32x128xf32>
    %c0_180 = arith.constant 0 : index
    %c0_181 = arith.constant 0 : index
    %c0_182 = arith.constant 0 : index
    %c0_183 = arith.constant 0 : index
    %368 = vector.load %arg6[%c0_180, %c0_181, %c0_182, %c0_183] : memref<1x3x32x128xf32, #tpu.memory_space<vmem>>, vector<1x1x32x128xf32>
    %369 = vector.shape_cast %368 : vector<1x1x32x128xf32> to vector<32x128xf32>
    %370 = vector.shape_cast %367 : vector<32x128xf32> to vector<1x1x32x128xf32>
    tpu.vector_store %arg6[%c0_180, %c0_181, %c0_182, %c0_183], %370 {strides = array<i32>} : memref<1x3x32x128xf32, #tpu.memory_space<vmem>>, vector<1x1x32x128xf32>,
    %c48 = arith.constant 48 : index
    %371 = memref.load %arg2[%c48] : memref<180xf32, #tpu.memory_space<smem>>
    %372 = vector.broadcast %371 : f32 to vector<32x128xf32>
    %373 = arith.mulf %345, %372 : vector<32x128xf32>
    %c49 = arith.constant 49 : index
    %374 = memref.load %arg2[%c49] : memref<180xf32, #tpu.memory_space<smem>>
    %375 = vector.broadcast %374 : f32 to vector<32x128xf32>
    %376 = arith.mulf %347, %375 : vector<32x128xf32>
    %377 = arith.addf %373, %376 : vector<32x128xf32>
    %c50 = arith.constant 50 : index
    %378 = memref.load %arg2[%c50] : memref<180xf32, #tpu.memory_space<smem>>
    %379 = vector.broadcast %378 : f32 to vector<32x128xf32>
    %380 = arith.mulf %349, %379 : vector<32x128xf32>
    %381 = arith.addf %377, %380 : vector<32x128xf32>
    %c16_184 = arith.constant 16 : index
    %382 = memref.load %arg3[%c16_184] : memref<60xf32, #tpu.memory_space<smem>>
    %cst_185 = arith.constant 0.000000e+00 : f32
    %383 = vector.broadcast %382 : f32 to vector<32x128xf32>
    %384 = vector.broadcast %cst_185 : f32 to vector<32x128xf32>
    %385 = arith.select %351, %383, %384 : vector<32x128xi1>, vector<32x128xf32>
    %386 = arith.addf %381, %385 : vector<32x128xf32>
    %c0_186 = arith.constant 0 : index
    %c1_187 = arith.constant 1 : index
    %c0_188 = arith.constant 0 : index
    %c0_189 = arith.constant 0 : index
    %387 = vector.load %arg6[%c0_186, %c1_187, %c0_188, %c0_189] : memref<1x3x32x128xf32, #tpu.memory_space<vmem>>, vector<1x1x32x128xf32>
    %388 = vector.shape_cast %387 : vector<1x1x32x128xf32> to vector<32x128xf32>
    %389 = vector.shape_cast %386 : vector<32x128xf32> to vector<1x1x32x128xf32>
    tpu.vector_store %arg6[%c0_186, %c1_187, %c0_188, %c0_189], %389 {strides = array<i32>} : memref<1x3x32x128xf32, #tpu.memory_space<vmem>>, vector<1x1x32x128xf32>,
    %c51 = arith.constant 51 : index
    %390 = memref.load %arg2[%c51] : memref<180xf32, #tpu.memory_space<smem>>
    %391 = vector.broadcast %390 : f32 to vector<32x128xf32>
    %392 = arith.mulf %345, %391 : vector<32x128xf32>
    %c52 = arith.constant 52 : index
    %393 = memref.load %arg2[%c52] : memref<180xf32, #tpu.memory_space<smem>>
    %394 = vector.broadcast %393 : f32 to vector<32x128xf32>
    %395 = arith.mulf %347, %394 : vector<32x128xf32>
    %396 = arith.addf %392, %395 : vector<32x128xf32>
    %c53 = arith.constant 53 : index
    %397 = memref.load %arg2[%c53] : memref<180xf32, #tpu.memory_space<smem>>
    %398 = vector.broadcast %397 : f32 to vector<32x128xf32>
    %399 = arith.mulf %349, %398 : vector<32x128xf32>
    %400 = arith.addf %396, %399 : vector<32x128xf32>
    %c17_190 = arith.constant 17 : index
    %401 = memref.load %arg3[%c17_190] : memref<60xf32, #tpu.memory_space<smem>>
    %cst_191 = arith.constant 0.000000e+00 : f32
    %402 = vector.broadcast %401 : f32 to vector<32x128xf32>
    %403 = vector.broadcast %cst_191 : f32 to vector<32x128xf32>
    %404 = arith.select %351, %402, %403 : vector<32x128xi1>, vector<32x128xf32>
    %405 = arith.addf %400, %404 : vector<32x128xf32>
    %c0_192 = arith.constant 0 : index
    %c2_193 = arith.constant 2 : index
    %c0_194 = arith.constant 0 : index
    %c0_195 = arith.constant 0 : index
    %406 = vector.load %arg6[%c0_192, %c2_193, %c0_194, %c0_195] : memref<1x3x32x128xf32, #tpu.memory_space<vmem>>, vector<1x1x32x128xf32>
    %407 = vector.shape_cast %406 : vector<1x1x32x128xf32> to vector<32x128xf32>
    %408 = vector.shape_cast %405 : vector<32x128xf32> to vector<1x1x32x128xf32>
    tpu.vector_store %arg6[%c0_192, %c2_193, %c0_194, %c0_195], %408 {strides = array<i32>} : memref<1x3x32x128xf32, #tpu.memory_space<vmem>>, vector<1x1x32x128xf32>,
    %c0_196 = arith.constant 0 : index
    %c0_197 = arith.constant 0 : index
    %c0_198 = arith.constant 0 : index
    %c0_199 = arith.constant 0 : index
    %409 = vector.load %arg6[%c0_196, %c0_197, %c0_198, %c0_199] : memref<1x3x32x128xf32, #tpu.memory_space<vmem>>, vector<1x1x32x128xf32>
    %410 = vector.shape_cast %409 : vector<1x1x32x128xf32> to vector<32x128xf32>
    %c0_200 = arith.constant 0 : index
    %c1_201 = arith.constant 1 : index
    %c0_202 = arith.constant 0 : index
    %c0_203 = arith.constant 0 : index
    %411 = vector.load %arg6[%c0_200, %c1_201, %c0_202, %c0_203] : memref<1x3x32x128xf32, #tpu.memory_space<vmem>>, vector<1x1x32x128xf32>
    %412 = vector.shape_cast %411 : vector<1x1x32x128xf32> to vector<32x128xf32>
    %c0_204 = arith.constant 0 : index
    %c2_205 = arith.constant 2 : index
    %c0_206 = arith.constant 0 : index
    %c0_207 = arith.constant 0 : index
    %413 = vector.load %arg6[%c0_204, %c2_205, %c0_206, %c0_207] : memref<1x3x32x128xf32, #tpu.memory_space<vmem>>, vector<1x1x32x128xf32>
    %414 = vector.shape_cast %413 : vector<1x1x32x128xf32> to vector<32x128xf32>
    %cst_208 = arith.constant 7.000000e+00 : f32
    %415 = vector.broadcast %cst_208 : f32 to vector<32x128xf32>
    %416 = arith.cmpf ole, %0, %415 : vector<32x128xf32>
    %c54 = arith.constant 54 : index
    %417 = memref.load %arg2[%c54] : memref<180xf32, #tpu.memory_space<smem>>
    %418 = vector.broadcast %417 : f32 to vector<32x128xf32>
    %419 = arith.mulf %410, %418 : vector<32x128xf32>
    %c55 = arith.constant 55 : index
    %420 = memref.load %arg2[%c55] : memref<180xf32, #tpu.memory_space<smem>>
    %421 = vector.broadcast %420 : f32 to vector<32x128xf32>
    %422 = arith.mulf %412, %421 : vector<32x128xf32>
    %423 = arith.addf %419, %422 : vector<32x128xf32>
    %c56 = arith.constant 56 : index
    %424 = memref.load %arg2[%c56] : memref<180xf32, #tpu.memory_space<smem>>
    %425 = vector.broadcast %424 : f32 to vector<32x128xf32>
    %426 = arith.mulf %414, %425 : vector<32x128xf32>
    %427 = arith.addf %423, %426 : vector<32x128xf32>
    %c18_209 = arith.constant 18 : index
    %428 = memref.load %arg3[%c18_209] : memref<60xf32, #tpu.memory_space<smem>>
    %cst_210 = arith.constant 0.000000e+00 : f32
    %429 = vector.broadcast %428 : f32 to vector<32x128xf32>
    %430 = vector.broadcast %cst_210 : f32 to vector<32x128xf32>
    %431 = arith.select %416, %429, %430 : vector<32x128xi1>, vector<32x128xf32>
    %432 = arith.addf %427, %431 : vector<32x128xf32>
    %cst_211 = arith.constant 0.000000e+00 : f32
    %433 = vector.broadcast %cst_211 : f32 to vector<32x128xf32>
    %434 = arith.maximumf %432, %433 : vector<32x128xf32>
    %c0_212 = arith.constant 0 : index
    %c0_213 = arith.constant 0 : index
    %c0_214 = arith.constant 0 : index
    %c0_215 = arith.constant 0 : index
    %435 = vector.load %arg6[%c0_212, %c0_213, %c0_214, %c0_215] : memref<1x3x32x128xf32, #tpu.memory_space<vmem>>, vector<1x1x32x128xf32>
    %436 = vector.shape_cast %435 : vector<1x1x32x128xf32> to vector<32x128xf32>
    %437 = vector.shape_cast %434 : vector<32x128xf32> to vector<1x1x32x128xf32>
    tpu.vector_store %arg6[%c0_212, %c0_213, %c0_214, %c0_215], %437 {strides = array<i32>} : memref<1x3x32x128xf32, #tpu.memory_space<vmem>>, vector<1x1x32x128xf32>,
    %c57 = arith.constant 57 : index
    %438 = memref.load %arg2[%c57] : memref<180xf32, #tpu.memory_space<smem>>
    %439 = vector.broadcast %438 : f32 to vector<32x128xf32>
    %440 = arith.mulf %410, %439 : vector<32x128xf32>
    %c58 = arith.constant 58 : index
    %441 = memref.load %arg2[%c58] : memref<180xf32, #tpu.memory_space<smem>>
    %442 = vector.broadcast %441 : f32 to vector<32x128xf32>
    %443 = arith.mulf %412, %442 : vector<32x128xf32>
    %444 = arith.addf %440, %443 : vector<32x128xf32>
    %c59 = arith.constant 59 : index
    %445 = memref.load %arg2[%c59] : memref<180xf32, #tpu.memory_space<smem>>
    %446 = vector.broadcast %445 : f32 to vector<32x128xf32>
    %447 = arith.mulf %414, %446 : vector<32x128xf32>
    %448 = arith.addf %444, %447 : vector<32x128xf32>
    %c19_216 = arith.constant 19 : index
    %449 = memref.load %arg3[%c19_216] : memref<60xf32, #tpu.memory_space<smem>>
    %cst_217 = arith.constant 0.000000e+00 : f32
    %450 = vector.broadcast %449 : f32 to vector<32x128xf32>
    %451 = vector.broadcast %cst_217 : f32 to vector<32x128xf32>
    %452 = arith.select %416, %450, %451 : vector<32x128xi1>, vector<32x128xf32>
    %453 = arith.addf %448, %452 : vector<32x128xf32>
    %cst_218 = arith.constant 0.000000e+00 : f32
    %454 = vector.broadcast %cst_218 : f32 to vector<32x128xf32>
    %455 = arith.maximumf %453, %454 : vector<32x128xf32>
    %c0_219 = arith.constant 0 : index
    %c1_220 = arith.constant 1 : index
    %c0_221 = arith.constant 0 : index
    %c0_222 = arith.constant 0 : index
    %456 = vector.load %arg6[%c0_219, %c1_220, %c0_221, %c0_222] : memref<1x3x32x128xf32, #tpu.memory_space<vmem>>, vector<1x1x32x128xf32>
    %457 = vector.shape_cast %456 : vector<1x1x32x128xf32> to vector<32x128xf32>
    %458 = vector.shape_cast %455 : vector<32x128xf32> to vector<1x1x32x128xf32>
    tpu.vector_store %arg6[%c0_219, %c1_220, %c0_221, %c0_222], %458 {strides = array<i32>} : memref<1x3x32x128xf32, #tpu.memory_space<vmem>>, vector<1x1x32x128xf32>,
    %c60 = arith.constant 60 : index
    %459 = memref.load %arg2[%c60] : memref<180xf32, #tpu.memory_space<smem>>
    %460 = vector.broadcast %459 : f32 to vector<32x128xf32>
    %461 = arith.mulf %410, %460 : vector<32x128xf32>
    %c61 = arith.constant 61 : index
    %462 = memref.load %arg2[%c61] : memref<180xf32, #tpu.memory_space<smem>>
    %463 = vector.broadcast %462 : f32 to vector<32x128xf32>
    %464 = arith.mulf %412, %463 : vector<32x128xf32>
    %465 = arith.addf %461, %464 : vector<32x128xf32>
    %c62 = arith.constant 62 : index
    %466 = memref.load %arg2[%c62] : memref<180xf32, #tpu.memory_space<smem>>
    %467 = vector.broadcast %466 : f32 to vector<32x128xf32>
    %468 = arith.mulf %414, %467 : vector<32x128xf32>
    %469 = arith.addf %465, %468 : vector<32x128xf32>
    %c20_223 = arith.constant 20 : index
    %470 = memref.load %arg3[%c20_223] : memref<60xf32, #tpu.memory_space<smem>>
    %cst_224 = arith.constant 0.000000e+00 : f32
    %471 = vector.broadcast %470 : f32 to vector<32x128xf32>
    %472 = vector.broadcast %cst_224 : f32 to vector<32x128xf32>
    %473 = arith.select %416, %471, %472 : vector<32x128xi1>, vector<32x128xf32>
    %474 = arith.addf %469, %473 : vector<32x128xf32>
    %cst_225 = arith.constant 0.000000e+00 : f32
    %475 = vector.broadcast %cst_225 : f32 to vector<32x128xf32>
    %476 = arith.maximumf %474, %475 : vector<32x128xf32>
    %c0_226 = arith.constant 0 : index
    %c2_227 = arith.constant 2 : index
    %c0_228 = arith.constant 0 : index
    %c0_229 = arith.constant 0 : index
    %477 = vector.load %arg6[%c0_226, %c2_227, %c0_228, %c0_229] : memref<1x3x32x128xf32, #tpu.memory_space<vmem>>, vector<1x1x32x128xf32>
    %478 = vector.shape_cast %477 : vector<1x1x32x128xf32> to vector<32x128xf32>
    %479 = vector.shape_cast %476 : vector<32x128xf32> to vector<1x1x32x128xf32>
    tpu.vector_store %arg6[%c0_226, %c2_227, %c0_228, %c0_229], %479 {strides = array<i32>} : memref<1x3x32x128xf32, #tpu.memory_space<vmem>>, vector<1x1x32x128xf32>,
    %c0_230 = arith.constant 0 : index
    %c0_231 = arith.constant 0 : index
    %c0_232 = arith.constant 0 : index
    %c0_233 = arith.constant 0 : index
    %480 = vector.load %arg6[%c0_230, %c0_231, %c0_232, %c0_233] : memref<1x3x32x128xf32, #tpu.memory_space<vmem>>, vector<1x1x32x128xf32>
    %481 = vector.shape_cast %480 : vector<1x1x32x128xf32> to vector<32x128xf32>
    %c0_234 = arith.constant 0 : index
    %c1_235 = arith.constant 1 : index
    %c0_236 = arith.constant 0 : index
    %c0_237 = arith.constant 0 : index
    %482 = vector.load %arg6[%c0_234, %c1_235, %c0_236, %c0_237] : memref<1x3x32x128xf32, #tpu.memory_space<vmem>>, vector<1x1x32x128xf32>
    %483 = vector.shape_cast %482 : vector<1x1x32x128xf32> to vector<32x128xf32>
    %c0_238 = arith.constant 0 : index
    %c2_239 = arith.constant 2 : index
    %c0_240 = arith.constant 0 : index
    %c0_241 = arith.constant 0 : index
    %484 = vector.load %arg6[%c0_238, %c2_239, %c0_240, %c0_241] : memref<1x3x32x128xf32, #tpu.memory_space<vmem>>, vector<1x1x32x128xf32>
    %485 = vector.shape_cast %484 : vector<1x1x32x128xf32> to vector<32x128xf32>
    %cst_242 = arith.constant 8.000000e+00 : f32
    %486 = vector.broadcast %cst_242 : f32 to vector<32x128xf32>
    %487 = arith.cmpf ole, %0, %486 : vector<32x128xf32>
    %c63 = arith.constant 63 : index
    %488 = memref.load %arg2[%c63] : memref<180xf32, #tpu.memory_space<smem>>
    %489 = vector.broadcast %488 : f32 to vector<32x128xf32>
    %490 = arith.mulf %481, %489 : vector<32x128xf32>
    %c64 = arith.constant 64 : index
    %491 = memref.load %arg2[%c64] : memref<180xf32, #tpu.memory_space<smem>>
    %492 = vector.broadcast %491 : f32 to vector<32x128xf32>
    %493 = arith.mulf %483, %492 : vector<32x128xf32>
    %494 = arith.addf %490, %493 : vector<32x128xf32>
    %c65 = arith.constant 65 : index
    %495 = memref.load %arg2[%c65] : memref<180xf32, #tpu.memory_space<smem>>
    %496 = vector.broadcast %495 : f32 to vector<32x128xf32>
    %497 = arith.mulf %485, %496 : vector<32x128xf32>
    %498 = arith.addf %494, %497 : vector<32x128xf32>
    %c21_243 = arith.constant 21 : index
    %499 = memref.load %arg3[%c21_243] : memref<60xf32, #tpu.memory_space<smem>>
    %cst_244 = arith.constant 0.000000e+00 : f32
    %500 = vector.broadcast %499 : f32 to vector<32x128xf32>
    %501 = vector.broadcast %cst_244 : f32 to vector<32x128xf32>
    %502 = arith.select %487, %500, %501 : vector<32x128xi1>, vector<32x128xf32>
    %503 = arith.addf %498, %502 : vector<32x128xf32>
    %c0_245 = arith.constant 0 : index
    %c0_246 = arith.constant 0 : index
    %c0_247 = arith.constant 0 : index
    %c0_248 = arith.constant 0 : index
    %504 = vector.load %arg6[%c0_245, %c0_246, %c0_247, %c0_248] : memref<1x3x32x128xf32, #tpu.memory_space<vmem>>, vector<1x1x32x128xf32>
    %505 = vector.shape_cast %504 : vector<1x1x32x128xf32> to vector<32x128xf32>
    %506 = vector.shape_cast %503 : vector<32x128xf32> to vector<1x1x32x128xf32>
    tpu.vector_store %arg6[%c0_245, %c0_246, %c0_247, %c0_248], %506 {strides = array<i32>} : memref<1x3x32x128xf32, #tpu.memory_space<vmem>>, vector<1x1x32x128xf32>,
    %c66 = arith.constant 66 : index
    %507 = memref.load %arg2[%c66] : memref<180xf32, #tpu.memory_space<smem>>
    %508 = vector.broadcast %507 : f32 to vector<32x128xf32>
    %509 = arith.mulf %481, %508 : vector<32x128xf32>
    %c67 = arith.constant 67 : index
    %510 = memref.load %arg2[%c67] : memref<180xf32, #tpu.memory_space<smem>>
    %511 = vector.broadcast %510 : f32 to vector<32x128xf32>
    %512 = arith.mulf %483, %511 : vector<32x128xf32>
    %513 = arith.addf %509, %512 : vector<32x128xf32>
    %c68 = arith.constant 68 : index
    %514 = memref.load %arg2[%c68] : memref<180xf32, #tpu.memory_space<smem>>
    %515 = vector.broadcast %514 : f32 to vector<32x128xf32>
    %516 = arith.mulf %485, %515 : vector<32x128xf32>
    %517 = arith.addf %513, %516 : vector<32x128xf32>
    %c22_249 = arith.constant 22 : index
    %518 = memref.load %arg3[%c22_249] : memref<60xf32, #tpu.memory_space<smem>>
    %cst_250 = arith.constant 0.000000e+00 : f32
    %519 = vector.broadcast %518 : f32 to vector<32x128xf32>
    %520 = vector.broadcast %cst_250 : f32 to vector<32x128xf32>
    %521 = arith.select %487, %519, %520 : vector<32x128xi1>, vector<32x128xf32>
    %522 = arith.addf %517, %521 : vector<32x128xf32>
    %c0_251 = arith.constant 0 : index
    %c1_252 = arith.constant 1 : index
    %c0_253 = arith.constant 0 : index
    %c0_254 = arith.constant 0 : index
    %523 = vector.load %arg6[%c0_251, %c1_252, %c0_253, %c0_254] : memref<1x3x32x128xf32, #tpu.memory_space<vmem>>, vector<1x1x32x128xf32>
    %524 = vector.shape_cast %523 : vector<1x1x32x128xf32> to vector<32x128xf32>
    %525 = vector.shape_cast %522 : vector<32x128xf32> to vector<1x1x32x128xf32>
    tpu.vector_store %arg6[%c0_251, %c1_252, %c0_253, %c0_254], %525 {strides = array<i32>} : memref<1x3x32x128xf32, #tpu.memory_space<vmem>>, vector<1x1x32x128xf32>,
    %c69 = arith.constant 69 : index
    %526 = memref.load %arg2[%c69] : memref<180xf32, #tpu.memory_space<smem>>
    %527 = vector.broadcast %526 : f32 to vector<32x128xf32>
    %528 = arith.mulf %481, %527 : vector<32x128xf32>
    %c70 = arith.constant 70 : index
    %529 = memref.load %arg2[%c70] : memref<180xf32, #tpu.memory_space<smem>>
    %530 = vector.broadcast %529 : f32 to vector<32x128xf32>
    %531 = arith.mulf %483, %530 : vector<32x128xf32>
    %532 = arith.addf %528, %531 : vector<32x128xf32>
    %c71 = arith.constant 71 : index
    %533 = memref.load %arg2[%c71] : memref<180xf32, #tpu.memory_space<smem>>
    %534 = vector.broadcast %533 : f32 to vector<32x128xf32>
    %535 = arith.mulf %485, %534 : vector<32x128xf32>
    %536 = arith.addf %532, %535 : vector<32x128xf32>
    %c23_255 = arith.constant 23 : index
    %537 = memref.load %arg3[%c23_255] : memref<60xf32, #tpu.memory_space<smem>>
    %cst_256 = arith.constant 0.000000e+00 : f32
    %538 = vector.broadcast %537 : f32 to vector<32x128xf32>
    %539 = vector.broadcast %cst_256 : f32 to vector<32x128xf32>
    %540 = arith.select %487, %538, %539 : vector<32x128xi1>, vector<32x128xf32>
    %541 = arith.addf %536, %540 : vector<32x128xf32>
    %c0_257 = arith.constant 0 : index
    %c2_258 = arith.constant 2 : index
    %c0_259 = arith.constant 0 : index
    %c0_260 = arith.constant 0 : index
    %542 = vector.load %arg6[%c0_257, %c2_258, %c0_259, %c0_260] : memref<1x3x32x128xf32, #tpu.memory_space<vmem>>, vector<1x1x32x128xf32>
    %543 = vector.shape_cast %542 : vector<1x1x32x128xf32> to vector<32x128xf32>
    %544 = vector.shape_cast %541 : vector<32x128xf32> to vector<1x1x32x128xf32>
    tpu.vector_store %arg6[%c0_257, %c2_258, %c0_259, %c0_260], %544 {strides = array<i32>} : memref<1x3x32x128xf32, #tpu.memory_space<vmem>>, vector<1x1x32x128xf32>,
    %c0_261 = arith.constant 0 : index
    %c0_262 = arith.constant 0 : index
    %c0_263 = arith.constant 0 : index
    %c0_264 = arith.constant 0 : index
    %545 = vector.load %arg6[%c0_261, %c0_262, %c0_263, %c0_264] : memref<1x3x32x128xf32, #tpu.memory_space<vmem>>, vector<1x1x32x128xf32>
    %546 = vector.shape_cast %545 : vector<1x1x32x128xf32> to vector<32x128xf32>
    %c0_265 = arith.constant 0 : index
    %c1_266 = arith.constant 1 : index
    %c0_267 = arith.constant 0 : index
    %c0_268 = arith.constant 0 : index
    %547 = vector.load %arg6[%c0_265, %c1_266, %c0_267, %c0_268] : memref<1x3x32x128xf32, #tpu.memory_space<vmem>>, vector<1x1x32x128xf32>
    %548 = vector.shape_cast %547 : vector<1x1x32x128xf32> to vector<32x128xf32>
    %c0_269 = arith.constant 0 : index
    %c2_270 = arith.constant 2 : index
    %c0_271 = arith.constant 0 : index
    %c0_272 = arith.constant 0 : index
    %549 = vector.load %arg6[%c0_269, %c2_270, %c0_271, %c0_272] : memref<1x3x32x128xf32, #tpu.memory_space<vmem>>, vector<1x1x32x128xf32>
    %550 = vector.shape_cast %549 : vector<1x1x32x128xf32> to vector<32x128xf32>
    %cst_273 = arith.constant 9.000000e+00 : f32
    %551 = vector.broadcast %cst_273 : f32 to vector<32x128xf32>
    %552 = arith.cmpf ole, %0, %551 : vector<32x128xf32>
    %c72 = arith.constant 72 : index
    %553 = memref.load %arg2[%c72] : memref<180xf32, #tpu.memory_space<smem>>
    %554 = vector.broadcast %553 : f32 to vector<32x128xf32>
    %555 = arith.mulf %546, %554 : vector<32x128xf32>
    %c73 = arith.constant 73 : index
    %556 = memref.load %arg2[%c73] : memref<180xf32, #tpu.memory_space<smem>>
    %557 = vector.broadcast %556 : f32 to vector<32x128xf32>
    %558 = arith.mulf %548, %557 : vector<32x128xf32>
    %559 = arith.addf %555, %558 : vector<32x128xf32>
    %c74 = arith.constant 74 : index
    %560 = memref.load %arg2[%c74] : memref<180xf32, #tpu.memory_space<smem>>
    %561 = vector.broadcast %560 : f32 to vector<32x128xf32>
    %562 = arith.mulf %550, %561 : vector<32x128xf32>
    %563 = arith.addf %559, %562 : vector<32x128xf32>
    %c24_274 = arith.constant 24 : index
    %564 = memref.load %arg3[%c24_274] : memref<60xf32, #tpu.memory_space<smem>>
    %cst_275 = arith.constant 0.000000e+00 : f32
    %565 = vector.broadcast %564 : f32 to vector<32x128xf32>
    %566 = vector.broadcast %cst_275 : f32 to vector<32x128xf32>
    %567 = arith.select %552, %565, %566 : vector<32x128xi1>, vector<32x128xf32>
    %568 = arith.addf %563, %567 : vector<32x128xf32>
    %cst_276 = arith.constant 0.000000e+00 : f32
    %569 = vector.broadcast %cst_276 : f32 to vector<32x128xf32>
    %570 = arith.maximumf %568, %569 : vector<32x128xf32>
    %c0_277 = arith.constant 0 : index
    %c0_278 = arith.constant 0 : index
    %c0_279 = arith.constant 0 : index
    %c0_280 = arith.constant 0 : index
    %571 = vector.load %arg6[%c0_277, %c0_278, %c0_279, %c0_280] : memref<1x3x32x128xf32, #tpu.memory_space<vmem>>, vector<1x1x32x128xf32>
    %572 = vector.shape_cast %571 : vector<1x1x32x128xf32> to vector<32x128xf32>
    %573 = vector.shape_cast %570 : vector<32x128xf32> to vector<1x1x32x128xf32>
    tpu.vector_store %arg6[%c0_277, %c0_278, %c0_279, %c0_280], %573 {strides = array<i32>} : memref<1x3x32x128xf32, #tpu.memory_space<vmem>>, vector<1x1x32x128xf32>,
    %c75 = arith.constant 75 : index
    %574 = memref.load %arg2[%c75] : memref<180xf32, #tpu.memory_space<smem>>
    %575 = vector.broadcast %574 : f32 to vector<32x128xf32>
    %576 = arith.mulf %546, %575 : vector<32x128xf32>
    %c76 = arith.constant 76 : index
    %577 = memref.load %arg2[%c76] : memref<180xf32, #tpu.memory_space<smem>>
    %578 = vector.broadcast %577 : f32 to vector<32x128xf32>
    %579 = arith.mulf %548, %578 : vector<32x128xf32>
    %580 = arith.addf %576, %579 : vector<32x128xf32>
    %c77 = arith.constant 77 : index
    %581 = memref.load %arg2[%c77] : memref<180xf32, #tpu.memory_space<smem>>
    %582 = vector.broadcast %581 : f32 to vector<32x128xf32>
    %583 = arith.mulf %550, %582 : vector<32x128xf32>
    %584 = arith.addf %580, %583 : vector<32x128xf32>
    %c25_281 = arith.constant 25 : index
    %585 = memref.load %arg3[%c25_281] : memref<60xf32, #tpu.memory_space<smem>>
    %cst_282 = arith.constant 0.000000e+00 : f32
    %586 = vector.broadcast %585 : f32 to vector<32x128xf32>
    %587 = vector.broadcast %cst_282 : f32 to vector<32x128xf32>
    %588 = arith.select %552, %586, %587 : vector<32x128xi1>, vector<32x128xf32>
    %589 = arith.addf %584, %588 : vector<32x128xf32>
    %cst_283 = arith.constant 0.000000e+00 : f32
    %590 = vector.broadcast %cst_283 : f32 to vector<32x128xf32>
    %591 = arith.maximumf %589, %590 : vector<32x128xf32>
    %c0_284 = arith.constant 0 : index
    %c1_285 = arith.constant 1 : index
    %c0_286 = arith.constant 0 : index
    %c0_287 = arith.constant 0 : index
    %592 = vector.load %arg6[%c0_284, %c1_285, %c0_286, %c0_287] : memref<1x3x32x128xf32, #tpu.memory_space<vmem>>, vector<1x1x32x128xf32>
    %593 = vector.shape_cast %592 : vector<1x1x32x128xf32> to vector<32x128xf32>
    %594 = vector.shape_cast %591 : vector<32x128xf32> to vector<1x1x32x128xf32>
    tpu.vector_store %arg6[%c0_284, %c1_285, %c0_286, %c0_287], %594 {strides = array<i32>} : memref<1x3x32x128xf32, #tpu.memory_space<vmem>>, vector<1x1x32x128xf32>,
    %c78 = arith.constant 78 : index
    %595 = memref.load %arg2[%c78] : memref<180xf32, #tpu.memory_space<smem>>
    %596 = vector.broadcast %595 : f32 to vector<32x128xf32>
    %597 = arith.mulf %546, %596 : vector<32x128xf32>
    %c79 = arith.constant 79 : index
    %598 = memref.load %arg2[%c79] : memref<180xf32, #tpu.memory_space<smem>>
    %599 = vector.broadcast %598 : f32 to vector<32x128xf32>
    %600 = arith.mulf %548, %599 : vector<32x128xf32>
    %601 = arith.addf %597, %600 : vector<32x128xf32>
    %c80 = arith.constant 80 : index
    %602 = memref.load %arg2[%c80] : memref<180xf32, #tpu.memory_space<smem>>
    %603 = vector.broadcast %602 : f32 to vector<32x128xf32>
    %604 = arith.mulf %550, %603 : vector<32x128xf32>
    %605 = arith.addf %601, %604 : vector<32x128xf32>
    %c26_288 = arith.constant 26 : index
    %606 = memref.load %arg3[%c26_288] : memref<60xf32, #tpu.memory_space<smem>>
    %cst_289 = arith.constant 0.000000e+00 : f32
    %607 = vector.broadcast %606 : f32 to vector<32x128xf32>
    %608 = vector.broadcast %cst_289 : f32 to vector<32x128xf32>
    %609 = arith.select %552, %607, %608 : vector<32x128xi1>, vector<32x128xf32>
    %610 = arith.addf %605, %609 : vector<32x128xf32>
    %cst_290 = arith.constant 0.000000e+00 : f32
    %611 = vector.broadcast %cst_290 : f32 to vector<32x128xf32>
    %612 = arith.maximumf %610, %611 : vector<32x128xf32>
    %c0_291 = arith.constant 0 : index
    %c2_292 = arith.constant 2 : index
    %c0_293 = arith.constant 0 : index
    %c0_294 = arith.constant 0 : index
    %613 = vector.load %arg6[%c0_291, %c2_292, %c0_293, %c0_294] : memref<1x3x32x128xf32, #tpu.memory_space<vmem>>, vector<1x1x32x128xf32>
    %614 = vector.shape_cast %613 : vector<1x1x32x128xf32> to vector<32x128xf32>
    %615 = vector.shape_cast %612 : vector<32x128xf32> to vector<1x1x32x128xf32>
    tpu.vector_store %arg6[%c0_291, %c2_292, %c0_293, %c0_294], %615 {strides = array<i32>} : memref<1x3x32x128xf32, #tpu.memory_space<vmem>>, vector<1x1x32x128xf32>,
    %c0_295 = arith.constant 0 : index
    %c0_296 = arith.constant 0 : index
    %c0_297 = arith.constant 0 : index
    %c0_298 = arith.constant 0 : index
    %616 = vector.load %arg6[%c0_295, %c0_296, %c0_297, %c0_298] : memref<1x3x32x128xf32, #tpu.memory_space<vmem>>, vector<1x1x32x128xf32>
    %617 = vector.shape_cast %616 : vector<1x1x32x128xf32> to vector<32x128xf32>
    %c0_299 = arith.constant 0 : index
    %c1_300 = arith.constant 1 : index
    %c0_301 = arith.constant 0 : index
    %c0_302 = arith.constant 0 : index
    %618 = vector.load %arg6[%c0_299, %c1_300, %c0_301, %c0_302] : memref<1x3x32x128xf32, #tpu.memory_space<vmem>>, vector<1x1x32x128xf32>
    %619 = vector.shape_cast %618 : vector<1x1x32x128xf32> to vector<32x128xf32>
    %c0_303 = arith.constant 0 : index
    %c2_304 = arith.constant 2 : index
    %c0_305 = arith.constant 0 : index
    %c0_306 = arith.constant 0 : index
    %620 = vector.load %arg6[%c0_303, %c2_304, %c0_305, %c0_306] : memref<1x3x32x128xf32, #tpu.memory_space<vmem>>, vector<1x1x32x128xf32>
    %621 = vector.shape_cast %620 : vector<1x1x32x128xf32> to vector<32x128xf32>
    %cst_307 = arith.constant 1.000000e+01 : f32
    %622 = vector.broadcast %cst_307 : f32 to vector<32x128xf32>
    %623 = arith.cmpf ole, %0, %622 : vector<32x128xf32>
    %c81 = arith.constant 81 : index
    %624 = memref.load %arg2[%c81] : memref<180xf32, #tpu.memory_space<smem>>
    %625 = vector.broadcast %624 : f32 to vector<32x128xf32>
    %626 = arith.mulf %617, %625 : vector<32x128xf32>
    %c82 = arith.constant 82 : index
    %627 = memref.load %arg2[%c82] : memref<180xf32, #tpu.memory_space<smem>>
    %628 = vector.broadcast %627 : f32 to vector<32x128xf32>
    %629 = arith.mulf %619, %628 : vector<32x128xf32>
    %630 = arith.addf %626, %629 : vector<32x128xf32>
    %c83 = arith.constant 83 : index
    %631 = memref.load %arg2[%c83] : memref<180xf32, #tpu.memory_space<smem>>
    %632 = vector.broadcast %631 : f32 to vector<32x128xf32>
    %633 = arith.mulf %621, %632 : vector<32x128xf32>
    %634 = arith.addf %630, %633 : vector<32x128xf32>
    %c27_308 = arith.constant 27 : index
    %635 = memref.load %arg3[%c27_308] : memref<60xf32, #tpu.memory_space<smem>>
    %cst_309 = arith.constant 0.000000e+00 : f32
    %636 = vector.broadcast %635 : f32 to vector<32x128xf32>
    %637 = vector.broadcast %cst_309 : f32 to vector<32x128xf32>
    %638 = arith.select %623, %636, %637 : vector<32x128xi1>, vector<32x128xf32>
    %639 = arith.addf %634, %638 : vector<32x128xf32>
    %c0_310 = arith.constant 0 : index
    %c0_311 = arith.constant 0 : index
    %c0_312 = arith.constant 0 : index
    %c0_313 = arith.constant 0 : index
    %640 = vector.load %arg6[%c0_310, %c0_311, %c0_312, %c0_313] : memref<1x3x32x128xf32, #tpu.memory_space<vmem>>, vector<1x1x32x128xf32>
    %641 = vector.shape_cast %640 : vector<1x1x32x128xf32> to vector<32x128xf32>
    %642 = vector.shape_cast %639 : vector<32x128xf32> to vector<1x1x32x128xf32>
    tpu.vector_store %arg6[%c0_310, %c0_311, %c0_312, %c0_313], %642 {strides = array<i32>} : memref<1x3x32x128xf32, #tpu.memory_space<vmem>>, vector<1x1x32x128xf32>,
    %c84 = arith.constant 84 : index
    %643 = memref.load %arg2[%c84] : memref<180xf32, #tpu.memory_space<smem>>
    %644 = vector.broadcast %643 : f32 to vector<32x128xf32>
    %645 = arith.mulf %617, %644 : vector<32x128xf32>
    %c85 = arith.constant 85 : index
    %646 = memref.load %arg2[%c85] : memref<180xf32, #tpu.memory_space<smem>>
    %647 = vector.broadcast %646 : f32 to vector<32x128xf32>
    %648 = arith.mulf %619, %647 : vector<32x128xf32>
    %649 = arith.addf %645, %648 : vector<32x128xf32>
    %c86 = arith.constant 86 : index
    %650 = memref.load %arg2[%c86] : memref<180xf32, #tpu.memory_space<smem>>
    %651 = vector.broadcast %650 : f32 to vector<32x128xf32>
    %652 = arith.mulf %621, %651 : vector<32x128xf32>
    %653 = arith.addf %649, %652 : vector<32x128xf32>
    %c28_314 = arith.constant 28 : index
    %654 = memref.load %arg3[%c28_314] : memref<60xf32, #tpu.memory_space<smem>>
    %cst_315 = arith.constant 0.000000e+00 : f32
    %655 = vector.broadcast %654 : f32 to vector<32x128xf32>
    %656 = vector.broadcast %cst_315 : f32 to vector<32x128xf32>
    %657 = arith.select %623, %655, %656 : vector<32x128xi1>, vector<32x128xf32>
    %658 = arith.addf %653, %657 : vector<32x128xf32>
    %c0_316 = arith.constant 0 : index
    %c1_317 = arith.constant 1 : index
    %c0_318 = arith.constant 0 : index
    %c0_319 = arith.constant 0 : index
    %659 = vector.load %arg6[%c0_316, %c1_317, %c0_318, %c0_319] : memref<1x3x32x128xf32, #tpu.memory_space<vmem>>, vector<1x1x32x128xf32>
    %660 = vector.shape_cast %659 : vector<1x1x32x128xf32> to vector<32x128xf32>
    %661 = vector.shape_cast %658 : vector<32x128xf32> to vector<1x1x32x128xf32>
    tpu.vector_store %arg6[%c0_316, %c1_317, %c0_318, %c0_319], %661 {strides = array<i32>} : memref<1x3x32x128xf32, #tpu.memory_space<vmem>>, vector<1x1x32x128xf32>,
    %c87 = arith.constant 87 : index
    %662 = memref.load %arg2[%c87] : memref<180xf32, #tpu.memory_space<smem>>
    %663 = vector.broadcast %662 : f32 to vector<32x128xf32>
    %664 = arith.mulf %617, %663 : vector<32x128xf32>
    %c88 = arith.constant 88 : index
    %665 = memref.load %arg2[%c88] : memref<180xf32, #tpu.memory_space<smem>>
    %666 = vector.broadcast %665 : f32 to vector<32x128xf32>
    %667 = arith.mulf %619, %666 : vector<32x128xf32>
    %668 = arith.addf %664, %667 : vector<32x128xf32>
    %c89 = arith.constant 89 : index
    %669 = memref.load %arg2[%c89] : memref<180xf32, #tpu.memory_space<smem>>
    %670 = vector.broadcast %669 : f32 to vector<32x128xf32>
    %671 = arith.mulf %621, %670 : vector<32x128xf32>
    %672 = arith.addf %668, %671 : vector<32x128xf32>
    %c29_320 = arith.constant 29 : index
    %673 = memref.load %arg3[%c29_320] : memref<60xf32, #tpu.memory_space<smem>>
    %cst_321 = arith.constant 0.000000e+00 : f32
    %674 = vector.broadcast %673 : f32 to vector<32x128xf32>
    %675 = vector.broadcast %cst_321 : f32 to vector<32x128xf32>
    %676 = arith.select %623, %674, %675 : vector<32x128xi1>, vector<32x128xf32>
    %677 = arith.addf %672, %676 : vector<32x128xf32>
    %c0_322 = arith.constant 0 : index
    %c2_323 = arith.constant 2 : index
    %c0_324 = arith.constant 0 : index
    %c0_325 = arith.constant 0 : index
    %678 = vector.load %arg6[%c0_322, %c2_323, %c0_324, %c0_325] : memref<1x3x32x128xf32, #tpu.memory_space<vmem>>, vector<1x1x32x128xf32>
    %679 = vector.shape_cast %678 : vector<1x1x32x128xf32> to vector<32x128xf32>
    %680 = vector.shape_cast %677 : vector<32x128xf32> to vector<1x1x32x128xf32>
    tpu.vector_store %arg6[%c0_322, %c2_323, %c0_324, %c0_325], %680 {strides = array<i32>} : memref<1x3x32x128xf32, #tpu.memory_space<vmem>>, vector<1x1x32x128xf32>,
    %c0_326 = arith.constant 0 : index
    %c0_327 = arith.constant 0 : index
    %c0_328 = arith.constant 0 : index
    %c0_329 = arith.constant 0 : index
    %681 = vector.load %arg6[%c0_326, %c0_327, %c0_328, %c0_329] : memref<1x3x32x128xf32, #tpu.memory_space<vmem>>, vector<1x1x32x128xf32>
    %682 = vector.shape_cast %681 : vector<1x1x32x128xf32> to vector<32x128xf32>
    %c0_330 = arith.constant 0 : index
    %c1_331 = arith.constant 1 : index
    %c0_332 = arith.constant 0 : index
    %c0_333 = arith.constant 0 : index
    %683 = vector.load %arg6[%c0_330, %c1_331, %c0_332, %c0_333] : memref<1x3x32x128xf32, #tpu.memory_space<vmem>>, vector<1x1x32x128xf32>
    %684 = vector.shape_cast %683 : vector<1x1x32x128xf32> to vector<32x128xf32>
    %c0_334 = arith.constant 0 : index
    %c2_335 = arith.constant 2 : index
    %c0_336 = arith.constant 0 : index
    %c0_337 = arith.constant 0 : index
    %685 = vector.load %arg6[%c0_334, %c2_335, %c0_336, %c0_337] : memref<1x3x32x128xf32, #tpu.memory_space<vmem>>, vector<1x1x32x128xf32>
    %686 = vector.shape_cast %685 : vector<1x1x32x128xf32> to vector<32x128xf32>
    %cst_338 = arith.constant 1.100000e+01 : f32
    %687 = vector.broadcast %cst_338 : f32 to vector<32x128xf32>
    %688 = arith.cmpf ole, %0, %687 : vector<32x128xf32>
    %c90 = arith.constant 90 : index
    %689 = memref.load %arg2[%c90] : memref<180xf32, #tpu.memory_space<smem>>
    %690 = vector.broadcast %689 : f32 to vector<32x128xf32>
    %691 = arith.mulf %682, %690 : vector<32x128xf32>
    %c91 = arith.constant 91 : index
    %692 = memref.load %arg2[%c91] : memref<180xf32, #tpu.memory_space<smem>>
    %693 = vector.broadcast %692 : f32 to vector<32x128xf32>
    %694 = arith.mulf %684, %693 : vector<32x128xf32>
    %695 = arith.addf %691, %694 : vector<32x128xf32>
    %c92 = arith.constant 92 : index
    %696 = memref.load %arg2[%c92] : memref<180xf32, #tpu.memory_space<smem>>
    %697 = vector.broadcast %696 : f32 to vector<32x128xf32>
    %698 = arith.mulf %686, %697 : vector<32x128xf32>
    %699 = arith.addf %695, %698 : vector<32x128xf32>
    %c30_339 = arith.constant 30 : index
    %700 = memref.load %arg3[%c30_339] : memref<60xf32, #tpu.memory_space<smem>>
    %cst_340 = arith.constant 0.000000e+00 : f32
    %701 = vector.broadcast %700 : f32 to vector<32x128xf32>
    %702 = vector.broadcast %cst_340 : f32 to vector<32x128xf32>
    %703 = arith.select %688, %701, %702 : vector<32x128xi1>, vector<32x128xf32>
    %704 = arith.addf %699, %703 : vector<32x128xf32>
    %cst_341 = arith.constant 0.000000e+00 : f32
    %705 = vector.broadcast %cst_341 : f32 to vector<32x128xf32>
    %706 = arith.maximumf %704, %705 : vector<32x128xf32>
    %c0_342 = arith.constant 0 : index
    %c0_343 = arith.constant 0 : index
    %c0_344 = arith.constant 0 : index
    %c0_345 = arith.constant 0 : index
    %707 = vector.load %arg6[%c0_342, %c0_343, %c0_344, %c0_345] : memref<1x3x32x128xf32, #tpu.memory_space<vmem>>, vector<1x1x32x128xf32>
    %708 = vector.shape_cast %707 : vector<1x1x32x128xf32> to vector<32x128xf32>
    %709 = vector.shape_cast %706 : vector<32x128xf32> to vector<1x1x32x128xf32>
    tpu.vector_store %arg6[%c0_342, %c0_343, %c0_344, %c0_345], %709 {strides = array<i32>} : memref<1x3x32x128xf32, #tpu.memory_space<vmem>>, vector<1x1x32x128xf32>,
    %c93 = arith.constant 93 : index
    %710 = memref.load %arg2[%c93] : memref<180xf32, #tpu.memory_space<smem>>
    %711 = vector.broadcast %710 : f32 to vector<32x128xf32>
    %712 = arith.mulf %682, %711 : vector<32x128xf32>
    %c94 = arith.constant 94 : index
    %713 = memref.load %arg2[%c94] : memref<180xf32, #tpu.memory_space<smem>>
    %714 = vector.broadcast %713 : f32 to vector<32x128xf32>
    %715 = arith.mulf %684, %714 : vector<32x128xf32>
    %716 = arith.addf %712, %715 : vector<32x128xf32>
    %c95 = arith.constant 95 : index
    %717 = memref.load %arg2[%c95] : memref<180xf32, #tpu.memory_space<smem>>
    %718 = vector.broadcast %717 : f32 to vector<32x128xf32>
    %719 = arith.mulf %686, %718 : vector<32x128xf32>
    %720 = arith.addf %716, %719 : vector<32x128xf32>
    %c31_346 = arith.constant 31 : index
    %721 = memref.load %arg3[%c31_346] : memref<60xf32, #tpu.memory_space<smem>>
    %cst_347 = arith.constant 0.000000e+00 : f32
    %722 = vector.broadcast %721 : f32 to vector<32x128xf32>
    %723 = vector.broadcast %cst_347 : f32 to vector<32x128xf32>
    %724 = arith.select %688, %722, %723 : vector<32x128xi1>, vector<32x128xf32>
    %725 = arith.addf %720, %724 : vector<32x128xf32>
    %cst_348 = arith.constant 0.000000e+00 : f32
    %726 = vector.broadcast %cst_348 : f32 to vector<32x128xf32>
    %727 = arith.maximumf %725, %726 : vector<32x128xf32>
    %c0_349 = arith.constant 0 : index
    %c1_350 = arith.constant 1 : index
    %c0_351 = arith.constant 0 : index
    %c0_352 = arith.constant 0 : index
    %728 = vector.load %arg6[%c0_349, %c1_350, %c0_351, %c0_352] : memref<1x3x32x128xf32, #tpu.memory_space<vmem>>, vector<1x1x32x128xf32>
    %729 = vector.shape_cast %728 : vector<1x1x32x128xf32> to vector<32x128xf32>
    %730 = vector.shape_cast %727 : vector<32x128xf32> to vector<1x1x32x128xf32>
    tpu.vector_store %arg6[%c0_349, %c1_350, %c0_351, %c0_352], %730 {strides = array<i32>} : memref<1x3x32x128xf32, #tpu.memory_space<vmem>>, vector<1x1x32x128xf32>,
    %c96 = arith.constant 96 : index
    %731 = memref.load %arg2[%c96] : memref<180xf32, #tpu.memory_space<smem>>
    %732 = vector.broadcast %731 : f32 to vector<32x128xf32>
    %733 = arith.mulf %682, %732 : vector<32x128xf32>
    %c97 = arith.constant 97 : index
    %734 = memref.load %arg2[%c97] : memref<180xf32, #tpu.memory_space<smem>>
    %735 = vector.broadcast %734 : f32 to vector<32x128xf32>
    %736 = arith.mulf %684, %735 : vector<32x128xf32>
    %737 = arith.addf %733, %736 : vector<32x128xf32>
    %c98 = arith.constant 98 : index
    %738 = memref.load %arg2[%c98] : memref<180xf32, #tpu.memory_space<smem>>
    %739 = vector.broadcast %738 : f32 to vector<32x128xf32>
    %740 = arith.mulf %686, %739 : vector<32x128xf32>
    %741 = arith.addf %737, %740 : vector<32x128xf32>
    %c32_353 = arith.constant 32 : index
    %742 = memref.load %arg3[%c32_353] : memref<60xf32, #tpu.memory_space<smem>>
    %cst_354 = arith.constant 0.000000e+00 : f32
    %743 = vector.broadcast %742 : f32 to vector<32x128xf32>
    %744 = vector.broadcast %cst_354 : f32 to vector<32x128xf32>
    %745 = arith.select %688, %743, %744 : vector<32x128xi1>, vector<32x128xf32>
    %746 = arith.addf %741, %745 : vector<32x128xf32>
    %cst_355 = arith.constant 0.000000e+00 : f32
    %747 = vector.broadcast %cst_355 : f32 to vector<32x128xf32>
    %748 = arith.maximumf %746, %747 : vector<32x128xf32>
    %c0_356 = arith.constant 0 : index
    %c2_357 = arith.constant 2 : index
    %c0_358 = arith.constant 0 : index
    %c0_359 = arith.constant 0 : index
    %749 = vector.load %arg6[%c0_356, %c2_357, %c0_358, %c0_359] : memref<1x3x32x128xf32, #tpu.memory_space<vmem>>, vector<1x1x32x128xf32>
    %750 = vector.shape_cast %749 : vector<1x1x32x128xf32> to vector<32x128xf32>
    %751 = vector.shape_cast %748 : vector<32x128xf32> to vector<1x1x32x128xf32>
    tpu.vector_store %arg6[%c0_356, %c2_357, %c0_358, %c0_359], %751 {strides = array<i32>} : memref<1x3x32x128xf32, #tpu.memory_space<vmem>>, vector<1x1x32x128xf32>,
    %c0_360 = arith.constant 0 : index
    %c0_361 = arith.constant 0 : index
    %c0_362 = arith.constant 0 : index
    %c0_363 = arith.constant 0 : index
    %752 = vector.load %arg6[%c0_360, %c0_361, %c0_362, %c0_363] : memref<1x3x32x128xf32, #tpu.memory_space<vmem>>, vector<1x1x32x128xf32>
    %753 = vector.shape_cast %752 : vector<1x1x32x128xf32> to vector<32x128xf32>
    %c0_364 = arith.constant 0 : index
    %c1_365 = arith.constant 1 : index
    %c0_366 = arith.constant 0 : index
    %c0_367 = arith.constant 0 : index
    %754 = vector.load %arg6[%c0_364, %c1_365, %c0_366, %c0_367] : memref<1x3x32x128xf32, #tpu.memory_space<vmem>>, vector<1x1x32x128xf32>
    %755 = vector.shape_cast %754 : vector<1x1x32x128xf32> to vector<32x128xf32>
    %c0_368 = arith.constant 0 : index
    %c2_369 = arith.constant 2 : index
    %c0_370 = arith.constant 0 : index
    %c0_371 = arith.constant 0 : index
    %756 = vector.load %arg6[%c0_368, %c2_369, %c0_370, %c0_371] : memref<1x3x32x128xf32, #tpu.memory_space<vmem>>, vector<1x1x32x128xf32>
    %757 = vector.shape_cast %756 : vector<1x1x32x128xf32> to vector<32x128xf32>
    %cst_372 = arith.constant 1.200000e+01 : f32
    %758 = vector.broadcast %cst_372 : f32 to vector<32x128xf32>
    %759 = arith.cmpf ole, %0, %758 : vector<32x128xf32>
    %c99 = arith.constant 99 : index
    %760 = memref.load %arg2[%c99] : memref<180xf32, #tpu.memory_space<smem>>
    %761 = vector.broadcast %760 : f32 to vector<32x128xf32>
    %762 = arith.mulf %753, %761 : vector<32x128xf32>
    %c100 = arith.constant 100 : index
    %763 = memref.load %arg2[%c100] : memref<180xf32, #tpu.memory_space<smem>>
    %764 = vector.broadcast %763 : f32 to vector<32x128xf32>
    %765 = arith.mulf %755, %764 : vector<32x128xf32>
    %766 = arith.addf %762, %765 : vector<32x128xf32>
    %c101 = arith.constant 101 : index
    %767 = memref.load %arg2[%c101] : memref<180xf32, #tpu.memory_space<smem>>
    %768 = vector.broadcast %767 : f32 to vector<32x128xf32>
    %769 = arith.mulf %757, %768 : vector<32x128xf32>
    %770 = arith.addf %766, %769 : vector<32x128xf32>
    %c33_373 = arith.constant 33 : index
    %771 = memref.load %arg3[%c33_373] : memref<60xf32, #tpu.memory_space<smem>>
    %cst_374 = arith.constant 0.000000e+00 : f32
    %772 = vector.broadcast %771 : f32 to vector<32x128xf32>
    %773 = vector.broadcast %cst_374 : f32 to vector<32x128xf32>
    %774 = arith.select %759, %772, %773 : vector<32x128xi1>, vector<32x128xf32>
    %775 = arith.addf %770, %774 : vector<32x128xf32>
    %c0_375 = arith.constant 0 : index
    %c0_376 = arith.constant 0 : index
    %c0_377 = arith.constant 0 : index
    %c0_378 = arith.constant 0 : index
    %776 = vector.load %arg6[%c0_375, %c0_376, %c0_377, %c0_378] : memref<1x3x32x128xf32, #tpu.memory_space<vmem>>, vector<1x1x32x128xf32>
    %777 = vector.shape_cast %776 : vector<1x1x32x128xf32> to vector<32x128xf32>
    %778 = vector.shape_cast %775 : vector<32x128xf32> to vector<1x1x32x128xf32>
    tpu.vector_store %arg6[%c0_375, %c0_376, %c0_377, %c0_378], %778 {strides = array<i32>} : memref<1x3x32x128xf32, #tpu.memory_space<vmem>>, vector<1x1x32x128xf32>,
    %c102 = arith.constant 102 : index
    %779 = memref.load %arg2[%c102] : memref<180xf32, #tpu.memory_space<smem>>
    %780 = vector.broadcast %779 : f32 to vector<32x128xf32>
    %781 = arith.mulf %753, %780 : vector<32x128xf32>
    %c103 = arith.constant 103 : index
    %782 = memref.load %arg2[%c103] : memref<180xf32, #tpu.memory_space<smem>>
    %783 = vector.broadcast %782 : f32 to vector<32x128xf32>
    %784 = arith.mulf %755, %783 : vector<32x128xf32>
    %785 = arith.addf %781, %784 : vector<32x128xf32>
    %c104 = arith.constant 104 : index
    %786 = memref.load %arg2[%c104] : memref<180xf32, #tpu.memory_space<smem>>
    %787 = vector.broadcast %786 : f32 to vector<32x128xf32>
    %788 = arith.mulf %757, %787 : vector<32x128xf32>
    %789 = arith.addf %785, %788 : vector<32x128xf32>
    %c34_379 = arith.constant 34 : index
    %790 = memref.load %arg3[%c34_379] : memref<60xf32, #tpu.memory_space<smem>>
    %cst_380 = arith.constant 0.000000e+00 : f32
    %791 = vector.broadcast %790 : f32 to vector<32x128xf32>
    %792 = vector.broadcast %cst_380 : f32 to vector<32x128xf32>
    %793 = arith.select %759, %791, %792 : vector<32x128xi1>, vector<32x128xf32>
    %794 = arith.addf %789, %793 : vector<32x128xf32>
    %c0_381 = arith.constant 0 : index
    %c1_382 = arith.constant 1 : index
    %c0_383 = arith.constant 0 : index
    %c0_384 = arith.constant 0 : index
    %795 = vector.load %arg6[%c0_381, %c1_382, %c0_383, %c0_384] : memref<1x3x32x128xf32, #tpu.memory_space<vmem>>, vector<1x1x32x128xf32>
    %796 = vector.shape_cast %795 : vector<1x1x32x128xf32> to vector<32x128xf32>
    %797 = vector.shape_cast %794 : vector<32x128xf32> to vector<1x1x32x128xf32>
    tpu.vector_store %arg6[%c0_381, %c1_382, %c0_383, %c0_384], %797 {strides = array<i32>} : memref<1x3x32x128xf32, #tpu.memory_space<vmem>>, vector<1x1x32x128xf32>,
    %c105 = arith.constant 105 : index
    %798 = memref.load %arg2[%c105] : memref<180xf32, #tpu.memory_space<smem>>
    %799 = vector.broadcast %798 : f32 to vector<32x128xf32>
    %800 = arith.mulf %753, %799 : vector<32x128xf32>
    %c106 = arith.constant 106 : index
    %801 = memref.load %arg2[%c106] : memref<180xf32, #tpu.memory_space<smem>>
    %802 = vector.broadcast %801 : f32 to vector<32x128xf32>
    %803 = arith.mulf %755, %802 : vector<32x128xf32>
    %804 = arith.addf %800, %803 : vector<32x128xf32>
    %c107 = arith.constant 107 : index
    %805 = memref.load %arg2[%c107] : memref<180xf32, #tpu.memory_space<smem>>
    %806 = vector.broadcast %805 : f32 to vector<32x128xf32>
    %807 = arith.mulf %757, %806 : vector<32x128xf32>
    %808 = arith.addf %804, %807 : vector<32x128xf32>
    %c35_385 = arith.constant 35 : index
    %809 = memref.load %arg3[%c35_385] : memref<60xf32, #tpu.memory_space<smem>>
    %cst_386 = arith.constant 0.000000e+00 : f32
    %810 = vector.broadcast %809 : f32 to vector<32x128xf32>
    %811 = vector.broadcast %cst_386 : f32 to vector<32x128xf32>
    %812 = arith.select %759, %810, %811 : vector<32x128xi1>, vector<32x128xf32>
    %813 = arith.addf %808, %812 : vector<32x128xf32>
    %c0_387 = arith.constant 0 : index
    %c2_388 = arith.constant 2 : index
    %c0_389 = arith.constant 0 : index
    %c0_390 = arith.constant 0 : index
    %814 = vector.load %arg6[%c0_387, %c2_388, %c0_389, %c0_390] : memref<1x3x32x128xf32, #tpu.memory_space<vmem>>, vector<1x1x32x128xf32>
    %815 = vector.shape_cast %814 : vector<1x1x32x128xf32> to vector<32x128xf32>
    %816 = vector.shape_cast %813 : vector<32x128xf32> to vector<1x1x32x128xf32>
    tpu.vector_store %arg6[%c0_387, %c2_388, %c0_389, %c0_390], %816 {strides = array<i32>} : memref<1x3x32x128xf32, #tpu.memory_space<vmem>>, vector<1x1x32x128xf32>,
    %c0_391 = arith.constant 0 : index
    %c0_392 = arith.constant 0 : index
    %c0_393 = arith.constant 0 : index
    %c0_394 = arith.constant 0 : index
    %817 = vector.load %arg6[%c0_391, %c0_392, %c0_393, %c0_394] : memref<1x3x32x128xf32, #tpu.memory_space<vmem>>, vector<1x1x32x128xf32>
    %818 = vector.shape_cast %817 : vector<1x1x32x128xf32> to vector<32x128xf32>
    %c0_395 = arith.constant 0 : index
    %c1_396 = arith.constant 1 : index
    %c0_397 = arith.constant 0 : index
    %c0_398 = arith.constant 0 : index
    %819 = vector.load %arg6[%c0_395, %c1_396, %c0_397, %c0_398] : memref<1x3x32x128xf32, #tpu.memory_space<vmem>>, vector<1x1x32x128xf32>
    %820 = vector.shape_cast %819 : vector<1x1x32x128xf32> to vector<32x128xf32>
    %c0_399 = arith.constant 0 : index
    %c2_400 = arith.constant 2 : index
    %c0_401 = arith.constant 0 : index
    %c0_402 = arith.constant 0 : index
    %821 = vector.load %arg6[%c0_399, %c2_400, %c0_401, %c0_402] : memref<1x3x32x128xf32, #tpu.memory_space<vmem>>, vector<1x1x32x128xf32>
    %822 = vector.shape_cast %821 : vector<1x1x32x128xf32> to vector<32x128xf32>
    %cst_403 = arith.constant 1.300000e+01 : f32
    %823 = vector.broadcast %cst_403 : f32 to vector<32x128xf32>
    %824 = arith.cmpf ole, %0, %823 : vector<32x128xf32>
    %c108 = arith.constant 108 : index
    %825 = memref.load %arg2[%c108] : memref<180xf32, #tpu.memory_space<smem>>
    %826 = vector.broadcast %825 : f32 to vector<32x128xf32>
    %827 = arith.mulf %818, %826 : vector<32x128xf32>
    %c109 = arith.constant 109 : index
    %828 = memref.load %arg2[%c109] : memref<180xf32, #tpu.memory_space<smem>>
    %829 = vector.broadcast %828 : f32 to vector<32x128xf32>
    %830 = arith.mulf %820, %829 : vector<32x128xf32>
    %831 = arith.addf %827, %830 : vector<32x128xf32>
    %c110 = arith.constant 110 : index
    %832 = memref.load %arg2[%c110] : memref<180xf32, #tpu.memory_space<smem>>
    %833 = vector.broadcast %832 : f32 to vector<32x128xf32>
    %834 = arith.mulf %822, %833 : vector<32x128xf32>
    %835 = arith.addf %831, %834 : vector<32x128xf32>
    %c36_404 = arith.constant 36 : index
    %836 = memref.load %arg3[%c36_404] : memref<60xf32, #tpu.memory_space<smem>>
    %cst_405 = arith.constant 0.000000e+00 : f32
    %837 = vector.broadcast %836 : f32 to vector<32x128xf32>
    %838 = vector.broadcast %cst_405 : f32 to vector<32x128xf32>
    %839 = arith.select %824, %837, %838 : vector<32x128xi1>, vector<32x128xf32>
    %840 = arith.addf %835, %839 : vector<32x128xf32>
    %cst_406 = arith.constant 0.000000e+00 : f32
    %841 = vector.broadcast %cst_406 : f32 to vector<32x128xf32>
    %842 = arith.maximumf %840, %841 : vector<32x128xf32>
    %c0_407 = arith.constant 0 : index
    %c0_408 = arith.constant 0 : index
    %c0_409 = arith.constant 0 : index
    %c0_410 = arith.constant 0 : index
    %843 = vector.load %arg6[%c0_407, %c0_408, %c0_409, %c0_410] : memref<1x3x32x128xf32, #tpu.memory_space<vmem>>, vector<1x1x32x128xf32>
    %844 = vector.shape_cast %843 : vector<1x1x32x128xf32> to vector<32x128xf32>
    %845 = vector.shape_cast %842 : vector<32x128xf32> to vector<1x1x32x128xf32>
    tpu.vector_store %arg6[%c0_407, %c0_408, %c0_409, %c0_410], %845 {strides = array<i32>} : memref<1x3x32x128xf32, #tpu.memory_space<vmem>>, vector<1x1x32x128xf32>,
    %c111 = arith.constant 111 : index
    %846 = memref.load %arg2[%c111] : memref<180xf32, #tpu.memory_space<smem>>
    %847 = vector.broadcast %846 : f32 to vector<32x128xf32>
    %848 = arith.mulf %818, %847 : vector<32x128xf32>
    %c112 = arith.constant 112 : index
    %849 = memref.load %arg2[%c112] : memref<180xf32, #tpu.memory_space<smem>>
    %850 = vector.broadcast %849 : f32 to vector<32x128xf32>
    %851 = arith.mulf %820, %850 : vector<32x128xf32>
    %852 = arith.addf %848, %851 : vector<32x128xf32>
    %c113 = arith.constant 113 : index
    %853 = memref.load %arg2[%c113] : memref<180xf32, #tpu.memory_space<smem>>
    %854 = vector.broadcast %853 : f32 to vector<32x128xf32>
    %855 = arith.mulf %822, %854 : vector<32x128xf32>
    %856 = arith.addf %852, %855 : vector<32x128xf32>
    %c37_411 = arith.constant 37 : index
    %857 = memref.load %arg3[%c37_411] : memref<60xf32, #tpu.memory_space<smem>>
    %cst_412 = arith.constant 0.000000e+00 : f32
    %858 = vector.broadcast %857 : f32 to vector<32x128xf32>
    %859 = vector.broadcast %cst_412 : f32 to vector<32x128xf32>
    %860 = arith.select %824, %858, %859 : vector<32x128xi1>, vector<32x128xf32>
    %861 = arith.addf %856, %860 : vector<32x128xf32>
    %cst_413 = arith.constant 0.000000e+00 : f32
    %862 = vector.broadcast %cst_413 : f32 to vector<32x128xf32>
    %863 = arith.maximumf %861, %862 : vector<32x128xf32>
    %c0_414 = arith.constant 0 : index
    %c1_415 = arith.constant 1 : index
    %c0_416 = arith.constant 0 : index
    %c0_417 = arith.constant 0 : index
    %864 = vector.load %arg6[%c0_414, %c1_415, %c0_416, %c0_417] : memref<1x3x32x128xf32, #tpu.memory_space<vmem>>, vector<1x1x32x128xf32>
    %865 = vector.shape_cast %864 : vector<1x1x32x128xf32> to vector<32x128xf32>
    %866 = vector.shape_cast %863 : vector<32x128xf32> to vector<1x1x32x128xf32>
    tpu.vector_store %arg6[%c0_414, %c1_415, %c0_416, %c0_417], %866 {strides = array<i32>} : memref<1x3x32x128xf32, #tpu.memory_space<vmem>>, vector<1x1x32x128xf32>,
    %c114 = arith.constant 114 : index
    %867 = memref.load %arg2[%c114] : memref<180xf32, #tpu.memory_space<smem>>
    %868 = vector.broadcast %867 : f32 to vector<32x128xf32>
    %869 = arith.mulf %818, %868 : vector<32x128xf32>
    %c115 = arith.constant 115 : index
    %870 = memref.load %arg2[%c115] : memref<180xf32, #tpu.memory_space<smem>>
    %871 = vector.broadcast %870 : f32 to vector<32x128xf32>
    %872 = arith.mulf %820, %871 : vector<32x128xf32>
    %873 = arith.addf %869, %872 : vector<32x128xf32>
    %c116 = arith.constant 116 : index
    %874 = memref.load %arg2[%c116] : memref<180xf32, #tpu.memory_space<smem>>
    %875 = vector.broadcast %874 : f32 to vector<32x128xf32>
    %876 = arith.mulf %822, %875 : vector<32x128xf32>
    %877 = arith.addf %873, %876 : vector<32x128xf32>
    %c38_418 = arith.constant 38 : index
    %878 = memref.load %arg3[%c38_418] : memref<60xf32, #tpu.memory_space<smem>>
    %cst_419 = arith.constant 0.000000e+00 : f32
    %879 = vector.broadcast %878 : f32 to vector<32x128xf32>
    %880 = vector.broadcast %cst_419 : f32 to vector<32x128xf32>
    %881 = arith.select %824, %879, %880 : vector<32x128xi1>, vector<32x128xf32>
    %882 = arith.addf %877, %881 : vector<32x128xf32>
    %cst_420 = arith.constant 0.000000e+00 : f32
    %883 = vector.broadcast %cst_420 : f32 to vector<32x128xf32>
    %884 = arith.maximumf %882, %883 : vector<32x128xf32>
    %c0_421 = arith.constant 0 : index
    %c2_422 = arith.constant 2 : index
    %c0_423 = arith.constant 0 : index
    %c0_424 = arith.constant 0 : index
    %885 = vector.load %arg6[%c0_421, %c2_422, %c0_423, %c0_424] : memref<1x3x32x128xf32, #tpu.memory_space<vmem>>, vector<1x1x32x128xf32>
    %886 = vector.shape_cast %885 : vector<1x1x32x128xf32> to vector<32x128xf32>
    %887 = vector.shape_cast %884 : vector<32x128xf32> to vector<1x1x32x128xf32>
    tpu.vector_store %arg6[%c0_421, %c2_422, %c0_423, %c0_424], %887 {strides = array<i32>} : memref<1x3x32x128xf32, #tpu.memory_space<vmem>>, vector<1x1x32x128xf32>,
    %c0_425 = arith.constant 0 : index
    %c0_426 = arith.constant 0 : index
    %c0_427 = arith.constant 0 : index
    %c0_428 = arith.constant 0 : index
    %888 = vector.load %arg6[%c0_425, %c0_426, %c0_427, %c0_428] : memref<1x3x32x128xf32, #tpu.memory_space<vmem>>, vector<1x1x32x128xf32>
    %889 = vector.shape_cast %888 : vector<1x1x32x128xf32> to vector<32x128xf32>
    %c0_429 = arith.constant 0 : index
    %c1_430 = arith.constant 1 : index
    %c0_431 = arith.constant 0 : index
    %c0_432 = arith.constant 0 : index
    %890 = vector.load %arg6[%c0_429, %c1_430, %c0_431, %c0_432] : memref<1x3x32x128xf32, #tpu.memory_space<vmem>>, vector<1x1x32x128xf32>
    %891 = vector.shape_cast %890 : vector<1x1x32x128xf32> to vector<32x128xf32>
    %c0_433 = arith.constant 0 : index
    %c2_434 = arith.constant 2 : index
    %c0_435 = arith.constant 0 : index
    %c0_436 = arith.constant 0 : index
    %892 = vector.load %arg6[%c0_433, %c2_434, %c0_435, %c0_436] : memref<1x3x32x128xf32, #tpu.memory_space<vmem>>, vector<1x1x32x128xf32>
    %893 = vector.shape_cast %892 : vector<1x1x32x128xf32> to vector<32x128xf32>
    %cst_437 = arith.constant 1.400000e+01 : f32
    %894 = vector.broadcast %cst_437 : f32 to vector<32x128xf32>
    %895 = arith.cmpf ole, %0, %894 : vector<32x128xf32>
    %c117 = arith.constant 117 : index
    %896 = memref.load %arg2[%c117] : memref<180xf32, #tpu.memory_space<smem>>
    %897 = vector.broadcast %896 : f32 to vector<32x128xf32>
    %898 = arith.mulf %889, %897 : vector<32x128xf32>
    %c118 = arith.constant 118 : index
    %899 = memref.load %arg2[%c118] : memref<180xf32, #tpu.memory_space<smem>>
    %900 = vector.broadcast %899 : f32 to vector<32x128xf32>
    %901 = arith.mulf %891, %900 : vector<32x128xf32>
    %902 = arith.addf %898, %901 : vector<32x128xf32>
    %c119 = arith.constant 119 : index
    %903 = memref.load %arg2[%c119] : memref<180xf32, #tpu.memory_space<smem>>
    %904 = vector.broadcast %903 : f32 to vector<32x128xf32>
    %905 = arith.mulf %893, %904 : vector<32x128xf32>
    %906 = arith.addf %902, %905 : vector<32x128xf32>
    %c39_438 = arith.constant 39 : index
    %907 = memref.load %arg3[%c39_438] : memref<60xf32, #tpu.memory_space<smem>>
    %cst_439 = arith.constant 0.000000e+00 : f32
    %908 = vector.broadcast %907 : f32 to vector<32x128xf32>
    %909 = vector.broadcast %cst_439 : f32 to vector<32x128xf32>
    %910 = arith.select %895, %908, %909 : vector<32x128xi1>, vector<32x128xf32>
    %911 = arith.addf %906, %910 : vector<32x128xf32>
    %c0_440 = arith.constant 0 : index
    %c0_441 = arith.constant 0 : index
    %c0_442 = arith.constant 0 : index
    %c0_443 = arith.constant 0 : index
    %912 = vector.load %arg6[%c0_440, %c0_441, %c0_442, %c0_443] : memref<1x3x32x128xf32, #tpu.memory_space<vmem>>, vector<1x1x32x128xf32>
    %913 = vector.shape_cast %912 : vector<1x1x32x128xf32> to vector<32x128xf32>
    %914 = vector.shape_cast %911 : vector<32x128xf32> to vector<1x1x32x128xf32>
    tpu.vector_store %arg6[%c0_440, %c0_441, %c0_442, %c0_443], %914 {strides = array<i32>} : memref<1x3x32x128xf32, #tpu.memory_space<vmem>>, vector<1x1x32x128xf32>,
    %c120 = arith.constant 120 : index
    %915 = memref.load %arg2[%c120] : memref<180xf32, #tpu.memory_space<smem>>
    %916 = vector.broadcast %915 : f32 to vector<32x128xf32>
    %917 = arith.mulf %889, %916 : vector<32x128xf32>
    %c121 = arith.constant 121 : index
    %918 = memref.load %arg2[%c121] : memref<180xf32, #tpu.memory_space<smem>>
    %919 = vector.broadcast %918 : f32 to vector<32x128xf32>
    %920 = arith.mulf %891, %919 : vector<32x128xf32>
    %921 = arith.addf %917, %920 : vector<32x128xf32>
    %c122 = arith.constant 122 : index
    %922 = memref.load %arg2[%c122] : memref<180xf32, #tpu.memory_space<smem>>
    %923 = vector.broadcast %922 : f32 to vector<32x128xf32>
    %924 = arith.mulf %893, %923 : vector<32x128xf32>
    %925 = arith.addf %921, %924 : vector<32x128xf32>
    %c40_444 = arith.constant 40 : index
    %926 = memref.load %arg3[%c40_444] : memref<60xf32, #tpu.memory_space<smem>>
    %cst_445 = arith.constant 0.000000e+00 : f32
    %927 = vector.broadcast %926 : f32 to vector<32x128xf32>
    %928 = vector.broadcast %cst_445 : f32 to vector<32x128xf32>
    %929 = arith.select %895, %927, %928 : vector<32x128xi1>, vector<32x128xf32>
    %930 = arith.addf %925, %929 : vector<32x128xf32>
    %c0_446 = arith.constant 0 : index
    %c1_447 = arith.constant 1 : index
    %c0_448 = arith.constant 0 : index
    %c0_449 = arith.constant 0 : index
    %931 = vector.load %arg6[%c0_446, %c1_447, %c0_448, %c0_449] : memref<1x3x32x128xf32, #tpu.memory_space<vmem>>, vector<1x1x32x128xf32>
    %932 = vector.shape_cast %931 : vector<1x1x32x128xf32> to vector<32x128xf32>
    %933 = vector.shape_cast %930 : vector<32x128xf32> to vector<1x1x32x128xf32>
    tpu.vector_store %arg6[%c0_446, %c1_447, %c0_448, %c0_449], %933 {strides = array<i32>} : memref<1x3x32x128xf32, #tpu.memory_space<vmem>>, vector<1x1x32x128xf32>,
    %c123 = arith.constant 123 : index
    %934 = memref.load %arg2[%c123] : memref<180xf32, #tpu.memory_space<smem>>
    %935 = vector.broadcast %934 : f32 to vector<32x128xf32>
    %936 = arith.mulf %889, %935 : vector<32x128xf32>
    %c124 = arith.constant 124 : index
    %937 = memref.load %arg2[%c124] : memref<180xf32, #tpu.memory_space<smem>>
    %938 = vector.broadcast %937 : f32 to vector<32x128xf32>
    %939 = arith.mulf %891, %938 : vector<32x128xf32>
    %940 = arith.addf %936, %939 : vector<32x128xf32>
    %c125 = arith.constant 125 : index
    %941 = memref.load %arg2[%c125] : memref<180xf32, #tpu.memory_space<smem>>
    %942 = vector.broadcast %941 : f32 to vector<32x128xf32>
    %943 = arith.mulf %893, %942 : vector<32x128xf32>
    %944 = arith.addf %940, %943 : vector<32x128xf32>
    %c41_450 = arith.constant 41 : index
    %945 = memref.load %arg3[%c41_450] : memref<60xf32, #tpu.memory_space<smem>>
    %cst_451 = arith.constant 0.000000e+00 : f32
    %946 = vector.broadcast %945 : f32 to vector<32x128xf32>
    %947 = vector.broadcast %cst_451 : f32 to vector<32x128xf32>
    %948 = arith.select %895, %946, %947 : vector<32x128xi1>, vector<32x128xf32>
    %949 = arith.addf %944, %948 : vector<32x128xf32>
    %c0_452 = arith.constant 0 : index
    %c2_453 = arith.constant 2 : index
    %c0_454 = arith.constant 0 : index
    %c0_455 = arith.constant 0 : index
    %950 = vector.load %arg6[%c0_452, %c2_453, %c0_454, %c0_455] : memref<1x3x32x128xf32, #tpu.memory_space<vmem>>, vector<1x1x32x128xf32>
    %951 = vector.shape_cast %950 : vector<1x1x32x128xf32> to vector<32x128xf32>
    %952 = vector.shape_cast %949 : vector<32x128xf32> to vector<1x1x32x128xf32>
    tpu.vector_store %arg6[%c0_452, %c2_453, %c0_454, %c0_455], %952 {strides = array<i32>} : memref<1x3x32x128xf32, #tpu.memory_space<vmem>>, vector<1x1x32x128xf32>,
    %c0_456 = arith.constant 0 : index
    %c0_457 = arith.constant 0 : index
    %c0_458 = arith.constant 0 : index
    %c0_459 = arith.constant 0 : index
    %953 = vector.load %arg6[%c0_456, %c0_457, %c0_458, %c0_459] : memref<1x3x32x128xf32, #tpu.memory_space<vmem>>, vector<1x1x32x128xf32>
    %954 = vector.shape_cast %953 : vector<1x1x32x128xf32> to vector<32x128xf32>
    %c0_460 = arith.constant 0 : index
    %c1_461 = arith.constant 1 : index
    %c0_462 = arith.constant 0 : index
    %c0_463 = arith.constant 0 : index
    %955 = vector.load %arg6[%c0_460, %c1_461, %c0_462, %c0_463] : memref<1x3x32x128xf32, #tpu.memory_space<vmem>>, vector<1x1x32x128xf32>
    %956 = vector.shape_cast %955 : vector<1x1x32x128xf32> to vector<32x128xf32>
    %c0_464 = arith.constant 0 : index
    %c2_465 = arith.constant 2 : index
    %c0_466 = arith.constant 0 : index
    %c0_467 = arith.constant 0 : index
    %957 = vector.load %arg6[%c0_464, %c2_465, %c0_466, %c0_467] : memref<1x3x32x128xf32, #tpu.memory_space<vmem>>, vector<1x1x32x128xf32>
    %958 = vector.shape_cast %957 : vector<1x1x32x128xf32> to vector<32x128xf32>
    %cst_468 = arith.constant 1.500000e+01 : f32
    %959 = vector.broadcast %cst_468 : f32 to vector<32x128xf32>
    %960 = arith.cmpf ole, %0, %959 : vector<32x128xf32>
    %c126 = arith.constant 126 : index
    %961 = memref.load %arg2[%c126] : memref<180xf32, #tpu.memory_space<smem>>
    %962 = vector.broadcast %961 : f32 to vector<32x128xf32>
    %963 = arith.mulf %954, %962 : vector<32x128xf32>
    %c127 = arith.constant 127 : index
    %964 = memref.load %arg2[%c127] : memref<180xf32, #tpu.memory_space<smem>>
    %965 = vector.broadcast %964 : f32 to vector<32x128xf32>
    %966 = arith.mulf %956, %965 : vector<32x128xf32>
    %967 = arith.addf %963, %966 : vector<32x128xf32>
    %c128 = arith.constant 128 : index
    %968 = memref.load %arg2[%c128] : memref<180xf32, #tpu.memory_space<smem>>
    %969 = vector.broadcast %968 : f32 to vector<32x128xf32>
    %970 = arith.mulf %958, %969 : vector<32x128xf32>
    %971 = arith.addf %967, %970 : vector<32x128xf32>
    %c42_469 = arith.constant 42 : index
    %972 = memref.load %arg3[%c42_469] : memref<60xf32, #tpu.memory_space<smem>>
    %cst_470 = arith.constant 0.000000e+00 : f32
    %973 = vector.broadcast %972 : f32 to vector<32x128xf32>
    %974 = vector.broadcast %cst_470 : f32 to vector<32x128xf32>
    %975 = arith.select %960, %973, %974 : vector<32x128xi1>, vector<32x128xf32>
    %976 = arith.addf %971, %975 : vector<32x128xf32>
    %cst_471 = arith.constant 0.000000e+00 : f32
    %977 = vector.broadcast %cst_471 : f32 to vector<32x128xf32>
    %978 = arith.maximumf %976, %977 : vector<32x128xf32>
    %c0_472 = arith.constant 0 : index
    %c0_473 = arith.constant 0 : index
    %c0_474 = arith.constant 0 : index
    %c0_475 = arith.constant 0 : index
    %979 = vector.load %arg6[%c0_472, %c0_473, %c0_474, %c0_475] : memref<1x3x32x128xf32, #tpu.memory_space<vmem>>, vector<1x1x32x128xf32>
    %980 = vector.shape_cast %979 : vector<1x1x32x128xf32> to vector<32x128xf32>
    %981 = vector.shape_cast %978 : vector<32x128xf32> to vector<1x1x32x128xf32>
    tpu.vector_store %arg6[%c0_472, %c0_473, %c0_474, %c0_475], %981 {strides = array<i32>} : memref<1x3x32x128xf32, #tpu.memory_space<vmem>>, vector<1x1x32x128xf32>,
    %c129 = arith.constant 129 : index
    %982 = memref.load %arg2[%c129] : memref<180xf32, #tpu.memory_space<smem>>
    %983 = vector.broadcast %982 : f32 to vector<32x128xf32>
    %984 = arith.mulf %954, %983 : vector<32x128xf32>
    %c130 = arith.constant 130 : index
    %985 = memref.load %arg2[%c130] : memref<180xf32, #tpu.memory_space<smem>>
    %986 = vector.broadcast %985 : f32 to vector<32x128xf32>
    %987 = arith.mulf %956, %986 : vector<32x128xf32>
    %988 = arith.addf %984, %987 : vector<32x128xf32>
    %c131 = arith.constant 131 : index
    %989 = memref.load %arg2[%c131] : memref<180xf32, #tpu.memory_space<smem>>
    %990 = vector.broadcast %989 : f32 to vector<32x128xf32>
    %991 = arith.mulf %958, %990 : vector<32x128xf32>
    %992 = arith.addf %988, %991 : vector<32x128xf32>
    %c43_476 = arith.constant 43 : index
    %993 = memref.load %arg3[%c43_476] : memref<60xf32, #tpu.memory_space<smem>>
    %cst_477 = arith.constant 0.000000e+00 : f32
    %994 = vector.broadcast %993 : f32 to vector<32x128xf32>
    %995 = vector.broadcast %cst_477 : f32 to vector<32x128xf32>
    %996 = arith.select %960, %994, %995 : vector<32x128xi1>, vector<32x128xf32>
    %997 = arith.addf %992, %996 : vector<32x128xf32>
    %cst_478 = arith.constant 0.000000e+00 : f32
    %998 = vector.broadcast %cst_478 : f32 to vector<32x128xf32>
    %999 = arith.maximumf %997, %998 : vector<32x128xf32>
    %c0_479 = arith.constant 0 : index
    %c1_480 = arith.constant 1 : index
    %c0_481 = arith.constant 0 : index
    %c0_482 = arith.constant 0 : index
    %1000 = vector.load %arg6[%c0_479, %c1_480, %c0_481, %c0_482] : memref<1x3x32x128xf32, #tpu.memory_space<vmem>>, vector<1x1x32x128xf32>
    %1001 = vector.shape_cast %1000 : vector<1x1x32x128xf32> to vector<32x128xf32>
    %1002 = vector.shape_cast %999 : vector<32x128xf32> to vector<1x1x32x128xf32>
    tpu.vector_store %arg6[%c0_479, %c1_480, %c0_481, %c0_482], %1002 {strides = array<i32>} : memref<1x3x32x128xf32, #tpu.memory_space<vmem>>, vector<1x1x32x128xf32>,
    %c132 = arith.constant 132 : index
    %1003 = memref.load %arg2[%c132] : memref<180xf32, #tpu.memory_space<smem>>
    %1004 = vector.broadcast %1003 : f32 to vector<32x128xf32>
    %1005 = arith.mulf %954, %1004 : vector<32x128xf32>
    %c133 = arith.constant 133 : index
    %1006 = memref.load %arg2[%c133] : memref<180xf32, #tpu.memory_space<smem>>
    %1007 = vector.broadcast %1006 : f32 to vector<32x128xf32>
    %1008 = arith.mulf %956, %1007 : vector<32x128xf32>
    %1009 = arith.addf %1005, %1008 : vector<32x128xf32>
    %c134 = arith.constant 134 : index
    %1010 = memref.load %arg2[%c134] : memref<180xf32, #tpu.memory_space<smem>>
    %1011 = vector.broadcast %1010 : f32 to vector<32x128xf32>
    %1012 = arith.mulf %958, %1011 : vector<32x128xf32>
    %1013 = arith.addf %1009, %1012 : vector<32x128xf32>
    %c44_483 = arith.constant 44 : index
    %1014 = memref.load %arg3[%c44_483] : memref<60xf32, #tpu.memory_space<smem>>
    %cst_484 = arith.constant 0.000000e+00 : f32
    %1015 = vector.broadcast %1014 : f32 to vector<32x128xf32>
    %1016 = vector.broadcast %cst_484 : f32 to vector<32x128xf32>
    %1017 = arith.select %960, %1015, %1016 : vector<32x128xi1>, vector<32x128xf32>
    %1018 = arith.addf %1013, %1017 : vector<32x128xf32>
    %cst_485 = arith.constant 0.000000e+00 : f32
    %1019 = vector.broadcast %cst_485 : f32 to vector<32x128xf32>
    %1020 = arith.maximumf %1018, %1019 : vector<32x128xf32>
    %c0_486 = arith.constant 0 : index
    %c2_487 = arith.constant 2 : index
    %c0_488 = arith.constant 0 : index
    %c0_489 = arith.constant 0 : index
    %1021 = vector.load %arg6[%c0_486, %c2_487, %c0_488, %c0_489] : memref<1x3x32x128xf32, #tpu.memory_space<vmem>>, vector<1x1x32x128xf32>
    %1022 = vector.shape_cast %1021 : vector<1x1x32x128xf32> to vector<32x128xf32>
    %1023 = vector.shape_cast %1020 : vector<32x128xf32> to vector<1x1x32x128xf32>
    tpu.vector_store %arg6[%c0_486, %c2_487, %c0_488, %c0_489], %1023 {strides = array<i32>} : memref<1x3x32x128xf32, #tpu.memory_space<vmem>>, vector<1x1x32x128xf32>,
    %c0_490 = arith.constant 0 : index
    %c0_491 = arith.constant 0 : index
    %c0_492 = arith.constant 0 : index
    %c0_493 = arith.constant 0 : index
    %1024 = vector.load %arg6[%c0_490, %c0_491, %c0_492, %c0_493] : memref<1x3x32x128xf32, #tpu.memory_space<vmem>>, vector<1x1x32x128xf32>
    %1025 = vector.shape_cast %1024 : vector<1x1x32x128xf32> to vector<32x128xf32>
    %c0_494 = arith.constant 0 : index
    %c1_495 = arith.constant 1 : index
    %c0_496 = arith.constant 0 : index
    %c0_497 = arith.constant 0 : index
    %1026 = vector.load %arg6[%c0_494, %c1_495, %c0_496, %c0_497] : memref<1x3x32x128xf32, #tpu.memory_space<vmem>>, vector<1x1x32x128xf32>
    %1027 = vector.shape_cast %1026 : vector<1x1x32x128xf32> to vector<32x128xf32>
    %c0_498 = arith.constant 0 : index
    %c2_499 = arith.constant 2 : index
    %c0_500 = arith.constant 0 : index
    %c0_501 = arith.constant 0 : index
    %1028 = vector.load %arg6[%c0_498, %c2_499, %c0_500, %c0_501] : memref<1x3x32x128xf32, #tpu.memory_space<vmem>>, vector<1x1x32x128xf32>
    %1029 = vector.shape_cast %1028 : vector<1x1x32x128xf32> to vector<32x128xf32>
    %cst_502 = arith.constant 1.600000e+01 : f32
    %1030 = vector.broadcast %cst_502 : f32 to vector<32x128xf32>
    %1031 = arith.cmpf ole, %0, %1030 : vector<32x128xf32>
    %c135 = arith.constant 135 : index
    %1032 = memref.load %arg2[%c135] : memref<180xf32, #tpu.memory_space<smem>>
    %1033 = vector.broadcast %1032 : f32 to vector<32x128xf32>
    %1034 = arith.mulf %1025, %1033 : vector<32x128xf32>
    %c136 = arith.constant 136 : index
    %1035 = memref.load %arg2[%c136] : memref<180xf32, #tpu.memory_space<smem>>
    %1036 = vector.broadcast %1035 : f32 to vector<32x128xf32>
    %1037 = arith.mulf %1027, %1036 : vector<32x128xf32>
    %1038 = arith.addf %1034, %1037 : vector<32x128xf32>
    %c137 = arith.constant 137 : index
    %1039 = memref.load %arg2[%c137] : memref<180xf32, #tpu.memory_space<smem>>
    %1040 = vector.broadcast %1039 : f32 to vector<32x128xf32>
    %1041 = arith.mulf %1029, %1040 : vector<32x128xf32>
    %1042 = arith.addf %1038, %1041 : vector<32x128xf32>
    %c45_503 = arith.constant 45 : index
    %1043 = memref.load %arg3[%c45_503] : memref<60xf32, #tpu.memory_space<smem>>
    %cst_504 = arith.constant 0.000000e+00 : f32
    %1044 = vector.broadcast %1043 : f32 to vector<32x128xf32>
    %1045 = vector.broadcast %cst_504 : f32 to vector<32x128xf32>
    %1046 = arith.select %1031, %1044, %1045 : vector<32x128xi1>, vector<32x128xf32>
    %1047 = arith.addf %1042, %1046 : vector<32x128xf32>
    %c0_505 = arith.constant 0 : index
    %c0_506 = arith.constant 0 : index
    %c0_507 = arith.constant 0 : index
    %c0_508 = arith.constant 0 : index
    %1048 = vector.load %arg6[%c0_505, %c0_506, %c0_507, %c0_508] : memref<1x3x32x128xf32, #tpu.memory_space<vmem>>, vector<1x1x32x128xf32>
    %1049 = vector.shape_cast %1048 : vector<1x1x32x128xf32> to vector<32x128xf32>
    %1050 = vector.shape_cast %1047 : vector<32x128xf32> to vector<1x1x32x128xf32>
    tpu.vector_store %arg6[%c0_505, %c0_506, %c0_507, %c0_508], %1050 {strides = array<i32>} : memref<1x3x32x128xf32, #tpu.memory_space<vmem>>, vector<1x1x32x128xf32>,
    %c138 = arith.constant 138 : index
    %1051 = memref.load %arg2[%c138] : memref<180xf32, #tpu.memory_space<smem>>
    %1052 = vector.broadcast %1051 : f32 to vector<32x128xf32>
    %1053 = arith.mulf %1025, %1052 : vector<32x128xf32>
    %c139 = arith.constant 139 : index
    %1054 = memref.load %arg2[%c139] : memref<180xf32, #tpu.memory_space<smem>>
    %1055 = vector.broadcast %1054 : f32 to vector<32x128xf32>
    %1056 = arith.mulf %1027, %1055 : vector<32x128xf32>
    %1057 = arith.addf %1053, %1056 : vector<32x128xf32>
    %c140 = arith.constant 140 : index
    %1058 = memref.load %arg2[%c140] : memref<180xf32, #tpu.memory_space<smem>>
    %1059 = vector.broadcast %1058 : f32 to vector<32x128xf32>
    %1060 = arith.mulf %1029, %1059 : vector<32x128xf32>
    %1061 = arith.addf %1057, %1060 : vector<32x128xf32>
    %c46_509 = arith.constant 46 : index
    %1062 = memref.load %arg3[%c46_509] : memref<60xf32, #tpu.memory_space<smem>>
    %cst_510 = arith.constant 0.000000e+00 : f32
    %1063 = vector.broadcast %1062 : f32 to vector<32x128xf32>
    %1064 = vector.broadcast %cst_510 : f32 to vector<32x128xf32>
    %1065 = arith.select %1031, %1063, %1064 : vector<32x128xi1>, vector<32x128xf32>
    %1066 = arith.addf %1061, %1065 : vector<32x128xf32>
    %c0_511 = arith.constant 0 : index
    %c1_512 = arith.constant 1 : index
    %c0_513 = arith.constant 0 : index
    %c0_514 = arith.constant 0 : index
    %1067 = vector.load %arg6[%c0_511, %c1_512, %c0_513, %c0_514] : memref<1x3x32x128xf32, #tpu.memory_space<vmem>>, vector<1x1x32x128xf32>
    %1068 = vector.shape_cast %1067 : vector<1x1x32x128xf32> to vector<32x128xf32>
    %1069 = vector.shape_cast %1066 : vector<32x128xf32> to vector<1x1x32x128xf32>
    tpu.vector_store %arg6[%c0_511, %c1_512, %c0_513, %c0_514], %1069 {strides = array<i32>} : memref<1x3x32x128xf32, #tpu.memory_space<vmem>>, vector<1x1x32x128xf32>,
    %c141 = arith.constant 141 : index
    %1070 = memref.load %arg2[%c141] : memref<180xf32, #tpu.memory_space<smem>>
    %1071 = vector.broadcast %1070 : f32 to vector<32x128xf32>
    %1072 = arith.mulf %1025, %1071 : vector<32x128xf32>
    %c142 = arith.constant 142 : index
    %1073 = memref.load %arg2[%c142] : memref<180xf32, #tpu.memory_space<smem>>
    %1074 = vector.broadcast %1073 : f32 to vector<32x128xf32>
    %1075 = arith.mulf %1027, %1074 : vector<32x128xf32>
    %1076 = arith.addf %1072, %1075 : vector<32x128xf32>
    %c143 = arith.constant 143 : index
    %1077 = memref.load %arg2[%c143] : memref<180xf32, #tpu.memory_space<smem>>
    %1078 = vector.broadcast %1077 : f32 to vector<32x128xf32>
    %1079 = arith.mulf %1029, %1078 : vector<32x128xf32>
    %1080 = arith.addf %1076, %1079 : vector<32x128xf32>
    %c47_515 = arith.constant 47 : index
    %1081 = memref.load %arg3[%c47_515] : memref<60xf32, #tpu.memory_space<smem>>
    %cst_516 = arith.constant 0.000000e+00 : f32
    %1082 = vector.broadcast %1081 : f32 to vector<32x128xf32>
    %1083 = vector.broadcast %cst_516 : f32 to vector<32x128xf32>
    %1084 = arith.select %1031, %1082, %1083 : vector<32x128xi1>, vector<32x128xf32>
    %1085 = arith.addf %1080, %1084 : vector<32x128xf32>
    %c0_517 = arith.constant 0 : index
    %c2_518 = arith.constant 2 : index
    %c0_519 = arith.constant 0 : index
    %c0_520 = arith.constant 0 : index
    %1086 = vector.load %arg6[%c0_517, %c2_518, %c0_519, %c0_520] : memref<1x3x32x128xf32, #tpu.memory_space<vmem>>, vector<1x1x32x128xf32>
    %1087 = vector.shape_cast %1086 : vector<1x1x32x128xf32> to vector<32x128xf32>
    %1088 = vector.shape_cast %1085 : vector<32x128xf32> to vector<1x1x32x128xf32>
    tpu.vector_store %arg6[%c0_517, %c2_518, %c0_519, %c0_520], %1088 {strides = array<i32>} : memref<1x3x32x128xf32, #tpu.memory_space<vmem>>, vector<1x1x32x128xf32>,
    %c0_521 = arith.constant 0 : index
    %c0_522 = arith.constant 0 : index
    %c0_523 = arith.constant 0 : index
    %c0_524 = arith.constant 0 : index
    %1089 = vector.load %arg6[%c0_521, %c0_522, %c0_523, %c0_524] : memref<1x3x32x128xf32, #tpu.memory_space<vmem>>, vector<1x1x32x128xf32>
    %1090 = vector.shape_cast %1089 : vector<1x1x32x128xf32> to vector<32x128xf32>
    %c0_525 = arith.constant 0 : index
    %c1_526 = arith.constant 1 : index
    %c0_527 = arith.constant 0 : index
    %c0_528 = arith.constant 0 : index
    %1091 = vector.load %arg6[%c0_525, %c1_526, %c0_527, %c0_528] : memref<1x3x32x128xf32, #tpu.memory_space<vmem>>, vector<1x1x32x128xf32>
    %1092 = vector.shape_cast %1091 : vector<1x1x32x128xf32> to vector<32x128xf32>
    %c0_529 = arith.constant 0 : index
    %c2_530 = arith.constant 2 : index
    %c0_531 = arith.constant 0 : index
    %c0_532 = arith.constant 0 : index
    %1093 = vector.load %arg6[%c0_529, %c2_530, %c0_531, %c0_532] : memref<1x3x32x128xf32, #tpu.memory_space<vmem>>, vector<1x1x32x128xf32>
    %1094 = vector.shape_cast %1093 : vector<1x1x32x128xf32> to vector<32x128xf32>
    %cst_533 = arith.constant 1.700000e+01 : f32
    %1095 = vector.broadcast %cst_533 : f32 to vector<32x128xf32>
    %1096 = arith.cmpf ole, %0, %1095 : vector<32x128xf32>
    %c144 = arith.constant 144 : index
    %1097 = memref.load %arg2[%c144] : memref<180xf32, #tpu.memory_space<smem>>
    %1098 = vector.broadcast %1097 : f32 to vector<32x128xf32>
    %1099 = arith.mulf %1090, %1098 : vector<32x128xf32>
    %c145 = arith.constant 145 : index
    %1100 = memref.load %arg2[%c145] : memref<180xf32, #tpu.memory_space<smem>>
    %1101 = vector.broadcast %1100 : f32 to vector<32x128xf32>
    %1102 = arith.mulf %1092, %1101 : vector<32x128xf32>
    %1103 = arith.addf %1099, %1102 : vector<32x128xf32>
    %c146 = arith.constant 146 : index
    %1104 = memref.load %arg2[%c146] : memref<180xf32, #tpu.memory_space<smem>>
    %1105 = vector.broadcast %1104 : f32 to vector<32x128xf32>
    %1106 = arith.mulf %1094, %1105 : vector<32x128xf32>
    %1107 = arith.addf %1103, %1106 : vector<32x128xf32>
    %c48_534 = arith.constant 48 : index
    %1108 = memref.load %arg3[%c48_534] : memref<60xf32, #tpu.memory_space<smem>>
    %cst_535 = arith.constant 0.000000e+00 : f32
    %1109 = vector.broadcast %1108 : f32 to vector<32x128xf32>
    %1110 = vector.broadcast %cst_535 : f32 to vector<32x128xf32>
    %1111 = arith.select %1096, %1109, %1110 : vector<32x128xi1>, vector<32x128xf32>
    %1112 = arith.addf %1107, %1111 : vector<32x128xf32>
    %cst_536 = arith.constant 0.000000e+00 : f32
    %1113 = vector.broadcast %cst_536 : f32 to vector<32x128xf32>
    %1114 = arith.maximumf %1112, %1113 : vector<32x128xf32>
    %c0_537 = arith.constant 0 : index
    %c0_538 = arith.constant 0 : index
    %c0_539 = arith.constant 0 : index
    %c0_540 = arith.constant 0 : index
    %1115 = vector.load %arg6[%c0_537, %c0_538, %c0_539, %c0_540] : memref<1x3x32x128xf32, #tpu.memory_space<vmem>>, vector<1x1x32x128xf32>
    %1116 = vector.shape_cast %1115 : vector<1x1x32x128xf32> to vector<32x128xf32>
    %1117 = vector.shape_cast %1114 : vector<32x128xf32> to vector<1x1x32x128xf32>
    tpu.vector_store %arg6[%c0_537, %c0_538, %c0_539, %c0_540], %1117 {strides = array<i32>} : memref<1x3x32x128xf32, #tpu.memory_space<vmem>>, vector<1x1x32x128xf32>,
    %c147 = arith.constant 147 : index
    %1118 = memref.load %arg2[%c147] : memref<180xf32, #tpu.memory_space<smem>>
    %1119 = vector.broadcast %1118 : f32 to vector<32x128xf32>
    %1120 = arith.mulf %1090, %1119 : vector<32x128xf32>
    %c148 = arith.constant 148 : index
    %1121 = memref.load %arg2[%c148] : memref<180xf32, #tpu.memory_space<smem>>
    %1122 = vector.broadcast %1121 : f32 to vector<32x128xf32>
    %1123 = arith.mulf %1092, %1122 : vector<32x128xf32>
    %1124 = arith.addf %1120, %1123 : vector<32x128xf32>
    %c149 = arith.constant 149 : index
    %1125 = memref.load %arg2[%c149] : memref<180xf32, #tpu.memory_space<smem>>
    %1126 = vector.broadcast %1125 : f32 to vector<32x128xf32>
    %1127 = arith.mulf %1094, %1126 : vector<32x128xf32>
    %1128 = arith.addf %1124, %1127 : vector<32x128xf32>
    %c49_541 = arith.constant 49 : index
    %1129 = memref.load %arg3[%c49_541] : memref<60xf32, #tpu.memory_space<smem>>
    %cst_542 = arith.constant 0.000000e+00 : f32
    %1130 = vector.broadcast %1129 : f32 to vector<32x128xf32>
    %1131 = vector.broadcast %cst_542 : f32 to vector<32x128xf32>
    %1132 = arith.select %1096, %1130, %1131 : vector<32x128xi1>, vector<32x128xf32>
    %1133 = arith.addf %1128, %1132 : vector<32x128xf32>
    %cst_543 = arith.constant 0.000000e+00 : f32
    %1134 = vector.broadcast %cst_543 : f32 to vector<32x128xf32>
    %1135 = arith.maximumf %1133, %1134 : vector<32x128xf32>
    %c0_544 = arith.constant 0 : index
    %c1_545 = arith.constant 1 : index
    %c0_546 = arith.constant 0 : index
    %c0_547 = arith.constant 0 : index
    %1136 = vector.load %arg6[%c0_544, %c1_545, %c0_546, %c0_547] : memref<1x3x32x128xf32, #tpu.memory_space<vmem>>, vector<1x1x32x128xf32>
    %1137 = vector.shape_cast %1136 : vector<1x1x32x128xf32> to vector<32x128xf32>
    %1138 = vector.shape_cast %1135 : vector<32x128xf32> to vector<1x1x32x128xf32>
    tpu.vector_store %arg6[%c0_544, %c1_545, %c0_546, %c0_547], %1138 {strides = array<i32>} : memref<1x3x32x128xf32, #tpu.memory_space<vmem>>, vector<1x1x32x128xf32>,
    %c150 = arith.constant 150 : index
    %1139 = memref.load %arg2[%c150] : memref<180xf32, #tpu.memory_space<smem>>
    %1140 = vector.broadcast %1139 : f32 to vector<32x128xf32>
    %1141 = arith.mulf %1090, %1140 : vector<32x128xf32>
    %c151 = arith.constant 151 : index
    %1142 = memref.load %arg2[%c151] : memref<180xf32, #tpu.memory_space<smem>>
    %1143 = vector.broadcast %1142 : f32 to vector<32x128xf32>
    %1144 = arith.mulf %1092, %1143 : vector<32x128xf32>
    %1145 = arith.addf %1141, %1144 : vector<32x128xf32>
    %c152 = arith.constant 152 : index
    %1146 = memref.load %arg2[%c152] : memref<180xf32, #tpu.memory_space<smem>>
    %1147 = vector.broadcast %1146 : f32 to vector<32x128xf32>
    %1148 = arith.mulf %1094, %1147 : vector<32x128xf32>
    %1149 = arith.addf %1145, %1148 : vector<32x128xf32>
    %c50_548 = arith.constant 50 : index
    %1150 = memref.load %arg3[%c50_548] : memref<60xf32, #tpu.memory_space<smem>>
    %cst_549 = arith.constant 0.000000e+00 : f32
    %1151 = vector.broadcast %1150 : f32 to vector<32x128xf32>
    %1152 = vector.broadcast %cst_549 : f32 to vector<32x128xf32>
    %1153 = arith.select %1096, %1151, %1152 : vector<32x128xi1>, vector<32x128xf32>
    %1154 = arith.addf %1149, %1153 : vector<32x128xf32>
    %cst_550 = arith.constant 0.000000e+00 : f32
    %1155 = vector.broadcast %cst_550 : f32 to vector<32x128xf32>
    %1156 = arith.maximumf %1154, %1155 : vector<32x128xf32>
    %c0_551 = arith.constant 0 : index
    %c2_552 = arith.constant 2 : index
    %c0_553 = arith.constant 0 : index
    %c0_554 = arith.constant 0 : index
    %1157 = vector.load %arg6[%c0_551, %c2_552, %c0_553, %c0_554] : memref<1x3x32x128xf32, #tpu.memory_space<vmem>>, vector<1x1x32x128xf32>
    %1158 = vector.shape_cast %1157 : vector<1x1x32x128xf32> to vector<32x128xf32>
    %1159 = vector.shape_cast %1156 : vector<32x128xf32> to vector<1x1x32x128xf32>
    tpu.vector_store %arg6[%c0_551, %c2_552, %c0_553, %c0_554], %1159 {strides = array<i32>} : memref<1x3x32x128xf32, #tpu.memory_space<vmem>>, vector<1x1x32x128xf32>,
    %c0_555 = arith.constant 0 : index
    %c0_556 = arith.constant 0 : index
    %c0_557 = arith.constant 0 : index
    %c0_558 = arith.constant 0 : index
    %1160 = vector.load %arg6[%c0_555, %c0_556, %c0_557, %c0_558] : memref<1x3x32x128xf32, #tpu.memory_space<vmem>>, vector<1x1x32x128xf32>
    %1161 = vector.shape_cast %1160 : vector<1x1x32x128xf32> to vector<32x128xf32>
    %c0_559 = arith.constant 0 : index
    %c1_560 = arith.constant 1 : index
    %c0_561 = arith.constant 0 : index
    %c0_562 = arith.constant 0 : index
    %1162 = vector.load %arg6[%c0_559, %c1_560, %c0_561, %c0_562] : memref<1x3x32x128xf32, #tpu.memory_space<vmem>>, vector<1x1x32x128xf32>
    %1163 = vector.shape_cast %1162 : vector<1x1x32x128xf32> to vector<32x128xf32>
    %c0_563 = arith.constant 0 : index
    %c2_564 = arith.constant 2 : index
    %c0_565 = arith.constant 0 : index
    %c0_566 = arith.constant 0 : index
    %1164 = vector.load %arg6[%c0_563, %c2_564, %c0_565, %c0_566] : memref<1x3x32x128xf32, #tpu.memory_space<vmem>>, vector<1x1x32x128xf32>
    %1165 = vector.shape_cast %1164 : vector<1x1x32x128xf32> to vector<32x128xf32>
    %cst_567 = arith.constant 1.800000e+01 : f32
    %1166 = vector.broadcast %cst_567 : f32 to vector<32x128xf32>
    %1167 = arith.cmpf ole, %0, %1166 : vector<32x128xf32>
    %c153 = arith.constant 153 : index
    %1168 = memref.load %arg2[%c153] : memref<180xf32, #tpu.memory_space<smem>>
    %1169 = vector.broadcast %1168 : f32 to vector<32x128xf32>
    %1170 = arith.mulf %1161, %1169 : vector<32x128xf32>
    %c154 = arith.constant 154 : index
    %1171 = memref.load %arg2[%c154] : memref<180xf32, #tpu.memory_space<smem>>
    %1172 = vector.broadcast %1171 : f32 to vector<32x128xf32>
    %1173 = arith.mulf %1163, %1172 : vector<32x128xf32>
    %1174 = arith.addf %1170, %1173 : vector<32x128xf32>
    %c155 = arith.constant 155 : index
    %1175 = memref.load %arg2[%c155] : memref<180xf32, #tpu.memory_space<smem>>
    %1176 = vector.broadcast %1175 : f32 to vector<32x128xf32>
    %1177 = arith.mulf %1165, %1176 : vector<32x128xf32>
    %1178 = arith.addf %1174, %1177 : vector<32x128xf32>
    %c51_568 = arith.constant 51 : index
    %1179 = memref.load %arg3[%c51_568] : memref<60xf32, #tpu.memory_space<smem>>
    %cst_569 = arith.constant 0.000000e+00 : f32
    %1180 = vector.broadcast %1179 : f32 to vector<32x128xf32>
    %1181 = vector.broadcast %cst_569 : f32 to vector<32x128xf32>
    %1182 = arith.select %1167, %1180, %1181 : vector<32x128xi1>, vector<32x128xf32>
    %1183 = arith.addf %1178, %1182 : vector<32x128xf32>
    %c0_570 = arith.constant 0 : index
    %c0_571 = arith.constant 0 : index
    %c0_572 = arith.constant 0 : index
    %c0_573 = arith.constant 0 : index
    %1184 = vector.load %arg6[%c0_570, %c0_571, %c0_572, %c0_573] : memref<1x3x32x128xf32, #tpu.memory_space<vmem>>, vector<1x1x32x128xf32>
    %1185 = vector.shape_cast %1184 : vector<1x1x32x128xf32> to vector<32x128xf32>
    %1186 = vector.shape_cast %1183 : vector<32x128xf32> to vector<1x1x32x128xf32>
    tpu.vector_store %arg6[%c0_570, %c0_571, %c0_572, %c0_573], %1186 {strides = array<i32>} : memref<1x3x32x128xf32, #tpu.memory_space<vmem>>, vector<1x1x32x128xf32>,
    %c156 = arith.constant 156 : index
    %1187 = memref.load %arg2[%c156] : memref<180xf32, #tpu.memory_space<smem>>
    %1188 = vector.broadcast %1187 : f32 to vector<32x128xf32>
    %1189 = arith.mulf %1161, %1188 : vector<32x128xf32>
    %c157 = arith.constant 157 : index
    %1190 = memref.load %arg2[%c157] : memref<180xf32, #tpu.memory_space<smem>>
    %1191 = vector.broadcast %1190 : f32 to vector<32x128xf32>
    %1192 = arith.mulf %1163, %1191 : vector<32x128xf32>
    %1193 = arith.addf %1189, %1192 : vector<32x128xf32>
    %c158 = arith.constant 158 : index
    %1194 = memref.load %arg2[%c158] : memref<180xf32, #tpu.memory_space<smem>>
    %1195 = vector.broadcast %1194 : f32 to vector<32x128xf32>
    %1196 = arith.mulf %1165, %1195 : vector<32x128xf32>
    %1197 = arith.addf %1193, %1196 : vector<32x128xf32>
    %c52_574 = arith.constant 52 : index
    %1198 = memref.load %arg3[%c52_574] : memref<60xf32, #tpu.memory_space<smem>>
    %cst_575 = arith.constant 0.000000e+00 : f32
    %1199 = vector.broadcast %1198 : f32 to vector<32x128xf32>
    %1200 = vector.broadcast %cst_575 : f32 to vector<32x128xf32>
    %1201 = arith.select %1167, %1199, %1200 : vector<32x128xi1>, vector<32x128xf32>
    %1202 = arith.addf %1197, %1201 : vector<32x128xf32>
    %c0_576 = arith.constant 0 : index
    %c1_577 = arith.constant 1 : index
    %c0_578 = arith.constant 0 : index
    %c0_579 = arith.constant 0 : index
    %1203 = vector.load %arg6[%c0_576, %c1_577, %c0_578, %c0_579] : memref<1x3x32x128xf32, #tpu.memory_space<vmem>>, vector<1x1x32x128xf32>
    %1204 = vector.shape_cast %1203 : vector<1x1x32x128xf32> to vector<32x128xf32>
    %1205 = vector.shape_cast %1202 : vector<32x128xf32> to vector<1x1x32x128xf32>
    tpu.vector_store %arg6[%c0_576, %c1_577, %c0_578, %c0_579], %1205 {strides = array<i32>} : memref<1x3x32x128xf32, #tpu.memory_space<vmem>>, vector<1x1x32x128xf32>,
    %c159 = arith.constant 159 : index
    %1206 = memref.load %arg2[%c159] : memref<180xf32, #tpu.memory_space<smem>>
    %1207 = vector.broadcast %1206 : f32 to vector<32x128xf32>
    %1208 = arith.mulf %1161, %1207 : vector<32x128xf32>
    %c160 = arith.constant 160 : index
    %1209 = memref.load %arg2[%c160] : memref<180xf32, #tpu.memory_space<smem>>
    %1210 = vector.broadcast %1209 : f32 to vector<32x128xf32>
    %1211 = arith.mulf %1163, %1210 : vector<32x128xf32>
    %1212 = arith.addf %1208, %1211 : vector<32x128xf32>
    %c161 = arith.constant 161 : index
    %1213 = memref.load %arg2[%c161] : memref<180xf32, #tpu.memory_space<smem>>
    %1214 = vector.broadcast %1213 : f32 to vector<32x128xf32>
    %1215 = arith.mulf %1165, %1214 : vector<32x128xf32>
    %1216 = arith.addf %1212, %1215 : vector<32x128xf32>
    %c53_580 = arith.constant 53 : index
    %1217 = memref.load %arg3[%c53_580] : memref<60xf32, #tpu.memory_space<smem>>
    %cst_581 = arith.constant 0.000000e+00 : f32
    %1218 = vector.broadcast %1217 : f32 to vector<32x128xf32>
    %1219 = vector.broadcast %cst_581 : f32 to vector<32x128xf32>
    %1220 = arith.select %1167, %1218, %1219 : vector<32x128xi1>, vector<32x128xf32>
    %1221 = arith.addf %1216, %1220 : vector<32x128xf32>
    %c0_582 = arith.constant 0 : index
    %c2_583 = arith.constant 2 : index
    %c0_584 = arith.constant 0 : index
    %c0_585 = arith.constant 0 : index
    %1222 = vector.load %arg6[%c0_582, %c2_583, %c0_584, %c0_585] : memref<1x3x32x128xf32, #tpu.memory_space<vmem>>, vector<1x1x32x128xf32>
    %1223 = vector.shape_cast %1222 : vector<1x1x32x128xf32> to vector<32x128xf32>
    %1224 = vector.shape_cast %1221 : vector<32x128xf32> to vector<1x1x32x128xf32>
    tpu.vector_store %arg6[%c0_582, %c2_583, %c0_584, %c0_585], %1224 {strides = array<i32>} : memref<1x3x32x128xf32, #tpu.memory_space<vmem>>, vector<1x1x32x128xf32>,
    %c0_586 = arith.constant 0 : index
    %c0_587 = arith.constant 0 : index
    %c0_588 = arith.constant 0 : index
    %c0_589 = arith.constant 0 : index
    %1225 = vector.load %arg6[%c0_586, %c0_587, %c0_588, %c0_589] : memref<1x3x32x128xf32, #tpu.memory_space<vmem>>, vector<1x1x32x128xf32>
    %1226 = vector.shape_cast %1225 : vector<1x1x32x128xf32> to vector<32x128xf32>
    %c0_590 = arith.constant 0 : index
    %c1_591 = arith.constant 1 : index
    %c0_592 = arith.constant 0 : index
    %c0_593 = arith.constant 0 : index
    %1227 = vector.load %arg6[%c0_590, %c1_591, %c0_592, %c0_593] : memref<1x3x32x128xf32, #tpu.memory_space<vmem>>, vector<1x1x32x128xf32>
    %1228 = vector.shape_cast %1227 : vector<1x1x32x128xf32> to vector<32x128xf32>
    %c0_594 = arith.constant 0 : index
    %c2_595 = arith.constant 2 : index
    %c0_596 = arith.constant 0 : index
    %c0_597 = arith.constant 0 : index
    %1229 = vector.load %arg6[%c0_594, %c2_595, %c0_596, %c0_597] : memref<1x3x32x128xf32, #tpu.memory_space<vmem>>, vector<1x1x32x128xf32>
    %1230 = vector.shape_cast %1229 : vector<1x1x32x128xf32> to vector<32x128xf32>
    %cst_598 = arith.constant 1.900000e+01 : f32
    %1231 = vector.broadcast %cst_598 : f32 to vector<32x128xf32>
    %1232 = arith.cmpf ole, %0, %1231 : vector<32x128xf32>
    %c162 = arith.constant 162 : index
    %1233 = memref.load %arg2[%c162] : memref<180xf32, #tpu.memory_space<smem>>
    %1234 = vector.broadcast %1233 : f32 to vector<32x128xf32>
    %1235 = arith.mulf %1226, %1234 : vector<32x128xf32>
    %c163 = arith.constant 163 : index
    %1236 = memref.load %arg2[%c163] : memref<180xf32, #tpu.memory_space<smem>>
    %1237 = vector.broadcast %1236 : f32 to vector<32x128xf32>
    %1238 = arith.mulf %1228, %1237 : vector<32x128xf32>
    %1239 = arith.addf %1235, %1238 : vector<32x128xf32>
    %c164 = arith.constant 164 : index
    %1240 = memref.load %arg2[%c164] : memref<180xf32, #tpu.memory_space<smem>>
    %1241 = vector.broadcast %1240 : f32 to vector<32x128xf32>
    %1242 = arith.mulf %1230, %1241 : vector<32x128xf32>
    %1243 = arith.addf %1239, %1242 : vector<32x128xf32>
    %c54_599 = arith.constant 54 : index
    %1244 = memref.load %arg3[%c54_599] : memref<60xf32, #tpu.memory_space<smem>>
    %cst_600 = arith.constant 0.000000e+00 : f32
    %1245 = vector.broadcast %1244 : f32 to vector<32x128xf32>
    %1246 = vector.broadcast %cst_600 : f32 to vector<32x128xf32>
    %1247 = arith.select %1232, %1245, %1246 : vector<32x128xi1>, vector<32x128xf32>
    %1248 = arith.addf %1243, %1247 : vector<32x128xf32>
    %cst_601 = arith.constant 0.000000e+00 : f32
    %1249 = vector.broadcast %cst_601 : f32 to vector<32x128xf32>
    %1250 = arith.maximumf %1248, %1249 : vector<32x128xf32>
    %c0_602 = arith.constant 0 : index
    %c0_603 = arith.constant 0 : index
    %c0_604 = arith.constant 0 : index
    %c0_605 = arith.constant 0 : index
    %1251 = vector.load %arg6[%c0_602, %c0_603, %c0_604, %c0_605] : memref<1x3x32x128xf32, #tpu.memory_space<vmem>>, vector<1x1x32x128xf32>
    %1252 = vector.shape_cast %1251 : vector<1x1x32x128xf32> to vector<32x128xf32>
    %1253 = vector.shape_cast %1250 : vector<32x128xf32> to vector<1x1x32x128xf32>
    tpu.vector_store %arg6[%c0_602, %c0_603, %c0_604, %c0_605], %1253 {strides = array<i32>} : memref<1x3x32x128xf32, #tpu.memory_space<vmem>>, vector<1x1x32x128xf32>,
    %c165 = arith.constant 165 : index
    %1254 = memref.load %arg2[%c165] : memref<180xf32, #tpu.memory_space<smem>>
    %1255 = vector.broadcast %1254 : f32 to vector<32x128xf32>
    %1256 = arith.mulf %1226, %1255 : vector<32x128xf32>
    %c166 = arith.constant 166 : index
    %1257 = memref.load %arg2[%c166] : memref<180xf32, #tpu.memory_space<smem>>
    %1258 = vector.broadcast %1257 : f32 to vector<32x128xf32>
    %1259 = arith.mulf %1228, %1258 : vector<32x128xf32>
    %1260 = arith.addf %1256, %1259 : vector<32x128xf32>
    %c167 = arith.constant 167 : index
    %1261 = memref.load %arg2[%c167] : memref<180xf32, #tpu.memory_space<smem>>
    %1262 = vector.broadcast %1261 : f32 to vector<32x128xf32>
    %1263 = arith.mulf %1230, %1262 : vector<32x128xf32>
    %1264 = arith.addf %1260, %1263 : vector<32x128xf32>
    %c55_606 = arith.constant 55 : index
    %1265 = memref.load %arg3[%c55_606] : memref<60xf32, #tpu.memory_space<smem>>
    %cst_607 = arith.constant 0.000000e+00 : f32
    %1266 = vector.broadcast %1265 : f32 to vector<32x128xf32>
    %1267 = vector.broadcast %cst_607 : f32 to vector<32x128xf32>
    %1268 = arith.select %1232, %1266, %1267 : vector<32x128xi1>, vector<32x128xf32>
    %1269 = arith.addf %1264, %1268 : vector<32x128xf32>
    %cst_608 = arith.constant 0.000000e+00 : f32
    %1270 = vector.broadcast %cst_608 : f32 to vector<32x128xf32>
    %1271 = arith.maximumf %1269, %1270 : vector<32x128xf32>
    %c0_609 = arith.constant 0 : index
    %c1_610 = arith.constant 1 : index
    %c0_611 = arith.constant 0 : index
    %c0_612 = arith.constant 0 : index
    %1272 = vector.load %arg6[%c0_609, %c1_610, %c0_611, %c0_612] : memref<1x3x32x128xf32, #tpu.memory_space<vmem>>, vector<1x1x32x128xf32>
    %1273 = vector.shape_cast %1272 : vector<1x1x32x128xf32> to vector<32x128xf32>
    %1274 = vector.shape_cast %1271 : vector<32x128xf32> to vector<1x1x32x128xf32>
    tpu.vector_store %arg6[%c0_609, %c1_610, %c0_611, %c0_612], %1274 {strides = array<i32>} : memref<1x3x32x128xf32, #tpu.memory_space<vmem>>, vector<1x1x32x128xf32>,
    %c168 = arith.constant 168 : index
    %1275 = memref.load %arg2[%c168] : memref<180xf32, #tpu.memory_space<smem>>
    %1276 = vector.broadcast %1275 : f32 to vector<32x128xf32>
    %1277 = arith.mulf %1226, %1276 : vector<32x128xf32>
    %c169 = arith.constant 169 : index
    %1278 = memref.load %arg2[%c169] : memref<180xf32, #tpu.memory_space<smem>>
    %1279 = vector.broadcast %1278 : f32 to vector<32x128xf32>
    %1280 = arith.mulf %1228, %1279 : vector<32x128xf32>
    %1281 = arith.addf %1277, %1280 : vector<32x128xf32>
    %c170 = arith.constant 170 : index
    %1282 = memref.load %arg2[%c170] : memref<180xf32, #tpu.memory_space<smem>>
    %1283 = vector.broadcast %1282 : f32 to vector<32x128xf32>
    %1284 = arith.mulf %1230, %1283 : vector<32x128xf32>
    %1285 = arith.addf %1281, %1284 : vector<32x128xf32>
    %c56_613 = arith.constant 56 : index
    %1286 = memref.load %arg3[%c56_613] : memref<60xf32, #tpu.memory_space<smem>>
    %cst_614 = arith.constant 0.000000e+00 : f32
    %1287 = vector.broadcast %1286 : f32 to vector<32x128xf32>
    %1288 = vector.broadcast %cst_614 : f32 to vector<32x128xf32>
    %1289 = arith.select %1232, %1287, %1288 : vector<32x128xi1>, vector<32x128xf32>
    %1290 = arith.addf %1285, %1289 : vector<32x128xf32>
    %cst_615 = arith.constant 0.000000e+00 : f32
    %1291 = vector.broadcast %cst_615 : f32 to vector<32x128xf32>
    %1292 = arith.maximumf %1290, %1291 : vector<32x128xf32>
    %c0_616 = arith.constant 0 : index
    %c2_617 = arith.constant 2 : index
    %c0_618 = arith.constant 0 : index
    %c0_619 = arith.constant 0 : index
    %1293 = vector.load %arg6[%c0_616, %c2_617, %c0_618, %c0_619] : memref<1x3x32x128xf32, #tpu.memory_space<vmem>>, vector<1x1x32x128xf32>
    %1294 = vector.shape_cast %1293 : vector<1x1x32x128xf32> to vector<32x128xf32>
    %1295 = vector.shape_cast %1292 : vector<32x128xf32> to vector<1x1x32x128xf32>
    tpu.vector_store %arg6[%c0_616, %c2_617, %c0_618, %c0_619], %1295 {strides = array<i32>} : memref<1x3x32x128xf32, #tpu.memory_space<vmem>>, vector<1x1x32x128xf32>,
    %c0_620 = arith.constant 0 : index
    %c0_621 = arith.constant 0 : index
    %c0_622 = arith.constant 0 : index
    %c0_623 = arith.constant 0 : index
    %1296 = vector.load %arg6[%c0_620, %c0_621, %c0_622, %c0_623] : memref<1x3x32x128xf32, #tpu.memory_space<vmem>>, vector<1x1x32x128xf32>
    %1297 = vector.shape_cast %1296 : vector<1x1x32x128xf32> to vector<32x128xf32>
    %c0_624 = arith.constant 0 : index
    %c1_625 = arith.constant 1 : index
    %c0_626 = arith.constant 0 : index
    %c0_627 = arith.constant 0 : index
    %1298 = vector.load %arg6[%c0_624, %c1_625, %c0_626, %c0_627] : memref<1x3x32x128xf32, #tpu.memory_space<vmem>>, vector<1x1x32x128xf32>
    %1299 = vector.shape_cast %1298 : vector<1x1x32x128xf32> to vector<32x128xf32>
    %c0_628 = arith.constant 0 : index
    %c2_629 = arith.constant 2 : index
    %c0_630 = arith.constant 0 : index
    %c0_631 = arith.constant 0 : index
    %1300 = vector.load %arg6[%c0_628, %c2_629, %c0_630, %c0_631] : memref<1x3x32x128xf32, #tpu.memory_space<vmem>>, vector<1x1x32x128xf32>
    %1301 = vector.shape_cast %1300 : vector<1x1x32x128xf32> to vector<32x128xf32>
    %cst_632 = arith.constant 2.000000e+01 : f32
    %1302 = vector.broadcast %cst_632 : f32 to vector<32x128xf32>
    %1303 = arith.cmpf ole, %0, %1302 : vector<32x128xf32>
    %c171 = arith.constant 171 : index
    %1304 = memref.load %arg2[%c171] : memref<180xf32, #tpu.memory_space<smem>>
    %1305 = vector.broadcast %1304 : f32 to vector<32x128xf32>
    %1306 = arith.mulf %1297, %1305 : vector<32x128xf32>
    %c172 = arith.constant 172 : index
    %1307 = memref.load %arg2[%c172] : memref<180xf32, #tpu.memory_space<smem>>
    %1308 = vector.broadcast %1307 : f32 to vector<32x128xf32>
    %1309 = arith.mulf %1299, %1308 : vector<32x128xf32>
    %1310 = arith.addf %1306, %1309 : vector<32x128xf32>
    %c173 = arith.constant 173 : index
    %1311 = memref.load %arg2[%c173] : memref<180xf32, #tpu.memory_space<smem>>
    %1312 = vector.broadcast %1311 : f32 to vector<32x128xf32>
    %1313 = arith.mulf %1301, %1312 : vector<32x128xf32>
    %1314 = arith.addf %1310, %1313 : vector<32x128xf32>
    %c57_633 = arith.constant 57 : index
    %1315 = memref.load %arg3[%c57_633] : memref<60xf32, #tpu.memory_space<smem>>
    %cst_634 = arith.constant 0.000000e+00 : f32
    %1316 = vector.broadcast %1315 : f32 to vector<32x128xf32>
    %1317 = vector.broadcast %cst_634 : f32 to vector<32x128xf32>
    %1318 = arith.select %1303, %1316, %1317 : vector<32x128xi1>, vector<32x128xf32>
    %1319 = arith.addf %1314, %1318 : vector<32x128xf32>
    %c0_635 = arith.constant 0 : index
    %c0_636 = arith.constant 0 : index
    %c0_637 = arith.constant 0 : index
    %c0_638 = arith.constant 0 : index
    %1320 = vector.load %arg6[%c0_635, %c0_636, %c0_637, %c0_638] : memref<1x3x32x128xf32, #tpu.memory_space<vmem>>, vector<1x1x32x128xf32>
    %1321 = vector.shape_cast %1320 : vector<1x1x32x128xf32> to vector<32x128xf32>
    %1322 = vector.shape_cast %1319 : vector<32x128xf32> to vector<1x1x32x128xf32>
    tpu.vector_store %arg6[%c0_635, %c0_636, %c0_637, %c0_638], %1322 {strides = array<i32>} : memref<1x3x32x128xf32, #tpu.memory_space<vmem>>, vector<1x1x32x128xf32>,
    %c174 = arith.constant 174 : index
    %1323 = memref.load %arg2[%c174] : memref<180xf32, #tpu.memory_space<smem>>
    %1324 = vector.broadcast %1323 : f32 to vector<32x128xf32>
    %1325 = arith.mulf %1297, %1324 : vector<32x128xf32>
    %c175 = arith.constant 175 : index
    %1326 = memref.load %arg2[%c175] : memref<180xf32, #tpu.memory_space<smem>>
    %1327 = vector.broadcast %1326 : f32 to vector<32x128xf32>
    %1328 = arith.mulf %1299, %1327 : vector<32x128xf32>
    %1329 = arith.addf %1325, %1328 : vector<32x128xf32>
    %c176 = arith.constant 176 : index
    %1330 = memref.load %arg2[%c176] : memref<180xf32, #tpu.memory_space<smem>>
    %1331 = vector.broadcast %1330 : f32 to vector<32x128xf32>
    %1332 = arith.mulf %1301, %1331 : vector<32x128xf32>
    %1333 = arith.addf %1329, %1332 : vector<32x128xf32>
    %c58_639 = arith.constant 58 : index
    %1334 = memref.load %arg3[%c58_639] : memref<60xf32, #tpu.memory_space<smem>>
    %cst_640 = arith.constant 0.000000e+00 : f32
    %1335 = vector.broadcast %1334 : f32 to vector<32x128xf32>
    %1336 = vector.broadcast %cst_640 : f32 to vector<32x128xf32>
    %1337 = arith.select %1303, %1335, %1336 : vector<32x128xi1>, vector<32x128xf32>
    %1338 = arith.addf %1333, %1337 : vector<32x128xf32>
    %c0_641 = arith.constant 0 : index
    %c1_642 = arith.constant 1 : index
    %c0_643 = arith.constant 0 : index
    %c0_644 = arith.constant 0 : index
    %1339 = vector.load %arg6[%c0_641, %c1_642, %c0_643, %c0_644] : memref<1x3x32x128xf32, #tpu.memory_space<vmem>>, vector<1x1x32x128xf32>
    %1340 = vector.shape_cast %1339 : vector<1x1x32x128xf32> to vector<32x128xf32>
    %1341 = vector.shape_cast %1338 : vector<32x128xf32> to vector<1x1x32x128xf32>
    tpu.vector_store %arg6[%c0_641, %c1_642, %c0_643, %c0_644], %1341 {strides = array<i32>} : memref<1x3x32x128xf32, #tpu.memory_space<vmem>>, vector<1x1x32x128xf32>,
    %c177 = arith.constant 177 : index
    %1342 = memref.load %arg2[%c177] : memref<180xf32, #tpu.memory_space<smem>>
    %1343 = vector.broadcast %1342 : f32 to vector<32x128xf32>
    %1344 = arith.mulf %1297, %1343 : vector<32x128xf32>
    %c178 = arith.constant 178 : index
    %1345 = memref.load %arg2[%c178] : memref<180xf32, #tpu.memory_space<smem>>
    %1346 = vector.broadcast %1345 : f32 to vector<32x128xf32>
    %1347 = arith.mulf %1299, %1346 : vector<32x128xf32>
    %1348 = arith.addf %1344, %1347 : vector<32x128xf32>
    %c179 = arith.constant 179 : index
    %1349 = memref.load %arg2[%c179] : memref<180xf32, #tpu.memory_space<smem>>
    %1350 = vector.broadcast %1349 : f32 to vector<32x128xf32>
    %1351 = arith.mulf %1301, %1350 : vector<32x128xf32>
    %1352 = arith.addf %1348, %1351 : vector<32x128xf32>
    %c59_645 = arith.constant 59 : index
    %1353 = memref.load %arg3[%c59_645] : memref<60xf32, #tpu.memory_space<smem>>
    %cst_646 = arith.constant 0.000000e+00 : f32
    %1354 = vector.broadcast %1353 : f32 to vector<32x128xf32>
    %1355 = vector.broadcast %cst_646 : f32 to vector<32x128xf32>
    %1356 = arith.select %1303, %1354, %1355 : vector<32x128xi1>, vector<32x128xf32>
    %1357 = arith.addf %1352, %1356 : vector<32x128xf32>
    %c0_647 = arith.constant 0 : index
    %c2_648 = arith.constant 2 : index
    %c0_649 = arith.constant 0 : index
    %c0_650 = arith.constant 0 : index
    %1358 = vector.load %arg6[%c0_647, %c2_648, %c0_649, %c0_650] : memref<1x3x32x128xf32, #tpu.memory_space<vmem>>, vector<1x1x32x128xf32>
    %1359 = vector.shape_cast %1358 : vector<1x1x32x128xf32> to vector<32x128xf32>
    %1360 = vector.shape_cast %1357 : vector<32x128xf32> to vector<1x1x32x128xf32>
    tpu.vector_store %arg6[%c0_647, %c2_648, %c0_649, %c0_650], %1360 {strides = array<i32>} : memref<1x3x32x128xf32, #tpu.memory_space<vmem>>, vector<1x1x32x128xf32>,
    return
  }
  func.func @transform_0(%arg0: i32, %arg1: i32) -> i32 {
    %c0_i32 = arith.constant 0 : i32
    %c0_i32_0 = arith.constant 0 : i32
    return %c0_i32 : i32
  }
  func.func @transform_1(%arg0: i32, %arg1: i32) -> i32 {
    %c0_i32 = arith.constant 0 : i32
    %c0_i32_0 = arith.constant 0 : i32
    return %c0_i32 : i32
  }
  func.func @transform_2(%arg0: i32, %arg1: i32) -> (i32, i32) {
    %c0_i32 = arith.constant 0 : i32
    %c0_i32_0 = arith.constant 0 : i32
    return %arg1, %c0_i32 : i32, i32
  }
  func.func @transform_3(%arg0: i32, %arg1: i32) -> (i32, i32, i32, i32) {
    %c0_i32 = arith.constant 0 : i32
    %c0_i32_0 = arith.constant 0 : i32
    %c0_i32_1 = arith.constant 0 : i32
    return %arg0, %c0_i32, %arg1, %c0_i32_0 : i32, i32, i32, i32
  }
  func.func @transform_4(%arg0: i32, %arg1: i32) -> (i32, i32, i32, i32) {
    %c0_i32 = arith.constant 0 : i32
    %c0_i32_0 = arith.constant 0 : i32
    %c0_i32_1 = arith.constant 0 : i32
    return %arg0, %c0_i32, %arg1, %c0_i32_0 : i32, i32, i32, i32
  }
}

</mosaic_0001>

<llo_original>
// kernel: model_with_blocks_forward.1
$region0: #{model_with_blocks_forward.1}
  #allocation0 [shape = 'u32[]', space=smem, size = 0x4, offset = 0x4, fixed_abs, tag = 'smem constant byte address 0x4 - core index']
  #allocation1 [shape = 'u32[144,128]{1,0:T(1,128)}', space=vmem, size = 0x12000, scoped, tag = 'internal scratch']
  %s0 = inlined_call_operand.vmem [shape: f32[180], index: 0, kind: input, shape index: {}]
  %s1 = inlined_call_operand.vmem [shape: f32[60], index: 1, kind: input, shape index: {}]
  %s2 = inlined_call_operand.vmem [shape: f32[32,128], index: 2, kind: input, shape index: {}]
  %s3 = inlined_call_operand.vmem [shape: f32[2,3,32,128], index: 3, kind: input, shape index: {}]
  %s4 = inlined_call_operand.vmem [shape: f32[2,3,32,128], index: 4, kind: output, shape index: {}]
  %s5 = sld [smem:[#allocation0]]
  $region57: #{model_with_blocks_forward.1} parent=0
    _
  %s7 = ssub.s32 1, %s5
  %s8 = scalar_select 0, %s7, %s5
  $region1: #{model_with_blocks_forward.1} parent=0
    #allocation2 [shape = 'u8[1024]{0}', space=smem, size = 0x400, scoped, tag = 'input window, operand 0, single buffered']
    #allocation3 [shape = 's32[2]{0}', space=sflag, size = 0x8, scoped, tag = 'scoped memory for model_with_blocks_forward.1']
    #allocation4 [shape = 'u8[512]{0}', space=smem, size = 0x200, scoped, tag = 'input window, operand 1, single buffered']
    #allocation5 [shape = 's32[1]{0}', space=sflag, size = 0x4, scoped, tag = 'scoped memory for model_with_blocks_forward.1']
    %9 = vsyncpa [#allocation3], 0
    %10 = vsyncpa [#allocation5], 0
    loop: start=0, step=1, limit=4
    $region2: #{model_with_blocks_forward.1} parent=1 // loop_pre_header
      _
    $region3: #{model_with_blocks_forward.1} parent=1 // loop_header
      %s12 = sphi 0, %s16
      %p13 = scmp.ge.s32.totalorder %s12, 4
      %s19 = sphi 0, %s31
      %s20 = sphi 0, %s27
      %s21 = sphi 0, %s19
      %s22 = sphi 0, %s20
      %s23 = sphi 0, %s21
      %s24 = sphi 0, %s22
      %s32 = sphi 0, %s32
      %s34 = sphi 0, %s32
      %s35 = sphi 0, %s34
      %s49 = sphi 0, %s35
      %s53 = sphi 0, %s53
      %s55 = sphi 0, %s53
      %s56 = sphi 0, %s55
      %s70 = sphi 0, %s56
      %s76 = sphi 0, %s78
      %s79 = sphi 0, %s76
      %s80 = sphi 0, %s79
      %s96 = sphi 0, %s80
      %s104 = sphi 0, %s106
      %s107 = sphi 0, %s104
      %s108 = sphi 0, %s107
      %s124 = sphi 0, %s108
      %s132 = sphi 0, %s134
      %s135 = sphi 0, %s132
      %s136 = sphi 0, %s135
      %s152 = sphi 0, %s136
    $region4: #{model_with_blocks_forward.1} parent=1 // loop_header_branch
      %15 = sbr.rel (%p13) target = $region8
    $region5: #{model_with_blocks_forward.1} parent=1 // loop_body
      %s17 = ssub.s32 %s12, 1
      %s18 = ssub.s32 %s12, 2
      %s25 = sadd.s32 1, %s20
      %p26 = scmp.ge.s32.totalorder %s25, 1
      %s27 = scalar_select %p26, 0, %s25
      %s28 = sadd.s32 1, %s19
      %s29 = scalar_select %p26, %s28, %s19
      %p30 = scmp.ge.s32.totalorder %s29, 2
      %s31 = scalar_select %p30, 0, %s29
      %s33 = sadd.s32 %s32, 1
      %p36 = scmp.eq.s32.totalorder %s12, 1
      %p37 = scmp.ne.s32.totalorder %s32, %s34
      %p38 = scmp.eq.s32.totalorder %s12, 0
      %p39 = por %p37, %p38
      %p40 = scmp.ne.s32.totalorder %s32, %s34
      %p41 = scmp.eq.s32.totalorder %s17, 1
      %p42 = por %p40, %p41
      %p43 = scmp.ne.s32.totalorder %s34, %s35
      %p44 = scmp.eq.s32.totalorder %s17, 0
      %p45 = por %p43, %p44
      %p46 = scmp.ne.s32.totalorder %s34, %s35
      %p47 = scmp.eq.s32.totalorder %s18, 1
      %p48 = por %p46, %p47
      %p50 = scmp.ne.s32.totalorder %s35, %s49
      %p51 = scmp.eq.s32.totalorder %s18, 0
      %p52 = por %p50, %p51
      %s54 = sadd.s32 %s53, 1
      %p57 = scmp.eq.s32.totalorder %s12, 1
      %p58 = scmp.ne.s32.totalorder %s53, %s55
      %p59 = scmp.eq.s32.totalorder %s12, 0
      %p60 = por %p58, %p59
      %p61 = scmp.ne.s32.totalorder %s53, %s55
      %p62 = scmp.eq.s32.totalorder %s17, 1
      %p63 = por %p61, %p62
      %p64 = scmp.ne.s32.totalorder %s55, %s56
      %p65 = scmp.eq.s32.totalorder %s17, 0
      %p66 = por %p64, %p65
      %p67 = scmp.ne.s32.totalorder %s55, %s56
      %p68 = scmp.eq.s32.totalorder %s18, 1
      %p69 = por %p67, %p68
      %p71 = scmp.ne.s32.totalorder %s56, %s70
      %p72 = scmp.eq.s32.totalorder %s18, 0
      %p73 = por %p71, %p72
      %s74 = ssub.s32 %s20, %s27
      %p75 = scmp.eq.s32.totalorder %s74, 0
      %s77 = sadd.s32 %s76, 1
      %s78 = scalar_select %p75, %s76, %s77
      %p81 = pneg %p75
      %p82 = scmp.eq.s32.totalorder %s12, 1
      %p83 = por %p81, %p82
      %p84 = scmp.ne.s32.totalorder %s76, %s79
      %p85 = scmp.eq.s32.totalorder %s12, 0
      %p86 = por %p84, %p85
      %p87 = scmp.ne.s32.totalorder %s76, %s79
      %p88 = scmp.eq.s32.totalorder %s17, 1
      %p89 = por %p87, %p88
      %p90 = scmp.ne.s32.totalorder %s79, %s80
      %p91 = scmp.eq.s32.totalorder %s17, 0
      %p92 = por %p90, %p91
      %p93 = scmp.ne.s32.totalorder %s79, %s80
      %p94 = scmp.eq.s32.totalorder %s18, 1
      %p95 = por %p93, %p94
      %p97 = scmp.ne.s32.totalorder %s80, %s96
      %p98 = scmp.eq.s32.totalorder %s18, 0
      %p99 = por %p97, %p98
      %s100 = ssub.s32 %s19, %s31
      %s101 = ssub.s32 %s20, %s27
      %s102 = sor.u32 %s100, %s101
      %p103 = scmp.eq.s32.totalorder %s102, 0
      %s105 = sadd.s32 %s104, 1
      %s106 = scalar_select %p103, %s104, %s105
      %p109 = pneg %p103
      %p110 = scmp.eq.s32.totalorder %s12, 1
      %p111 = por %p109, %p110
      %p112 = scmp.ne.s32.totalorder %s104, %s107
      %p113 = scmp.eq.s32.totalorder %s12, 0
      %p114 = por %p112, %p113
      %p115 = scmp.ne.s32.totalorder %s104, %s107
      %p116 = scmp.eq.s32.totalorder %s17, 1
      %p117 = por %p115, %p116
      %p118 = scmp.ne.s32.totalorder %s107, %s108
      %p119 = scmp.eq.s32.totalorder %s17, 0
      %p120 = por %p118, %p119
      %p121 = scmp.ne.s32.totalorder %s107, %s108
      %p122 = scmp.eq.s32.totalorder %s18, 1
      %p123 = por %p121, %p122
      %p125 = scmp.ne.s32.totalorder %s108, %s124
      %p126 = scmp.eq.s32.totalorder %s18, 0
      %p127 = por %p125, %p126
      %s128 = ssub.s32 %s19, %s31
      %s129 = ssub.s32 %s20, %s27
      %s130 = sor.u32 %s128, %s129
      %p131 = scmp.eq.s32.totalorder %s130, 0
      %s133 = sadd.s32 %s132, 1
      %s134 = scalar_select %p131, %s132, %s133
      %p137 = pneg %p131
      %p138 = scmp.eq.s32.totalorder %s12, 1
      %p139 = por %p137, %p138
      %p140 = scmp.ne.s32.totalorder %s132, %s135
      %p141 = scmp.eq.s32.totalorder %s12, 0
      %p142 = por %p140, %p141
      %p143 = scmp.ne.s32.totalorder %s132, %s135
      %p144 = scmp.eq.s32.totalorder %s17, 1
      %p145 = por %p143, %p144
      %p146 = scmp.ne.s32.totalorder %s135, %s136
      %p147 = scmp.eq.s32.totalorder %s17, 0
      %p148 = por %p146, %p147
      %p149 = scmp.ne.s32.totalorder %s135, %s136
      %p150 = scmp.eq.s32.totalorder %s18, 1
      %p151 = por %p149, %p150
      %p153 = scmp.ne.s32.totalorder %s136, %s152
      %p154 = scmp.eq.s32.totalorder %s18, 0
      %p155 = por %p153, %p154
      %p156 = scmp.le.s32.totalorder 1, %s12
      %p157 = scmp.lt.s32.totalorder %s12, 3
      %p158 = pnand %p156, %p157
      %p159 = pneg %p158
      // Predicated region
      $region9: #{model_with_blocks_forward.1} parent=5 // pred_check
        _
      $region10: #{model_with_blocks_forward.1} parent=5 // pred_check_branch
        %161 = sbr.rel (%p158) target = $region12
      $region11: #{model_with_blocks_forward.1} parent=5 // pred_region
        %s162 = ssub.s32 %s12, 1
        // Predicated region
        $region13: #{model_with_blocks_forward.1} parent=11 // pred_check
          %p163 = pneg %p45
        $region14: #{model_with_blocks_forward.1} parent=11 // pred_check_branch
          %165 = sbr.rel (%p163) target = $region16
        $region15: #{model_with_blocks_forward.1} parent=11 // pred_region
          %s167 = ssub.s32 32, 32
          %168 = vsyncadd [#allocation3], %s167
          %s170 = sshll.u32 %s0, 4
          %s171 = int_to_ptr.vmem [resolvable:$true] %s170
          %173 = dma.vmem_to_smem %s171, 32, [#allocation2], [#allocation3]
        $region16: #{model_with_blocks_forward.1} parent=11 // pred_fallthru
          _
        // Predicated region
        $region17: #{model_with_blocks_forward.1} parent=11 // pred_check
          %p174 = pneg %p66
        $region18: #{model_with_blocks_forward.1} parent=11 // pred_check_branch
          %176 = sbr.rel (%p174) target = $region20
        $region19: #{model_with_blocks_forward.1} parent=11 // pred_region
          %s178 = ssub.s32 16, 16
          %179 = vsyncadd [#allocation5], %s178
          %s181 = sshll.u32 %s1, 4
          %s182 = int_to_ptr.vmem [resolvable:$true] %s181
          %184 = dma.vmem_to_smem %s182, 16, [#allocation4], [#allocation5]
        $region20: #{model_with_blocks_forward.1} parent=11 // pred_fallthru
          _
        // Predicated region
        $region21: #{model_with_blocks_forward.1} parent=11 // pred_check
          %p185 = pneg %p92
        $region22: #{model_with_blocks_forward.1} parent=11 // pred_check_branch
          %187 = sbr.rel (%p185) target = $region24
        $region23: #{model_with_blocks_forward.1} parent=11 // pred_region
          %s188 = smul.u32 4, %s22
          %p189 = scmp.lt.s32.totalorder %s188, 3
          %s190 = scalar_select %p189, %s188, 3
          %s191 = smul.addr %s190, 8
          %s192 = scalar_lea.vmem %s2, %s191
          %s193 = smul.u32 4, %s22
        $region24: #{model_with_blocks_forward.1} parent=11 // pred_fallthru
          _
      $region12: #{model_with_blocks_forward.1} parent=5 // pred_fallthru
        _
      %p194 = scmp.lt.s32.totalorder %s12, 2
      // Predicated region
      $region25: #{model_with_blocks_forward.1} parent=5 // pred_check
        %p195 = pneg %p194
      $region26: #{model_with_blocks_forward.1} parent=5 // pred_check_branch
        %197 = sbr.rel (%p195) target = $region28
      $region27: #{model_with_blocks_forward.1} parent=5 // pred_region
        // Predicated region
        $region29: #{model_with_blocks_forward.1} parent=27 // pred_check
          %p198 = pneg %p114
        $region30: #{model_with_blocks_forward.1} parent=27 // pred_check_branch
          %200 = sbr.rel (%p198) target = $region32
        $region31: #{model_with_blocks_forward.1} parent=27 // pred_region
          %s201 = smul.u32 4, %s20
          %p202 = scmp.lt.s32.totalorder %s19, 1
          %s203 = scalar_select %p202, %s19, 1
          %p204 = scmp.lt.s32.totalorder %s201, 3
          %s205 = scalar_select %p204, %s201, 3
          %s206 = smul.addr %s203, 12
          %s207 = sadd.s32 %s205, %s206
          %s208 = smul.addr %s207, 8
          %s209 = scalar_lea.vmem %s3, %s208
          %s210 = smul.u32 4, %s20
        $region32: #{model_with_blocks_forward.1} parent=27 // pred_fallthru
          _
      $region28: #{model_with_blocks_forward.1} parent=5 // pred_fallthru
        _
      %p211 = scmp.le.s32.totalorder 1, %s12
      %p212 = scmp.lt.s32.totalorder %s12, 3
      %p213 = pnand %p211, %p212
      %p214 = pneg %p213
      // Predicated region
      $region33: #{model_with_blocks_forward.1} parent=5 // pred_check
        _
      $region34: #{model_with_blocks_forward.1} parent=5 // pred_check_branch
        %216 = sbr.rel (%p213) target = $region36
      $region35: #{model_with_blocks_forward.1} parent=5 // pred_region
        %s217 = ssub.s32 %s12, 1
        // Predicated region
        $region37: #{model_with_blocks_forward.1} parent=35 // pred_check
          %p218 = pneg %p45
        $region38: #{model_with_blocks_forward.1} parent=35 // pred_check_branch
          %220 = sbr.rel (%p218) target = $region40
        $region39: #{model_with_blocks_forward.1} parent=35 // pred_region
          %221 = dma.done [#allocation3], 32
        $region40: #{model_with_blocks_forward.1} parent=35 // pred_fallthru
          _
        // Predicated region
        $region41: #{model_with_blocks_forward.1} parent=35 // pred_check
          %p222 = pneg %p66
        $region42: #{model_with_blocks_forward.1} parent=35 // pred_check_branch
          %224 = sbr.rel (%p222) target = $region44
        $region43: #{model_with_blocks_forward.1} parent=35 // pred_region
          %225 = dma.done [#allocation5], 16
        $region44: #{model_with_blocks_forward.1} parent=35 // pred_fallthru
          _
        %226 = sfence
        %p227 = pneg %p45
        %p228 = pneg %p42
        %p229 = pneg %p66
        %p230 = pneg %p63
        %s231 = smul.u32 4, %s22
        %p232 = scmp.lt.s32.totalorder %s231, 3
        %s233 = scalar_select %p232, %s231, 3
        %s234 = smul.addr %s233, 8
        %s235 = scalar_lea.vmem %s2, %s234
        %p236 = pneg %p92
        %p237 = pneg %p89
        %s238 = smul.u32 4, %s22
        %p239 = scmp.lt.s32.totalorder %s21, 1
        %s240 = scalar_select %p239, %s21, 1
        %p241 = scmp.lt.s32.totalorder %s238, 3
        %s242 = scalar_select %p241, %s238, 3
        %s243 = smul.addr %s240, 12
        %s244 = sadd.s32 %s242, %s243
        %s245 = smul.addr %s244, 8
        %s246 = scalar_lea.vmem %s3, %s245
        %p247 = pneg %p120
        %p248 = pneg %p117
        %p249 = pneg %p148
        %p250 = pneg %p145
        %s251 = smul.u32 4, %s22
        %p252 = scmp.lt.s32.totalorder %s21, 1
        %s253 = scalar_select %p252, %s21, 1
        %p254 = scmp.lt.s32.totalorder %s251, 3
        %s255 = scalar_select %p254, %s251, 3
        %s256 = smul.addr %s253, 12
        %s257 = sadd.s32 %s255, %s256
        %s258 = smul.addr %s257, 8
        %s259 = scalar_lea.vmem %s4, %s258
        %s260 = smul.u32 4, %s22
        %p261 = scmp.lt.s32.totalorder %s260, 3
        %s262 = scalar_select %p261, %s260, 3
        %s263 = smul.addr %s262, 8
        %s264 = scalar_lea.vmem %s2, %s263
        %s265 = smul.u32 4, %s22
        %s266 = smul.u32 4, %s22
        %p267 = scmp.lt.s32.totalorder %s21, 1
        %s268 = scalar_select %p267, %s21, 1
        %p269 = scmp.lt.s32.totalorder %s266, 3
        %s270 = scalar_select %p269, %s266, 3
        %s271 = smul.addr %s268, 12
        %s272 = sadd.s32 %s270, %s271
        %s273 = smul.addr %s272, 8
        %s274 = scalar_lea.vmem %s3, %s273
        %s275 = smul.u32 4, %s22
        %s276 = smul.u32 4, %s22
        %p277 = scmp.lt.s32.totalorder %s21, 1
        %s278 = scalar_select %p277, %s21, 1
        %p279 = scmp.lt.s32.totalorder %s276, 3
        %s280 = scalar_select %p279, %s276, 3
        %s281 = smul.addr %s278, 12
        %s282 = sadd.s32 %s280, %s281
        %s283 = smul.addr %s282, 8
        %s284 = scalar_lea.vmem %s4, %s283
        %s285 = smul.u32 4, %s22
        %v286 = vld [vmem:[%s264] sm:$0xff]
        %v287 = vld [vmem:[%s264 + $0x8] sm:$0xff]
        %v288 = vld [vmem:[%s264 + $0x10] sm:$0xff]
        %v289 = vld [vmem:[%s264 + $0x18] sm:$0xff]
        %v290 = vld [vmem:[%s274] sm:$0xff]
        %v291 = vld [vmem:[%s274 + $0x8] sm:$0xff]
        %v292 = vld [vmem:[%s274 + $0x10] sm:$0xff]
        %v293 = vld [vmem:[%s274 + $0x18] sm:$0xff]
        %s294 = scalar_lea.vmem %s274, 32
        %v295 = vld [vmem:[%s294] sm:$0xff]
        %v296 = vld [vmem:[%s294 + $0x8] sm:$0xff]
        %v297 = vld [vmem:[%s294 + $0x10] sm:$0xff]
        %v298 = vld [vmem:[%s294 + $0x18] sm:$0xff]
        %s299 = scalar_lea.vmem %s274, 64
        %v300 = vld [vmem:[%s299] sm:$0xff]
        %v301 = vld [vmem:[%s299 + $0x8] sm:$0xff]
        %v302 = vld [vmem:[%s299 + $0x10] sm:$0xff]
        %v303 = vld [vmem:[%s299 + $0x18] sm:$0xff]
        %vm304 = vcmp.le.f32.partialorder %v286, 1.0
        %vm305 = vcmp.le.f32.partialorder %v287, 1.0
        %vm306 = vcmp.le.f32.partialorder %v288, 1.0
        %vm307 = vcmp.le.f32.partialorder %v289, 1.0
        %s308 = sld [smem:[#allocation2]]
        %v309 = vstv %s308
        %v310 = vmul.f32 %v290, %v309
        %v311 = vmul.f32 %v291, %v309
        %v312 = vmul.f32 %v292, %v309
        %v313 = vmul.f32 %v293, %v309
        %s314 = sld [smem:[#allocation2 + $0x1]]
        %v315 = vstv %s314
        %v316 = vmul.f32 %v295, %v315
        %v317 = vmul.f32 %v296, %v315
        %v318 = vmul.f32 %v297, %v315
        %v319 = vmul.f32 %v298, %v315
        %v320 = vadd.f32 %v310, %v316
        %v321 = vadd.f32 %v311, %v317
        %v322 = vadd.f32 %v312, %v318
        %v323 = vadd.f32 %v313, %v319
        %s324 = sld [smem:[#allocation2 + $0x2]]
        %v325 = vstv %s324
        %v326 = vmul.f32 %v300, %v325
        %v327 = vmul.f32 %v301, %v325
        %v328 = vmul.f32 %v302, %v325
        %v329 = vmul.f32 %v303, %v325
        %v330 = vadd.f32 %v320, %v326
        %v331 = vadd.f32 %v321, %v327
        %v332 = vadd.f32 %v322, %v328
        %v333 = vadd.f32 %v323, %v329
        %s334 = sld [smem:[#allocation4]]
        %v335 = vstv %s334
        %v336 = vsel %vm304, %v335, 0.0
        %v337 = vsel %vm305, %v335, 0.0
        %v338 = vsel %vm306, %v335, 0.0
        %v339 = vsel %vm307, %v335, 0.0
        %v340 = vadd.f32 %v330, %v336
        %v341 = vadd.f32 %v331, %v337
        %v342 = vadd.f32 %v332, %v338
        %v343 = vadd.f32 %v333, %v339
        %v344 = vmax.f32 %v340, 0.0
        %v345 = vmax.f32 %v341, 0.0
        %v346 = vmax.f32 %v342, 0.0
        %v347 = vmax.f32 %v343, 0.0
        %348 = vst [vmem:[%s284] sm:$0xff] %v344
        %349 = vst [vmem:[%s284 + $0x8] sm:$0xff] %v345
        %350 = vst [vmem:[%s284 + $0x10] sm:$0xff] %v346
        %351 = vst [vmem:[%s284 + $0x18] sm:$0xff] %v347
        %s352 = sld [smem:[#allocation2 + $0x3]]
        %v353 = vstv %s352
        %v354 = vmul.f32 %v290, %v353
        %v355 = vmul.f32 %v291, %v353
        %v356 = vmul.f32 %v292, %v353
        %v357 = vmul.f32 %v293, %v353
        %s358 = sld [smem:[#allocation2 + $0x4]]
        %v359 = vstv %s358
        %v360 = vmul.f32 %v295, %v359
        %v361 = vmul.f32 %v296, %v359
        %v362 = vmul.f32 %v297, %v359
        %v363 = vmul.f32 %v298, %v359
        %v364 = vadd.f32 %v354, %v360
        %v365 = vadd.f32 %v355, %v361
        %v366 = vadd.f32 %v356, %v362
        %v367 = vadd.f32 %v357, %v363
        %s368 = sld [smem:[#allocation2 + $0x5]]
        %v369 = vstv %s368
        %v370 = vmul.f32 %v300, %v369
        %v371 = vmul.f32 %v301, %v369
        %v372 = vmul.f32 %v302, %v369
        %v373 = vmul.f32 %v303, %v369
        %v374 = vadd.f32 %v364, %v370
        %v375 = vadd.f32 %v365, %v371
        %v376 = vadd.f32 %v366, %v372
        %v377 = vadd.f32 %v367, %v373
        %s378 = sld [smem:[#allocation4 + $0x1]]
        %v379 = vstv %s378
        %v380 = vsel %vm304, %v379, 0.0
        %v381 = vsel %vm305, %v379, 0.0
        %v382 = vsel %vm306, %v379, 0.0
        %v383 = vsel %vm307, %v379, 0.0
        %v384 = vadd.f32 %v374, %v380
        %v385 = vadd.f32 %v375, %v381
        %v386 = vadd.f32 %v376, %v382
        %v387 = vadd.f32 %v377, %v383
        %v388 = vmax.f32 %v384, 0.0
        %v389 = vmax.f32 %v385, 0.0
        %v390 = vmax.f32 %v386, 0.0
        %v391 = vmax.f32 %v387, 0.0
        %s392 = scalar_lea.vmem %s284, 32
        %393 = vst [vmem:[%s392] sm:$0xff] %v388
        %394 = vst [vmem:[%s392 + $0x8] sm:$0xff] %v389
        %395 = vst [vmem:[%s392 + $0x10] sm:$0xff] %v390
        %396 = vst [vmem:[%s392 + $0x18] sm:$0xff] %v391
        %s397 = sld [smem:[#allocation2 + $0x6]]
        %v398 = vstv %s397
        %v399 = vmul.f32 %v290, %v398
        %v400 = vmul.f32 %v291, %v398
        %v401 = vmul.f32 %v292, %v398
        %v402 = vmul.f32 %v293, %v398
        %s403 = sld [smem:[#allocation2 + $0x7]]
        %v404 = vstv %s403
        %v405 = vmul.f32 %v295, %v404
        %v406 = vmul.f32 %v296, %v404
        %v407 = vmul.f32 %v297, %v404
        %v408 = vmul.f32 %v298, %v404
        %v409 = vadd.f32 %v399, %v405
        %v410 = vadd.f32 %v400, %v406
        %v411 = vadd.f32 %v401, %v407
        %v412 = vadd.f32 %v402, %v408
        %s413 = sld [smem:[#allocation2 + $0x8]]
        %v414 = vstv %s413
        %v415 = vmul.f32 %v300, %v414
        %v416 = vmul.f32 %v301, %v414
        %v417 = vmul.f32 %v302, %v414
        %v418 = vmul.f32 %v303, %v414
        %v419 = vadd.f32 %v409, %v415
        %v420 = vadd.f32 %v410, %v416
        %v421 = vadd.f32 %v411, %v417
        %v422 = vadd.f32 %v412, %v418
        %s423 = sld [smem:[#allocation4 + $0x2]]
        %v424 = vstv %s423
        %v425 = vsel %vm304, %v424, 0.0
        %v426 = vsel %vm305, %v424, 0.0
        %v427 = vsel %vm306, %v424, 0.0
        %v428 = vsel %vm307, %v424, 0.0
        %v429 = vadd.f32 %v419, %v425
        %v430 = vadd.f32 %v420, %v426
        %v431 = vadd.f32 %v421, %v427
        %v432 = vadd.f32 %v422, %v428
        %v433 = vmax.f32 %v429, 0.0
        %v434 = vmax.f32 %v430, 0.0
        %v435 = vmax.f32 %v431, 0.0
        %v436 = vmax.f32 %v432, 0.0
        %s437 = scalar_lea.vmem %s284, 64
        %438 = vst [vmem:[%s437] sm:$0xff] %v433
        %439 = vst [vmem:[%s437 + $0x8] sm:$0xff] %v434
        %440 = vst [vmem:[%s437 + $0x10] sm:$0xff] %v435
        %441 = vst [vmem:[%s437 + $0x18] sm:$0xff] %v436
        %v442 = vld [vmem:[%s284] sm:$0xff]
        %v443 = vld [vmem:[%s284 + $0x8] sm:$0xff]
        %v444 = vld [vmem:[%s284 + $0x10] sm:$0xff]
        %v445 = vld [vmem:[%s284 + $0x18] sm:$0xff]
        %v446 = vld [vmem:[%s392] sm:$0xff]
        %v447 = vld [vmem:[%s392 + $0x8] sm:$0xff]
        %v448 = vld [vmem:[%s392 + $0x10] sm:$0xff]
        %v449 = vld [vmem:[%s392 + $0x18] sm:$0xff]
        %v450 = vld [vmem:[%s437] sm:$0xff]
        %v451 = vld [vmem:[%s437 + $0x8] sm:$0xff]
        %v452 = vld [vmem:[%s437 + $0x10] sm:$0xff]
        %v453 = vld [vmem:[%s437 + $0x18] sm:$0xff]
        %vm454 = vcmp.le.f32.partialorder %v286, 2.0
        %vm455 = vcmp.le.f32.partialorder %v287, 2.0
        %vm456 = vcmp.le.f32.partialorder %v288, 2.0
        %vm457 = vcmp.le.f32.partialorder %v289, 2.0
        %s458 = sld [smem:[#allocation2 + $0x9]]
        %v459 = vstv %s458
        %v460 = vmul.f32 %v442, %v459
        %v461 = vmul.f32 %v443, %v459
        %v462 = vmul.f32 %v444, %v459
        %v463 = vmul.f32 %v445, %v459
        %s464 = sld [smem:[#allocation2 + $0xa]]
        %v465 = vstv %s464
        %v466 = vmul.f32 %v446, %v465
        %v467 = vmul.f32 %v447, %v465
        %v468 = vmul.f32 %v448, %v465
        %v469 = vmul.f32 %v449, %v465
        %v470 = vadd.f32 %v460, %v466
        %v471 = vadd.f32 %v461, %v467
        %v472 = vadd.f32 %v462, %v468
        %v473 = vadd.f32 %v463, %v469
        %s474 = sld [smem:[#allocation2 + $0xb]]
        %v475 = vstv %s474
        %v476 = vmul.f32 %v450, %v475
        %v477 = vmul.f32 %v451, %v475
        %v478 = vmul.f32 %v452, %v475
        %v479 = vmul.f32 %v453, %v475
        %v480 = vadd.f32 %v470, %v476
        %v481 = vadd.f32 %v471, %v477
        %v482 = vadd.f32 %v472, %v478
        %v483 = vadd.f32 %v473, %v479
        %s484 = sld [smem:[#allocation4 + $0x3]]
        %v485 = vstv %s484
        %v486 = vsel %vm454, %v485, 0.0
        %v487 = vsel %vm455, %v485, 0.0
        %v488 = vsel %vm456, %v485, 0.0
        %v489 = vsel %vm457, %v485, 0.0
        %v490 = vadd.f32 %v480, %v486
        %v491 = vadd.f32 %v481, %v487
        %v492 = vadd.f32 %v482, %v488
        %v493 = vadd.f32 %v483, %v489
        %494 = vst [vmem:[%s284] sm:$0xff] %v490
        %495 = vst [vmem:[%s284 + $0x8] sm:$0xff] %v491
        %496 = vst [vmem:[%s284 + $0x10] sm:$0xff] %v492
        %497 = vst [vmem:[%s284 + $0x18] sm:$0xff] %v493
        %s498 = sld [smem:[#allocation2 + $0xc]]
        %v499 = vstv %s498
        %v500 = vmul.f32 %v442, %v499
        %v501 = vmul.f32 %v443, %v499
        %v502 = vmul.f32 %v444, %v499
        %v503 = vmul.f32 %v445, %v499
        %s504 = sld [smem:[#allocation2 + $0xd]]
        %v505 = vstv %s504
        %v506 = vmul.f32 %v446, %v505
        %v507 = vmul.f32 %v447, %v505
        %v508 = vmul.f32 %v448, %v505
        %v509 = vmul.f32 %v449, %v505
        %v510 = vadd.f32 %v500, %v506
        %v511 = vadd.f32 %v501, %v507
        %v512 = vadd.f32 %v502, %v508
        %v513 = vadd.f32 %v503, %v509
        %s514 = sld [smem:[#allocation2 + $0xe]]
        %v515 = vstv %s514
        %v516 = vmul.f32 %v450, %v515
        %v517 = vmul.f32 %v451, %v515
        %v518 = vmul.f32 %v452, %v515
        %v519 = vmul.f32 %v453, %v515
        %v520 = vadd.f32 %v510, %v516
        %v521 = vadd.f32 %v511, %v517
        %v522 = vadd.f32 %v512, %v518
        %v523 = vadd.f32 %v513, %v519
        %s524 = sld [smem:[#allocation4 + $0x4]]
        %v525 = vstv %s524
        %v526 = vsel %vm454, %v525, 0.0
        %v527 = vsel %vm455, %v525, 0.0
        %v528 = vsel %vm456, %v525, 0.0
        %v529 = vsel %vm457, %v525, 0.0
        %v530 = vadd.f32 %v520, %v526
        %v531 = vadd.f32 %v521, %v527
        %v532 = vadd.f32 %v522, %v528
        %v533 = vadd.f32 %v523, %v529
        %534 = vst [vmem:[%s392] sm:$0xff] %v530
        %535 = vst [vmem:[%s392 + $0x8] sm:$0xff] %v531
        %536 = vst [vmem:[%s392 + $0x10] sm:$0xff] %v532
        %537 = vst [vmem:[%s392 + $0x18] sm:$0xff] %v533
        %s538 = sld [smem:[#allocation2 + $0xf]]
        %v539 = vstv %s538
        %v540 = vmul.f32 %v442, %v539
        %v541 = vmul.f32 %v443, %v539
        %v542 = vmul.f32 %v444, %v539
        %v543 = vmul.f32 %v445, %v539
        %s544 = sld [smem:[#allocation2 + $0x10]]
        %v545 = vstv %s544
        %v546 = vmul.f32 %v446, %v545
        %v547 = vmul.f32 %v447, %v545
        %v548 = vmul.f32 %v448, %v545
        %v549 = vmul.f32 %v449, %v545
        %v550 = vadd.f32 %v540, %v546
        %v551 = vadd.f32 %v541, %v547
        %v552 = vadd.f32 %v542, %v548
        %v553 = vadd.f32 %v543, %v549
        %s554 = sld [smem:[#allocation2 + $0x11]]
        %v555 = vstv %s554
        %v556 = vmul.f32 %v450, %v555
        %v557 = vmul.f32 %v451, %v555
        %v558 = vmul.f32 %v452, %v555
        %v559 = vmul.f32 %v453, %v555
        %v560 = vadd.f32 %v550, %v556
        %v561 = vadd.f32 %v551, %v557
        %v562 = vadd.f32 %v552, %v558
        %v563 = vadd.f32 %v553, %v559
        %s564 = sld [smem:[#allocation4 + $0x5]]
        %v565 = vstv %s564
        %v566 = vsel %vm454, %v565, 0.0
        %v567 = vsel %vm455, %v565, 0.0
        %v568 = vsel %vm456, %v565, 0.0
        %v569 = vsel %vm457, %v565, 0.0
        %v570 = vadd.f32 %v560, %v566
        %v571 = vadd.f32 %v561, %v567
        %v572 = vadd.f32 %v562, %v568
        %v573 = vadd.f32 %v563, %v569
        %574 = vst [vmem:[%s437] sm:$0xff] %v570
        %575 = vst [vmem:[%s437 + $0x8] sm:$0xff] %v571
        %576 = vst [vmem:[%s437 + $0x10] sm:$0xff] %v572
        %577 = vst [vmem:[%s437 + $0x18] sm:$0xff] %v573
        %v578 = vld [vmem:[%s284] sm:$0xff]
        %v579 = vld [vmem:[%s284 + $0x8] sm:$0xff]
        %v580 = vld [vmem:[%s284 + $0x10] sm:$0xff]
        %v581 = vld [vmem:[%s284 + $0x18] sm:$0xff]
        %v582 = vld [vmem:[%s392] sm:$0xff]
        %v583 = vld [vmem:[%s392 + $0x8] sm:$0xff]
        %v584 = vld [vmem:[%s392 + $0x10] sm:$0xff]
        %v585 = vld [vmem:[%s392 + $0x18] sm:$0xff]
        %v586 = vld [vmem:[%s437] sm:$0xff]
        %v587 = vld [vmem:[%s437 + $0x8] sm:$0xff]
        %v588 = vld [vmem:[%s437 + $0x10] sm:$0xff]
        %v589 = vld [vmem:[%s437 + $0x18] sm:$0xff]
        %vm590 = vcmp.le.f32.partialorder %v286, 3.0
        %vm591 = vcmp.le.f32.partialorder %v287, 3.0
        %vm592 = vcmp.le.f32.partialorder %v288, 3.0
        %vm593 = vcmp.le.f32.partialorder %v289, 3.0
        %s594 = sld [smem:[#allocation2 + $0x12]]
        %v595 = vstv %s594
        %v596 = vmul.f32 %v578, %v595
        %v597 = vmul.f32 %v579, %v595
        %v598 = vmul.f32 %v580, %v595
        %v599 = vmul.f32 %v581, %v595
        %s600 = sld [smem:[#allocation2 + $0x13]]
        %v601 = vstv %s600
        %v602 = vmul.f32 %v582, %v601
        %v603 = vmul.f32 %v583, %v601
        %v604 = vmul.f32 %v584, %v601
        %v605 = vmul.f32 %v585, %v601
        %v606 = vadd.f32 %v596, %v602
        %v607 = vadd.f32 %v597, %v603
        %v608 = vadd.f32 %v598, %v604
        %v609 = vadd.f32 %v599, %v605
        %s610 = sld [smem:[#allocation2 + $0x14]]
        %v611 = vstv %s610
        %v612 = vmul.f32 %v586, %v611
        %v613 = vmul.f32 %v587, %v611
        %v614 = vmul.f32 %v588, %v611
        %v615 = vmul.f32 %v589, %v611
        %v616 = vadd.f32 %v606, %v612
        %v617 = vadd.f32 %v607, %v613
        %v618 = vadd.f32 %v608, %v614
        %v619 = vadd.f32 %v609, %v615
        %s620 = sld [smem:[#allocation4 + $0x6]]
        %v621 = vstv %s620
        %v622 = vsel %vm590, %v621, 0.0
        %v623 = vsel %vm591, %v621, 0.0
        %v624 = vsel %vm592, %v621, 0.0
        %v625 = vsel %vm593, %v621, 0.0
        %v626 = vadd.f32 %v616, %v622
        %v627 = vadd.f32 %v617, %v623
        %v628 = vadd.f32 %v618, %v624
        %v629 = vadd.f32 %v619, %v625
        %v630 = vmax.f32 %v626, 0.0
        %v631 = vmax.f32 %v627, 0.0
        %v632 = vmax.f32 %v628, 0.0
        %v633 = vmax.f32 %v629, 0.0
        %634 = vst [vmem:[%s284] sm:$0xff] %v630
        %635 = vst [vmem:[%s284 + $0x8] sm:$0xff] %v631
        %636 = vst [vmem:[%s284 + $0x10] sm:$0xff] %v632
        %637 = vst [vmem:[%s284 + $0x18] sm:$0xff] %v633
        %s638 = sld [smem:[#allocation2 + $0x15]]
        %v639 = vstv %s638
        %v640 = vmul.f32 %v578, %v639
        %v641 = vmul.f32 %v579, %v639
        %v642 = vmul.f32 %v580, %v639
        %v643 = vmul.f32 %v581, %v639
        %s644 = sld [smem:[#allocation2 + $0x16]]
        %v645 = vstv %s644
        %v646 = vmul.f32 %v582, %v645
        %v647 = vmul.f32 %v583, %v645
        %v648 = vmul.f32 %v584, %v645
        %v649 = vmul.f32 %v585, %v645
        %v650 = vadd.f32 %v640, %v646
        %v651 = vadd.f32 %v641, %v647
        %v652 = vadd.f32 %v642, %v648
        %v653 = vadd.f32 %v643, %v649
        %s654 = sld [smem:[#allocation2 + $0x17]]
        %v655 = vstv %s654
        %v656 = vmul.f32 %v586, %v655
        %v657 = vmul.f32 %v587, %v655
        %v658 = vmul.f32 %v588, %v655
        %v659 = vmul.f32 %v589, %v655
        %v660 = vadd.f32 %v650, %v656
        %v661 = vadd.f32 %v651, %v657
        %v662 = vadd.f32 %v652, %v658
        %v663 = vadd.f32 %v653, %v659
        %s664 = sld [smem:[#allocation4 + $0x7]]
        %v665 = vstv %s664
        %v666 = vsel %vm590, %v665, 0.0
        %v667 = vsel %vm591, %v665, 0.0
        %v668 = vsel %vm592, %v665, 0.0
        %v669 = vsel %vm593, %v665, 0.0
        %v670 = vadd.f32 %v660, %v666
        %v671 = vadd.f32 %v661, %v667
        %v672 = vadd.f32 %v662, %v668
        %v673 = vadd.f32 %v663, %v669
        %v674 = vmax.f32 %v670, 0.0
        %v675 = vmax.f32 %v671, 0.0
        %v676 = vmax.f32 %v672, 0.0
        %v677 = vmax.f32 %v673, 0.0
        %678 = vst [vmem:[%s392] sm:$0xff] %v674
        %679 = vst [vmem:[%s392 + $0x8] sm:$0xff] %v675
        %680 = vst [vmem:[%s392 + $0x10] sm:$0xff] %v676
        %681 = vst [vmem:[%s392 + $0x18] sm:$0xff] %v677
        %s682 = sld [smem:[#allocation2 + $0x18]]
        %v683 = vstv %s682
        %v684 = vmul.f32 %v578, %v683
        %v685 = vmul.f32 %v579, %v683
        %v686 = vmul.f32 %v580, %v683
        %v687 = vmul.f32 %v581, %v683
        %s688 = sld [smem:[#allocation2 + $0x19]]
        %v689 = vstv %s688
        %v690 = vmul.f32 %v582, %v689
        %v691 = vmul.f32 %v583, %v689
        %v692 = vmul.f32 %v584, %v689
        %v693 = vmul.f32 %v585, %v689
        %v694 = vadd.f32 %v684, %v690
        %v695 = vadd.f32 %v685, %v691
        %v696 = vadd.f32 %v686, %v692
        %v697 = vadd.f32 %v687, %v693
        %s698 = sld [smem:[#allocation2 + $0x1a]]
        %v699 = vstv %s698
        %v700 = vmul.f32 %v586, %v699
        %v701 = vmul.f32 %v587, %v699
        %v702 = vmul.f32 %v588, %v699
        %v703 = vmul.f32 %v589, %v699
        %v704 = vadd.f32 %v694, %v700
        %v705 = vadd.f32 %v695, %v701
        %v706 = vadd.f32 %v696, %v702
        %v707 = vadd.f32 %v697, %v703
        %s708 = sld [smem:[#allocation4 + $0x8]]
        %v709 = vstv %s708
        %v710 = vsel %vm590, %v709, 0.0
        %v711 = vsel %vm591, %v709, 0.0
        %v712 = vsel %vm592, %v709, 0.0
        %v713 = vsel %vm593, %v709, 0.0
        %v714 = vadd.f32 %v704, %v710
        %v715 = vadd.f32 %v705, %v711
        %v716 = vadd.f32 %v706, %v712
        %v717 = vadd.f32 %v707, %v713
        %v718 = vmax.f32 %v714, 0.0
        %v719 = vmax.f32 %v715, 0.0
        %v720 = vmax.f32 %v716, 0.0
        %v721 = vmax.f32 %v717, 0.0
        %722 = vst [vmem:[%s437] sm:$0xff] %v718
        %723 = vst [vmem:[%s437 + $0x8] sm:$0xff] %v719
        %724 = vst [vmem:[%s437 + $0x10] sm:$0xff] %v720
        %725 = vst [vmem:[%s437 + $0x18] sm:$0xff] %v721
        %v726 = vld [vmem:[%s284] sm:$0xff]
        %v727 = vld [vmem:[%s284 + $0x8] sm:$0xff]
        %v728 = vld [vmem:[%s284 + $0x10] sm:$0xff]
        %v729 = vld [vmem:[%s284 + $0x18] sm:$0xff]
        %v730 = vld [vmem:[%s392] sm:$0xff]
        %v731 = vld [vmem:[%s392 + $0x8] sm:$0xff]
        %v732 = vld [vmem:[%s392 + $0x10] sm:$0xff]
        %v733 = vld [vmem:[%s392 + $0x18] sm:$0xff]
        %v734 = vld [vmem:[%s437] sm:$0xff]
        %v735 = vld [vmem:[%s437 + $0x8] sm:$0xff]
        %v736 = vld [vmem:[%s437 + $0x10] sm:$0xff]
        %v737 = vld [vmem:[%s437 + $0x18] sm:$0xff]
        %vm738 = vcmp.le.f32.partialorder %v286, 4.0
        %vm739 = vcmp.le.f32.partialorder %v287, 4.0
        %vm740 = vcmp.le.f32.partialorder %v288, 4.0
        %vm741 = vcmp.le.f32.partialorder %v289, 4.0
        %s742 = sld [smem:[#allocation2 + $0x1b]]
        %v743 = vstv %s742
        %v744 = vmul.f32 %v726, %v743
        %v745 = vmul.f32 %v727, %v743
        %v746 = vmul.f32 %v728, %v743
        %v747 = vmul.f32 %v729, %v743
        %s748 = sld [smem:[#allocation2 + $0x1c]]
        %v749 = vstv %s748
        %v750 = vmul.f32 %v730, %v749
        %v751 = vmul.f32 %v731, %v749
        %v752 = vmul.f32 %v732, %v749
        %v753 = vmul.f32 %v733, %v749
        %v754 = vadd.f32 %v744, %v750
        %v755 = vadd.f32 %v745, %v751
        %v756 = vadd.f32 %v746, %v752
        %v757 = vadd.f32 %v747, %v753
        %s758 = sld [smem:[#allocation2 + $0x1d]]
        %v759 = vstv %s758
        %v760 = vmul.f32 %v734, %v759
        %v761 = vmul.f32 %v735, %v759
        %v762 = vmul.f32 %v736, %v759
        %v763 = vmul.f32 %v737, %v759
        %v764 = vadd.f32 %v754, %v760
        %v765 = vadd.f32 %v755, %v761
        %v766 = vadd.f32 %v756, %v762
        %v767 = vadd.f32 %v757, %v763
        %s768 = sld [smem:[#allocation4 + $0x9]]
        %v769 = vstv %s768
        %v770 = vsel %vm738, %v769, 0.0
        %v771 = vsel %vm739, %v769, 0.0
        %v772 = vsel %vm740, %v769, 0.0
        %v773 = vsel %vm741, %v769, 0.0
        %v774 = vadd.f32 %v764, %v770
        %v775 = vadd.f32 %v765, %v771
        %v776 = vadd.f32 %v766, %v772
        %v777 = vadd.f32 %v767, %v773
        %778 = vst [vmem:[%s284] sm:$0xff] %v774
        %779 = vst [vmem:[%s284 + $0x8] sm:$0xff] %v775
        %780 = vst [vmem:[%s284 + $0x10] sm:$0xff] %v776
        %781 = vst [vmem:[%s284 + $0x18] sm:$0xff] %v777
        %s782 = sld [smem:[#allocation2 + $0x1e]]
        %v783 = vstv %s782
        %v784 = vmul.f32 %v726, %v783
        %v785 = vmul.f32 %v727, %v783
        %v786 = vmul.f32 %v728, %v783
        %v787 = vmul.f32 %v729, %v783
        %s788 = sld [smem:[#allocation2 + $0x1f]]
        %v789 = vstv %s788
        %v790 = vmul.f32 %v730, %v789
        %v791 = vmul.f32 %v731, %v789
        %v792 = vmul.f32 %v732, %v789
        %v793 = vmul.f32 %v733, %v789
        %v794 = vadd.f32 %v784, %v790
        %v795 = vadd.f32 %v785, %v791
        %v796 = vadd.f32 %v786, %v792
        %v797 = vadd.f32 %v787, %v793
        %s798 = sld [smem:[#allocation2 + $0x20]]
        %v799 = vstv %s798
        %v800 = vmul.f32 %v734, %v799
        %v801 = vmul.f32 %v735, %v799
        %v802 = vmul.f32 %v736, %v799
        %v803 = vmul.f32 %v737, %v799
        %v804 = vadd.f32 %v794, %v800
        %v805 = vadd.f32 %v795, %v801
        %v806 = vadd.f32 %v796, %v802
        %v807 = vadd.f32 %v797, %v803
        %s808 = sld [smem:[#allocation4 + $0xa]]
        %v809 = vstv %s808
        %v810 = vsel %vm738, %v809, 0.0
        %v811 = vsel %vm739, %v809, 0.0
        %v812 = vsel %vm740, %v809, 0.0
        %v813 = vsel %vm741, %v809, 0.0
        %v814 = vadd.f32 %v804, %v810
        %v815 = vadd.f32 %v805, %v811
        %v816 = vadd.f32 %v806, %v812
        %v817 = vadd.f32 %v807, %v813
        %818 = vst [vmem:[%s392] sm:$0xff] %v814
        %819 = vst [vmem:[%s392 + $0x8] sm:$0xff] %v815
        %820 = vst [vmem:[%s392 + $0x10] sm:$0xff] %v816
        %821 = vst [vmem:[%s392 + $0x18] sm:$0xff] %v817
        %s822 = sld [smem:[#allocation2 + $0x21]]
        %v823 = vstv %s822
        %v824 = vmul.f32 %v726, %v823
        %v825 = vmul.f32 %v727, %v823
        %v826 = vmul.f32 %v728, %v823
        %v827 = vmul.f32 %v729, %v823
        %s828 = sld [smem:[#allocation2 + $0x22]]
        %v829 = vstv %s828
        %v830 = vmul.f32 %v730, %v829
        %v831 = vmul.f32 %v731, %v829
        %v832 = vmul.f32 %v732, %v829
        %v833 = vmul.f32 %v733, %v829
        %v834 = vadd.f32 %v824, %v830
        %v835 = vadd.f32 %v825, %v831
        %v836 = vadd.f32 %v826, %v832
        %v837 = vadd.f32 %v827, %v833
        %s838 = sld [smem:[#allocation2 + $0x23]]
        %v839 = vstv %s838
        %v840 = vmul.f32 %v734, %v839
        %v841 = vmul.f32 %v735, %v839
        %v842 = vmul.f32 %v736, %v839
        %v843 = vmul.f32 %v737, %v839
        %v844 = vadd.f32 %v834, %v840
        %v845 = vadd.f32 %v835, %v841
        %v846 = vadd.f32 %v836, %v842
        %v847 = vadd.f32 %v837, %v843
        %s848 = sld [smem:[#allocation4 + $0xb]]
        %v849 = vstv %s848
        %v850 = vsel %vm738, %v849, 0.0
        %v851 = vsel %vm739, %v849, 0.0
        %v852 = vsel %vm740, %v849, 0.0
        %v853 = vsel %vm741, %v849, 0.0
        %v854 = vadd.f32 %v844, %v850
        %v855 = vadd.f32 %v845, %v851
        %v856 = vadd.f32 %v846, %v852
        %v857 = vadd.f32 %v847, %v853
        %858 = vst [vmem:[%s437] sm:$0xff] %v854
        %859 = vst [vmem:[%s437 + $0x8] sm:$0xff] %v855
        %860 = vst [vmem:[%s437 + $0x10] sm:$0xff] %v856
        %861 = vst [vmem:[%s437 + $0x18] sm:$0xff] %v857
        %v862 = vld [vmem:[%s284] sm:$0xff]
        %v863 = vld [vmem:[%s284 + $0x8] sm:$0xff]
        %v864 = vld [vmem:[%s284 + $0x10] sm:$0xff]
        %v865 = vld [vmem:[%s284 + $0x18] sm:$0xff]
        %v866 = vld [vmem:[%s392] sm:$0xff]
        %v867 = vld [vmem:[%s392 + $0x8] sm:$0xff]
        %v868 = vld [vmem:[%s392 + $0x10] sm:$0xff]
        %v869 = vld [vmem:[%s392 + $0x18] sm:$0xff]
        %v870 = vld [vmem:[%s437] sm:$0xff]
        %v871 = vld [vmem:[%s437 + $0x8] sm:$0xff]
        %v872 = vld [vmem:[%s437 + $0x10] sm:$0xff]
        %v873 = vld [vmem:[%s437 + $0x18] sm:$0xff]
        %vm874 = vcmp.le.f32.partialorder %v286, 5.0
        %vm875 = vcmp.le.f32.partialorder %v287, 5.0
        %vm876 = vcmp.le.f32.partialorder %v288, 5.0
        %vm877 = vcmp.le.f32.partialorder %v289, 5.0
        %s878 = sld [smem:[#allocation2 + $0x24]]
        %v879 = vstv %s878
        %v880 = vmul.f32 %v862, %v879
        %v881 = vmul.f32 %v863, %v879
        %v882 = vmul.f32 %v864, %v879
        %v883 = vmul.f32 %v865, %v879
        %s884 = sld [smem:[#allocation2 + $0x25]]
        %v885 = vstv %s884
        %v886 = vmul.f32 %v866, %v885
        %v887 = vmul.f32 %v867, %v885
        %v888 = vmul.f32 %v868, %v885
        %v889 = vmul.f32 %v869, %v885
        %v890 = vadd.f32 %v880, %v886
        %v891 = vadd.f32 %v881, %v887
        %v892 = vadd.f32 %v882, %v888
        %v893 = vadd.f32 %v883, %v889
        %s894 = sld [smem:[#allocation2 + $0x26]]
        %v895 = vstv %s894
        %v896 = vmul.f32 %v870, %v895
        %v897 = vmul.f32 %v871, %v895
        %v898 = vmul.f32 %v872, %v895
        %v899 = vmul.f32 %v873, %v895
        %v900 = vadd.f32 %v890, %v896
        %v901 = vadd.f32 %v891, %v897
        %v902 = vadd.f32 %v892, %v898
        %v903 = vadd.f32 %v893, %v899
        %s904 = sld [smem:[#allocation4 + $0xc]]
        %v905 = vstv %s904
        %v906 = vsel %vm874, %v905, 0.0
        %v907 = vsel %vm875, %v905, 0.0
        %v908 = vsel %vm876, %v905, 0.0
        %v909 = vsel %vm877, %v905, 0.0
        %v910 = vadd.f32 %v900, %v906
        %v911 = vadd.f32 %v901, %v907
        %v912 = vadd.f32 %v902, %v908
        %v913 = vadd.f32 %v903, %v909
        %v914 = vmax.f32 %v910, 0.0
        %v915 = vmax.f32 %v911, 0.0
        %v916 = vmax.f32 %v912, 0.0
        %v917 = vmax.f32 %v913, 0.0
        %918 = vst [vmem:[%s284] sm:$0xff] %v914
        %919 = vst [vmem:[%s284 + $0x8] sm:$0xff] %v915
        %920 = vst [vmem:[%s284 + $0x10] sm:$0xff] %v916
        %921 = vst [vmem:[%s284 + $0x18] sm:$0xff] %v917
        %s922 = sld [smem:[#allocation2 + $0x27]]
        %v923 = vstv %s922
        %v924 = vmul.f32 %v862, %v923
        %v925 = vmul.f32 %v863, %v923
        %v926 = vmul.f32 %v864, %v923
        %v927 = vmul.f32 %v865, %v923
        %s928 = sld [smem:[#allocation2 + $0x28]]
        %v929 = vstv %s928
        %v930 = vmul.f32 %v866, %v929
        %v931 = vmul.f32 %v867, %v929
        %v932 = vmul.f32 %v868, %v929
        %v933 = vmul.f32 %v869, %v929
        %v934 = vadd.f32 %v924, %v930
        %v935 = vadd.f32 %v925, %v931
        %v936 = vadd.f32 %v926, %v932
        %v937 = vadd.f32 %v927, %v933
        %s938 = sld [smem:[#allocation2 + $0x29]]
        %v939 = vstv %s938
        %v940 = vmul.f32 %v870, %v939
        %v941 = vmul.f32 %v871, %v939
        %v942 = vmul.f32 %v872, %v939
        %v943 = vmul.f32 %v873, %v939
        %v944 = vadd.f32 %v934, %v940
        %v945 = vadd.f32 %v935, %v941
        %v946 = vadd.f32 %v936, %v942
        %v947 = vadd.f32 %v937, %v943
        %s948 = sld [smem:[#allocation4 + $0xd]]
        %v949 = vstv %s948
        %v950 = vsel %vm874, %v949, 0.0
        %v951 = vsel %vm875, %v949, 0.0
        %v952 = vsel %vm876, %v949, 0.0
        %v953 = vsel %vm877, %v949, 0.0
        %v954 = vadd.f32 %v944, %v950
        %v955 = vadd.f32 %v945, %v951
        %v956 = vadd.f32 %v946, %v952
        %v957 = vadd.f32 %v947, %v953
        %v958 = vmax.f32 %v954, 0.0
        %v959 = vmax.f32 %v955, 0.0
        %v960 = vmax.f32 %v956, 0.0
        %v961 = vmax.f32 %v957, 0.0
        %962 = vst [vmem:[%s392] sm:$0xff] %v958
        %963 = vst [vmem:[%s392 + $0x8] sm:$0xff] %v959
        %964 = vst [vmem:[%s392 + $0x10] sm:$0xff] %v960
        %965 = vst [vmem:[%s392 + $0x18] sm:$0xff] %v961
        %s966 = sld [smem:[#allocation2 + $0x2a]]
        %v967 = vstv %s966
        %v968 = vmul.f32 %v862, %v967
        %v969 = vmul.f32 %v863, %v967
        %v970 = vmul.f32 %v864, %v967
        %v971 = vmul.f32 %v865, %v967
        %s972 = sld [smem:[#allocation2 + $0x2b]]
        %v973 = vstv %s972
        %v974 = vmul.f32 %v866, %v973
        %v975 = vmul.f32 %v867, %v973
        %v976 = vmul.f32 %v868, %v973
        %v977 = vmul.f32 %v869, %v973
        %v978 = vadd.f32 %v968, %v974
        %v979 = vadd.f32 %v969, %v975
        %v980 = vadd.f32 %v970, %v976
        %v981 = vadd.f32 %v971, %v977
        %s982 = sld [smem:[#allocation2 + $0x2c]]
        %v983 = vstv %s982
        %v984 = vmul.f32 %v870, %v983
        %v985 = vmul.f32 %v871, %v983
        %v986 = vmul.f32 %v872, %v983
        %v987 = vmul.f32 %v873, %v983
        %v988 = vadd.f32 %v978, %v984
        %v989 = vadd.f32 %v979, %v985
        %v990 = vadd.f32 %v980, %v986
        %v991 = vadd.f32 %v981, %v987
        %s992 = sld [smem:[#allocation4 + $0xe]]
        %v993 = vstv %s992
        %v994 = vsel %vm874, %v993, 0.0
        %v995 = vsel %vm875, %v993, 0.0
        %v996 = vsel %vm876, %v993, 0.0
        %v997 = vsel %vm877, %v993, 0.0
        %v998 = vadd.f32 %v988, %v994
        %v999 = vadd.f32 %v989, %v995
        %v1000 = vadd.f32 %v990, %v996
        %v1001 = vadd.f32 %v991, %v997
        %v1002 = vmax.f32 %v998, 0.0
        %v1003 = vmax.f32 %v999, 0.0
        %v1004 = vmax.f32 %v1000, 0.0
        %v1005 = vmax.f32 %v1001, 0.0
        %1006 = vst [vmem:[%s437] sm:$0xff] %v1002
        %1007 = vst [vmem:[%s437 + $0x8] sm:$0xff] %v1003
        %1008 = vst [vmem:[%s437 + $0x10] sm:$0xff] %v1004
        %1009 = vst [vmem:[%s437 + $0x18] sm:$0xff] %v1005
        %v1010 = vld [vmem:[%s284] sm:$0xff]
        %v1011 = vld [vmem:[%s284 + $0x8] sm:$0xff]
        %v1012 = vld [vmem:[%s284 + $0x10] sm:$0xff]
        %v1013 = vld [vmem:[%s284 + $0x18] sm:$0xff]
        %v1014 = vld [vmem:[%s392] sm:$0xff]
        %v1015 = vld [vmem:[%s392 + $0x8] sm:$0xff]
        %v1016 = vld [vmem:[%s392 + $0x10] sm:$0xff]
        %v1017 = vld [vmem:[%s392 + $0x18] sm:$0xff]
        %v1018 = vld [vmem:[%s437] sm:$0xff]
        %v1019 = vld [vmem:[%s437 + $0x8] sm:$0xff]
        %v1020 = vld [vmem:[%s437 + $0x10] sm:$0xff]
        %v1021 = vld [vmem:[%s437 + $0x18] sm:$0xff]
        %vm1022 = vcmp.le.f32.partialorder %v286, 6.0
        %vm1023 = vcmp.le.f32.partialorder %v287, 6.0
        %vm1024 = vcmp.le.f32.partialorder %v288, 6.0
        %vm1025 = vcmp.le.f32.partialorder %v289, 6.0
        %s1026 = sld [smem:[#allocation2 + $0x2d]]
        %v1027 = vstv %s1026
        %v1028 = vmul.f32 %v1010, %v1027
        %v1029 = vmul.f32 %v1011, %v1027
        %v1030 = vmul.f32 %v1012, %v1027
        %v1031 = vmul.f32 %v1013, %v1027
        %s1032 = sld [smem:[#allocation2 + $0x2e]]
        %v1033 = vstv %s1032
        %v1034 = vmul.f32 %v1014, %v1033
        %v1035 = vmul.f32 %v1015, %v1033
        %v1036 = vmul.f32 %v1016, %v1033
        %v1037 = vmul.f32 %v1017, %v1033
        %v1038 = vadd.f32 %v1028, %v1034
        %v1039 = vadd.f32 %v1029, %v1035
        %v1040 = vadd.f32 %v1030, %v1036
        %v1041 = vadd.f32 %v1031, %v1037
        %s1042 = sld [smem:[#allocation2 + $0x2f]]
        %v1043 = vstv %s1042
        %v1044 = vmul.f32 %v1018, %v1043
        %v1045 = vmul.f32 %v1019, %v1043
        %v1046 = vmul.f32 %v1020, %v1043
        %v1047 = vmul.f32 %v1021, %v1043
        %v1048 = vadd.f32 %v1038, %v1044
        %v1049 = vadd.f32 %v1039, %v1045
        %v1050 = vadd.f32 %v1040, %v1046
        %v1051 = vadd.f32 %v1041, %v1047
        %s1052 = sld [smem:[#allocation4 + $0xf]]
        %v1053 = vstv %s1052
        %v1054 = vsel %vm1022, %v1053, 0.0
        %v1055 = vsel %vm1023, %v1053, 0.0
        %v1056 = vsel %vm1024, %v1053, 0.0
        %v1057 = vsel %vm1025, %v1053, 0.0
        %v1058 = vadd.f32 %v1048, %v1054
        %v1059 = vadd.f32 %v1049, %v1055
        %v1060 = vadd.f32 %v1050, %v1056
        %v1061 = vadd.f32 %v1051, %v1057
        %1062 = vst [vmem:[%s284] sm:$0xff] %v1058
        %1063 = vst [vmem:[%s284 + $0x8] sm:$0xff] %v1059
        %1064 = vst [vmem:[%s284 + $0x10] sm:$0xff] %v1060
        %1065 = vst [vmem:[%s284 + $0x18] sm:$0xff] %v1061
        %s1066 = sld [smem:[#allocation2 + $0x30]]
        %v1067 = vstv %s1066
        %v1068 = vmul.f32 %v1010, %v1067
        %v1069 = vmul.f32 %v1011, %v1067
        %v1070 = vmul.f32 %v1012, %v1067
        %v1071 = vmul.f32 %v1013, %v1067
        %s1072 = sld [smem:[#allocation2 + $0x31]]
        %v1073 = vstv %s1072
        %v1074 = vmul.f32 %v1014, %v1073
        %v1075 = vmul.f32 %v1015, %v1073
        %v1076 = vmul.f32 %v1016, %v1073
        %v1077 = vmul.f32 %v1017, %v1073
        %v1078 = vadd.f32 %v1068, %v1074
        %v1079 = vadd.f32 %v1069, %v1075
        %v1080 = vadd.f32 %v1070, %v1076
        %v1081 = vadd.f32 %v1071, %v1077
        %s1082 = sld [smem:[#allocation2 + $0x32]]
        %v1083 = vstv %s1082
        %v1084 = vmul.f32 %v1018, %v1083
        %v1085 = vmul.f32 %v1019, %v1083
        %v1086 = vmul.f32 %v1020, %v1083
        %v1087 = vmul.f32 %v1021, %v1083
        %v1088 = vadd.f32 %v1078, %v1084
        %v1089 = vadd.f32 %v1079, %v1085
        %v1090 = vadd.f32 %v1080, %v1086
        %v1091 = vadd.f32 %v1081, %v1087
        %s1092 = sld [smem:[#allocation4 + $0x10]]
        %v1093 = vstv %s1092
        %v1094 = vsel %vm1022, %v1093, 0.0
        %v1095 = vsel %vm1023, %v1093, 0.0
        %v1096 = vsel %vm1024, %v1093, 0.0
        %v1097 = vsel %vm1025, %v1093, 0.0
        %v1098 = vadd.f32 %v1088, %v1094
        %v1099 = vadd.f32 %v1089, %v1095
        %v1100 = vadd.f32 %v1090, %v1096
        %v1101 = vadd.f32 %v1091, %v1097
        %1102 = vst [vmem:[%s392] sm:$0xff] %v1098
        %1103 = vst [vmem:[%s392 + $0x8] sm:$0xff] %v1099
        %1104 = vst [vmem:[%s392 + $0x10] sm:$0xff] %v1100
        %1105 = vst [vmem:[%s392 + $0x18] sm:$0xff] %v1101
        %s1106 = sld [smem:[#allocation2 + $0x33]]
        %v1107 = vstv %s1106
        %v1108 = vmul.f32 %v1010, %v1107
        %v1109 = vmul.f32 %v1011, %v1107
        %v1110 = vmul.f32 %v1012, %v1107
        %v1111 = vmul.f32 %v1013, %v1107
        %s1112 = sld [smem:[#allocation2 + $0x34]]
        %v1113 = vstv %s1112
        %v1114 = vmul.f32 %v1014, %v1113
        %v1115 = vmul.f32 %v1015, %v1113
        %v1116 = vmul.f32 %v1016, %v1113
        %v1117 = vmul.f32 %v1017, %v1113
        %v1118 = vadd.f32 %v1108, %v1114
        %v1119 = vadd.f32 %v1109, %v1115
        %v1120 = vadd.f32 %v1110, %v1116
        %v1121 = vadd.f32 %v1111, %v1117
        %s1122 = sld [smem:[#allocation2 + $0x35]]
        %v1123 = vstv %s1122
        %v1124 = vmul.f32 %v1018, %v1123
        %v1125 = vmul.f32 %v1019, %v1123
        %v1126 = vmul.f32 %v1020, %v1123
        %v1127 = vmul.f32 %v1021, %v1123
        %v1128 = vadd.f32 %v1118, %v1124
        %v1129 = vadd.f32 %v1119, %v1125
        %v1130 = vadd.f32 %v1120, %v1126
        %v1131 = vadd.f32 %v1121, %v1127
        %s1132 = sld [smem:[#allocation4 + $0x11]]
        %v1133 = vstv %s1132
        %v1134 = vsel %vm1022, %v1133, 0.0
        %v1135 = vsel %vm1023, %v1133, 0.0
        %v1136 = vsel %vm1024, %v1133, 0.0
        %v1137 = vsel %vm1025, %v1133, 0.0
        %v1138 = vadd.f32 %v1128, %v1134
        %v1139 = vadd.f32 %v1129, %v1135
        %v1140 = vadd.f32 %v1130, %v1136
        %v1141 = vadd.f32 %v1131, %v1137
        %1142 = vst [vmem:[%s437] sm:$0xff] %v1138
        %1143 = vst [vmem:[%s437 + $0x8] sm:$0xff] %v1139
        %1144 = vst [vmem:[%s437 + $0x10] sm:$0xff] %v1140
        %1145 = vst [vmem:[%s437 + $0x18] sm:$0xff] %v1141
        %v1146 = vld [vmem:[%s284] sm:$0xff]
        %v1147 = vld [vmem:[%s284 + $0x8] sm:$0xff]
        %v1148 = vld [vmem:[%s284 + $0x10] sm:$0xff]
        %v1149 = vld [vmem:[%s284 + $0x18] sm:$0xff]
        %v1150 = vld [vmem:[%s392] sm:$0xff]
        %v1151 = vld [vmem:[%s392 + $0x8] sm:$0xff]
        %v1152 = vld [vmem:[%s392 + $0x10] sm:$0xff]
        %v1153 = vld [vmem:[%s392 + $0x18] sm:$0xff]
        %v1154 = vld [vmem:[%s437] sm:$0xff]
        %v1155 = vld [vmem:[%s437 + $0x8] sm:$0xff]
        %v1156 = vld [vmem:[%s437 + $0x10] sm:$0xff]
        %v1157 = vld [vmem:[%s437 + $0x18] sm:$0xff]
        %vm1158 = vcmp.le.f32.partialorder %v286, 7.0
        %vm1159 = vcmp.le.f32.partialorder %v287, 7.0
        %vm1160 = vcmp.le.f32.partialorder %v288, 7.0
        %vm1161 = vcmp.le.f32.partialorder %v289, 7.0
        %s1162 = sld [smem:[#allocation2 + $0x36]]
        %v1163 = vstv %s1162
        %v1164 = vmul.f32 %v1146, %v1163
        %v1165 = vmul.f32 %v1147, %v1163
        %v1166 = vmul.f32 %v1148, %v1163
        %v1167 = vmul.f32 %v1149, %v1163
        %s1168 = sld [smem:[#allocation2 + $0x37]]
        %v1169 = vstv %s1168
        %v1170 = vmul.f32 %v1150, %v1169
        %v1171 = vmul.f32 %v1151, %v1169
        %v1172 = vmul.f32 %v1152, %v1169
        %v1173 = vmul.f32 %v1153, %v1169
        %v1174 = vadd.f32 %v1164, %v1170
        %v1175 = vadd.f32 %v1165, %v1171
        %v1176 = vadd.f32 %v1166, %v1172
        %v1177 = vadd.f32 %v1167, %v1173
        %s1178 = sld [smem:[#allocation2 + $0x38]]
        %v1179 = vstv %s1178
        %v1180 = vmul.f32 %v1154, %v1179
        %v1181 = vmul.f32 %v1155, %v1179
        %v1182 = vmul.f32 %v1156, %v1179
        %v1183 = vmul.f32 %v1157, %v1179
        %v1184 = vadd.f32 %v1174, %v1180
        %v1185 = vadd.f32 %v1175, %v1181
        %v1186 = vadd.f32 %v1176, %v1182
        %v1187 = vadd.f32 %v1177, %v1183
        %s1188 = sld [smem:[#allocation4 + $0x12]]
        %v1189 = vstv %s1188
        %v1190 = vsel %vm1158, %v1189, 0.0
        %v1191 = vsel %vm1159, %v1189, 0.0
        %v1192 = vsel %vm1160, %v1189, 0.0
        %v1193 = vsel %vm1161, %v1189, 0.0
        %v1194 = vadd.f32 %v1184, %v1190
        %v1195 = vadd.f32 %v1185, %v1191
        %v1196 = vadd.f32 %v1186, %v1192
        %v1197 = vadd.f32 %v1187, %v1193
        %v1198 = vmax.f32 %v1194, 0.0
        %v1199 = vmax.f32 %v1195, 0.0
        %v1200 = vmax.f32 %v1196, 0.0
        %v1201 = vmax.f32 %v1197, 0.0
        %1202 = vst [vmem:[%s284] sm:$0xff] %v1198
        %1203 = vst [vmem:[%s284 + $0x8] sm:$0xff] %v1199
        %1204 = vst [vmem:[%s284 + $0x10] sm:$0xff] %v1200
        %1205 = vst [vmem:[%s284 + $0x18] sm:$0xff] %v1201
        %s1206 = sld [smem:[#allocation2 + $0x39]]
        %v1207 = vstv %s1206
        %v1208 = vmul.f32 %v1146, %v1207
        %v1209 = vmul.f32 %v1147, %v1207
        %v1210 = vmul.f32 %v1148, %v1207
        %v1211 = vmul.f32 %v1149, %v1207
        %s1212 = sld [smem:[#allocation2 + $0x3a]]
        %v1213 = vstv %s1212
        %v1214 = vmul.f32 %v1150, %v1213
        %v1215 = vmul.f32 %v1151, %v1213
        %v1216 = vmul.f32 %v1152, %v1213
        %v1217 = vmul.f32 %v1153, %v1213
        %v1218 = vadd.f32 %v1208, %v1214
        %v1219 = vadd.f32 %v1209, %v1215
        %v1220 = vadd.f32 %v1210, %v1216
        %v1221 = vadd.f32 %v1211, %v1217
        %s1222 = sld [smem:[#allocation2 + $0x3b]]
        %v1223 = vstv %s1222
        %v1224 = vmul.f32 %v1154, %v1223
        %v1225 = vmul.f32 %v1155, %v1223
        %v1226 = vmul.f32 %v1156, %v1223
        %v1227 = vmul.f32 %v1157, %v1223
        %v1228 = vadd.f32 %v1218, %v1224
        %v1229 = vadd.f32 %v1219, %v1225
        %v1230 = vadd.f32 %v1220, %v1226
        %v1231 = vadd.f32 %v1221, %v1227
        %s1232 = sld [smem:[#allocation4 + $0x13]]
        %v1233 = vstv %s1232
        %v1234 = vsel %vm1158, %v1233, 0.0
        %v1235 = vsel %vm1159, %v1233, 0.0
        %v1236 = vsel %vm1160, %v1233, 0.0
        %v1237 = vsel %vm1161, %v1233, 0.0
        %v1238 = vadd.f32 %v1228, %v1234
        %v1239 = vadd.f32 %v1229, %v1235
        %v1240 = vadd.f32 %v1230, %v1236
        %v1241 = vadd.f32 %v1231, %v1237
        %v1242 = vmax.f32 %v1238, 0.0
        %v1243 = vmax.f32 %v1239, 0.0
        %v1244 = vmax.f32 %v1240, 0.0
        %v1245 = vmax.f32 %v1241, 0.0
        %1246 = vst [vmem:[%s392] sm:$0xff] %v1242
        %1247 = vst [vmem:[%s392 + $0x8] sm:$0xff] %v1243
        %1248 = vst [vmem:[%s392 + $0x10] sm:$0xff] %v1244
        %1249 = vst [vmem:[%s392 + $0x18] sm:$0xff] %v1245
        %s1250 = sld [smem:[#allocation2 + $0x3c]]
        %v1251 = vstv %s1250
        %v1252 = vmul.f32 %v1146, %v1251
        %v1253 = vmul.f32 %v1147, %v1251
        %v1254 = vmul.f32 %v1148, %v1251
        %v1255 = vmul.f32 %v1149, %v1251
        %s1256 = sld [smem:[#allocation2 + $0x3d]]
        %v1257 = vstv %s1256
        %v1258 = vmul.f32 %v1150, %v1257
        %v1259 = vmul.f32 %v1151, %v1257
        %v1260 = vmul.f32 %v1152, %v1257
        %v1261 = vmul.f32 %v1153, %v1257
        %v1262 = vadd.f32 %v1252, %v1258
        %v1263 = vadd.f32 %v1253, %v1259
        %v1264 = vadd.f32 %v1254, %v1260
        %v1265 = vadd.f32 %v1255, %v1261
        %s1266 = sld [smem:[#allocation2 + $0x3e]]
        %v1267 = vstv %s1266
        %v1268 = vmul.f32 %v1154, %v1267
        %v1269 = vmul.f32 %v1155, %v1267
        %v1270 = vmul.f32 %v1156, %v1267
        %v1271 = vmul.f32 %v1157, %v1267
        %v1272 = vadd.f32 %v1262, %v1268
        %v1273 = vadd.f32 %v1263, %v1269
        %v1274 = vadd.f32 %v1264, %v1270
        %v1275 = vadd.f32 %v1265, %v1271
        %s1276 = sld [smem:[#allocation4 + $0x14]]
        %v1277 = vstv %s1276
        %v1278 = vsel %vm1158, %v1277, 0.0
        %v1279 = vsel %vm1159, %v1277, 0.0
        %v1280 = vsel %vm1160, %v1277, 0.0
        %v1281 = vsel %vm1161, %v1277, 0.0
        %v1282 = vadd.f32 %v1272, %v1278
        %v1283 = vadd.f32 %v1273, %v1279
        %v1284 = vadd.f32 %v1274, %v1280
        %v1285 = vadd.f32 %v1275, %v1281
        %v1286 = vmax.f32 %v1282, 0.0
        %v1287 = vmax.f32 %v1283, 0.0
        %v1288 = vmax.f32 %v1284, 0.0
        %v1289 = vmax.f32 %v1285, 0.0
        %1290 = vst [vmem:[%s437] sm:$0xff] %v1286
        %1291 = vst [vmem:[%s437 + $0x8] sm:$0xff] %v1287
        %1292 = vst [vmem:[%s437 + $0x10] sm:$0xff] %v1288
        %1293 = vst [vmem:[%s437 + $0x18] sm:$0xff] %v1289
        %v1294 = vld [vmem:[%s284] sm:$0xff]
        %v1295 = vld [vmem:[%s284 + $0x8] sm:$0xff]
        %v1296 = vld [vmem:[%s284 + $0x10] sm:$0xff]
        %v1297 = vld [vmem:[%s284 + $0x18] sm:$0xff]
        %v1298 = vld [vmem:[%s392] sm:$0xff]
        %v1299 = vld [vmem:[%s392 + $0x8] sm:$0xff]
        %v1300 = vld [vmem:[%s392 + $0x10] sm:$0xff]
        %v1301 = vld [vmem:[%s392 + $0x18] sm:$0xff]
        %v1302 = vld [vmem:[%s437] sm:$0xff]
        %v1303 = vld [vmem:[%s437 + $0x8] sm:$0xff]
        %v1304 = vld [vmem:[%s437 + $0x10] sm:$0xff]
        %v1305 = vld [vmem:[%s437 + $0x18] sm:$0xff]
        %vm1306 = vcmp.le.f32.partialorder %v286, 8.0
        %vm1307 = vcmp.le.f32.partialorder %v287, 8.0
        %vm1308 = vcmp.le.f32.partialorder %v288, 8.0
        %vm1309 = vcmp.le.f32.partialorder %v289, 8.0
        %s1310 = sld [smem:[#allocation2 + $0x3f]]
        %v1311 = vstv %s1310
        %v1312 = vmul.f32 %v1294, %v1311
        %v1313 = vmul.f32 %v1295, %v1311
        %v1314 = vmul.f32 %v1296, %v1311
        %v1315 = vmul.f32 %v1297, %v1311
        %s1316 = sld [smem:[#allocation2 + $0x40]]
        %v1317 = vstv %s1316
        %v1318 = vmul.f32 %v1298, %v1317
        %v1319 = vmul.f32 %v1299, %v1317
        %v1320 = vmul.f32 %v1300, %v1317
        %v1321 = vmul.f32 %v1301, %v1317
        %v1322 = vadd.f32 %v1312, %v1318
        %v1323 = vadd.f32 %v1313, %v1319
        %v1324 = vadd.f32 %v1314, %v1320
        %v1325 = vadd.f32 %v1315, %v1321
        %s1326 = sld [smem:[#allocation2 + $0x41]]
        %v1327 = vstv %s1326
        %v1328 = vmul.f32 %v1302, %v1327
        %v1329 = vmul.f32 %v1303, %v1327
        %v1330 = vmul.f32 %v1304, %v1327
        %v1331 = vmul.f32 %v1305, %v1327
        %v1332 = vadd.f32 %v1322, %v1328
        %v1333 = vadd.f32 %v1323, %v1329
        %v1334 = vadd.f32 %v1324, %v1330
        %v1335 = vadd.f32 %v1325, %v1331
        %s1336 = sld [smem:[#allocation4 + $0x15]]
        %v1337 = vstv %s1336
        %v1338 = vsel %vm1306, %v1337, 0.0
        %v1339 = vsel %vm1307, %v1337, 0.0
        %v1340 = vsel %vm1308, %v1337, 0.0
        %v1341 = vsel %vm1309, %v1337, 0.0
        %v1342 = vadd.f32 %v1332, %v1338
        %v1343 = vadd.f32 %v1333, %v1339
        %v1344 = vadd.f32 %v1334, %v1340
        %v1345 = vadd.f32 %v1335, %v1341
        %1346 = vst [vmem:[%s284] sm:$0xff] %v1342
        %1347 = vst [vmem:[%s284 + $0x8] sm:$0xff] %v1343
        %1348 = vst [vmem:[%s284 + $0x10] sm:$0xff] %v1344
        %1349 = vst [vmem:[%s284 + $0x18] sm:$0xff] %v1345
        %s1350 = sld [smem:[#allocation2 + $0x42]]
        %v1351 = vstv %s1350
        %v1352 = vmul.f32 %v1294, %v1351
        %v1353 = vmul.f32 %v1295, %v1351
        %v1354 = vmul.f32 %v1296, %v1351
        %v1355 = vmul.f32 %v1297, %v1351
        %s1356 = sld [smem:[#allocation2 + $0x43]]
        %v1357 = vstv %s1356
        %v1358 = vmul.f32 %v1298, %v1357
        %v1359 = vmul.f32 %v1299, %v1357
        %v1360 = vmul.f32 %v1300, %v1357
        %v1361 = vmul.f32 %v1301, %v1357
        %v1362 = vadd.f32 %v1352, %v1358
        %v1363 = vadd.f32 %v1353, %v1359
        %v1364 = vadd.f32 %v1354, %v1360
        %v1365 = vadd.f32 %v1355, %v1361
        %s1366 = sld [smem:[#allocation2 + $0x44]]
        %v1367 = vstv %s1366
        %v1368 = vmul.f32 %v1302, %v1367
        %v1369 = vmul.f32 %v1303, %v1367
        %v1370 = vmul.f32 %v1304, %v1367
        %v1371 = vmul.f32 %v1305, %v1367
        %v1372 = vadd.f32 %v1362, %v1368
        %v1373 = vadd.f32 %v1363, %v1369
        %v1374 = vadd.f32 %v1364, %v1370
        %v1375 = vadd.f32 %v1365, %v1371
        %s1376 = sld [smem:[#allocation4 + $0x16]]
        %v1377 = vstv %s1376
        %v1378 = vsel %vm1306, %v1377, 0.0
        %v1379 = vsel %vm1307, %v1377, 0.0
        %v1380 = vsel %vm1308, %v1377, 0.0
        %v1381 = vsel %vm1309, %v1377, 0.0
        %v1382 = vadd.f32 %v1372, %v1378
        %v1383 = vadd.f32 %v1373, %v1379
        %v1384 = vadd.f32 %v1374, %v1380
        %v1385 = vadd.f32 %v1375, %v1381
        %1386 = vst [vmem:[%s392] sm:$0xff] %v1382
        %1387 = vst [vmem:[%s392 + $0x8] sm:$0xff] %v1383
        %1388 = vst [vmem:[%s392 + $0x10] sm:$0xff] %v1384
        %1389 = vst [vmem:[%s392 + $0x18] sm:$0xff] %v1385
        %s1390 = sld [smem:[#allocation2 + $0x45]]
        %v1391 = vstv %s1390
        %v1392 = vmul.f32 %v1294, %v1391
        %v1393 = vmul.f32 %v1295, %v1391
        %v1394 = vmul.f32 %v1296, %v1391
        %v1395 = vmul.f32 %v1297, %v1391
        %s1396 = sld [smem:[#allocation2 + $0x46]]
        %v1397 = vstv %s1396
        %v1398 = vmul.f32 %v1298, %v1397
        %v1399 = vmul.f32 %v1299, %v1397
        %v1400 = vmul.f32 %v1300, %v1397
        %v1401 = vmul.f32 %v1301, %v1397
        %v1402 = vadd.f32 %v1392, %v1398
        %v1403 = vadd.f32 %v1393, %v1399
        %v1404 = vadd.f32 %v1394, %v1400
        %v1405 = vadd.f32 %v1395, %v1401
        %s1406 = sld [smem:[#allocation2 + $0x47]]
        %v1407 = vstv %s1406
        %v1408 = vmul.f32 %v1302, %v1407
        %v1409 = vmul.f32 %v1303, %v1407
        %v1410 = vmul.f32 %v1304, %v1407
        %v1411 = vmul.f32 %v1305, %v1407
        %v1412 = vadd.f32 %v1402, %v1408
        %v1413 = vadd.f32 %v1403, %v1409
        %v1414 = vadd.f32 %v1404, %v1410
        %v1415 = vadd.f32 %v1405, %v1411
        %s1416 = sld [smem:[#allocation4 + $0x17]]
        %v1417 = vstv %s1416
        %v1418 = vsel %vm1306, %v1417, 0.0
        %v1419 = vsel %vm1307, %v1417, 0.0
        %v1420 = vsel %vm1308, %v1417, 0.0
        %v1421 = vsel %vm1309, %v1417, 0.0
        %v1422 = vadd.f32 %v1412, %v1418
        %v1423 = vadd.f32 %v1413, %v1419
        %v1424 = vadd.f32 %v1414, %v1420
        %v1425 = vadd.f32 %v1415, %v1421
        %1426 = vst [vmem:[%s437] sm:$0xff] %v1422
        %1427 = vst [vmem:[%s437 + $0x8] sm:$0xff] %v1423
        %1428 = vst [vmem:[%s437 + $0x10] sm:$0xff] %v1424
        %1429 = vst [vmem:[%s437 + $0x18] sm:$0xff] %v1425
        %v1430 = vld [vmem:[%s284] sm:$0xff]
        %v1431 = vld [vmem:[%s284 + $0x8] sm:$0xff]
        %v1432 = vld [vmem:[%s284 + $0x10] sm:$0xff]
        %v1433 = vld [vmem:[%s284 + $0x18] sm:$0xff]
        %v1434 = vld [vmem:[%s392] sm:$0xff]
        %v1435 = vld [vmem:[%s392 + $0x8] sm:$0xff]
        %v1436 = vld [vmem:[%s392 + $0x10] sm:$0xff]
        %v1437 = vld [vmem:[%s392 + $0x18] sm:$0xff]
        %v1438 = vld [vmem:[%s437] sm:$0xff]
        %v1439 = vld [vmem:[%s437 + $0x8] sm:$0xff]
        %v1440 = vld [vmem:[%s437 + $0x10] sm:$0xff]
        %v1441 = vld [vmem:[%s437 + $0x18] sm:$0xff]
        %vm1442 = vcmp.le.f32.partialorder %v286, 9.0
        %vm1443 = vcmp.le.f32.partialorder %v287, 9.0
        %vm1444 = vcmp.le.f32.partialorder %v288, 9.0
        %vm1445 = vcmp.le.f32.partialorder %v289, 9.0
        %s1446 = sld [smem:[#allocation2 + $0x48]]
        %v1447 = vstv %s1446
        %v1448 = vmul.f32 %v1430, %v1447
        %v1449 = vmul.f32 %v1431, %v1447
        %v1450 = vmul.f32 %v1432, %v1447
        %v1451 = vmul.f32 %v1433, %v1447
        %s1452 = sld [smem:[#allocation2 + $0x49]]
        %v1453 = vstv %s1452
        %v1454 = vmul.f32 %v1434, %v1453
        %v1455 = vmul.f32 %v1435, %v1453
        %v1456 = vmul.f32 %v1436, %v1453
        %v1457 = vmul.f32 %v1437, %v1453
        %v1458 = vadd.f32 %v1448, %v1454
        %v1459 = vadd.f32 %v1449, %v1455
        %v1460 = vadd.f32 %v1450, %v1456
        %v1461 = vadd.f32 %v1451, %v1457
        %s1462 = sld [smem:[#allocation2 + $0x4a]]
        %v1463 = vstv %s1462
        %v1464 = vmul.f32 %v1438, %v1463
        %v1465 = vmul.f32 %v1439, %v1463
        %v1466 = vmul.f32 %v1440, %v1463
        %v1467 = vmul.f32 %v1441, %v1463
        %v1468 = vadd.f32 %v1458, %v1464
        %v1469 = vadd.f32 %v1459, %v1465
        %v1470 = vadd.f32 %v1460, %v1466
        %v1471 = vadd.f32 %v1461, %v1467
        %s1472 = sld [smem:[#allocation4 + $0x18]]
        %v1473 = vstv %s1472
        %v1474 = vsel %vm1442, %v1473, 0.0
        %v1475 = vsel %vm1443, %v1473, 0.0
        %v1476 = vsel %vm1444, %v1473, 0.0
        %v1477 = vsel %vm1445, %v1473, 0.0
        %v1478 = vadd.f32 %v1468, %v1474
        %v1479 = vadd.f32 %v1469, %v1475
        %v1480 = vadd.f32 %v1470, %v1476
        %v1481 = vadd.f32 %v1471, %v1477
        %v1482 = vmax.f32 %v1478, 0.0
        %v1483 = vmax.f32 %v1479, 0.0
        %v1484 = vmax.f32 %v1480, 0.0
        %v1485 = vmax.f32 %v1481, 0.0
        %1486 = vst [vmem:[%s284] sm:$0xff] %v1482
        %1487 = vst [vmem:[%s284 + $0x8] sm:$0xff] %v1483
        %1488 = vst [vmem:[%s284 + $0x10] sm:$0xff] %v1484
        %1489 = vst [vmem:[%s284 + $0x18] sm:$0xff] %v1485
        %s1490 = sld [smem:[#allocation2 + $0x4b]]
        %v1491 = vstv %s1490
        %v1492 = vmul.f32 %v1430, %v1491
        %v1493 = vmul.f32 %v1431, %v1491
        %v1494 = vmul.f32 %v1432, %v1491
        %v1495 = vmul.f32 %v1433, %v1491
        %s1496 = sld [smem:[#allocation2 + $0x4c]]
        %v1497 = vstv %s1496
        %v1498 = vmul.f32 %v1434, %v1497
        %v1499 = vmul.f32 %v1435, %v1497
        %v1500 = vmul.f32 %v1436, %v1497
        %v1501 = vmul.f32 %v1437, %v1497
        %v1502 = vadd.f32 %v1492, %v1498
        %v1503 = vadd.f32 %v1493, %v1499
        %v1504 = vadd.f32 %v1494, %v1500
        %v1505 = vadd.f32 %v1495, %v1501
        %s1506 = sld [smem:[#allocation2 + $0x4d]]
        %v1507 = vstv %s1506
        %v1508 = vmul.f32 %v1438, %v1507
        %v1509 = vmul.f32 %v1439, %v1507
        %v1510 = vmul.f32 %v1440, %v1507
        %v1511 = vmul.f32 %v1441, %v1507
        %v1512 = vadd.f32 %v1502, %v1508
        %v1513 = vadd.f32 %v1503, %v1509
        %v1514 = vadd.f32 %v1504, %v1510
        %v1515 = vadd.f32 %v1505, %v1511
        %s1516 = sld [smem:[#allocation4 + $0x19]]
        %v1517 = vstv %s1516
        %v1518 = vsel %vm1442, %v1517, 0.0
        %v1519 = vsel %vm1443, %v1517, 0.0
        %v1520 = vsel %vm1444, %v1517, 0.0
        %v1521 = vsel %vm1445, %v1517, 0.0
        %v1522 = vadd.f32 %v1512, %v1518
        %v1523 = vadd.f32 %v1513, %v1519
        %v1524 = vadd.f32 %v1514, %v1520
        %v1525 = vadd.f32 %v1515, %v1521
        %v1526 = vmax.f32 %v1522, 0.0
        %v1527 = vmax.f32 %v1523, 0.0
        %v1528 = vmax.f32 %v1524, 0.0
        %v1529 = vmax.f32 %v1525, 0.0
        %1530 = vst [vmem:[%s392] sm:$0xff] %v1526
        %1531 = vst [vmem:[%s392 + $0x8] sm:$0xff] %v1527
        %1532 = vst [vmem:[%s392 + $0x10] sm:$0xff] %v1528
        %1533 = vst [vmem:[%s392 + $0x18] sm:$0xff] %v1529
        %s1534 = sld [smem:[#allocation2 + $0x4e]]
        %v1535 = vstv %s1534
        %v1536 = vmul.f32 %v1430, %v1535
        %v1537 = vmul.f32 %v1431, %v1535
        %v1538 = vmul.f32 %v1432, %v1535
        %v1539 = vmul.f32 %v1433, %v1535
        %s1540 = sld [smem:[#allocation2 + $0x4f]]
        %v1541 = vstv %s1540
        %v1542 = vmul.f32 %v1434, %v1541
        %v1543 = vmul.f32 %v1435, %v1541
        %v1544 = vmul.f32 %v1436, %v1541
        %v1545 = vmul.f32 %v1437, %v1541
        %v1546 = vadd.f32 %v1536, %v1542
        %v1547 = vadd.f32 %v1537, %v1543
        %v1548 = vadd.f32 %v1538, %v1544
        %v1549 = vadd.f32 %v1539, %v1545
        %s1550 = sld [smem:[#allocation2 + $0x50]]
        %v1551 = vstv %s1550
        %v1552 = vmul.f32 %v1438, %v1551
        %v1553 = vmul.f32 %v1439, %v1551
        %v1554 = vmul.f32 %v1440, %v1551
        %v1555 = vmul.f32 %v1441, %v1551
        %v1556 = vadd.f32 %v1546, %v1552
        %v1557 = vadd.f32 %v1547, %v1553
        %v1558 = vadd.f32 %v1548, %v1554
        %v1559 = vadd.f32 %v1549, %v1555
        %s1560 = sld [smem:[#allocation4 + $0x1a]]
        %v1561 = vstv %s1560
        %v1562 = vsel %vm1442, %v1561, 0.0
        %v1563 = vsel %vm1443, %v1561, 0.0
        %v1564 = vsel %vm1444, %v1561, 0.0
        %v1565 = vsel %vm1445, %v1561, 0.0
        %v1566 = vadd.f32 %v1556, %v1562
        %v1567 = vadd.f32 %v1557, %v1563
        %v1568 = vadd.f32 %v1558, %v1564
        %v1569 = vadd.f32 %v1559, %v1565
        %v1570 = vmax.f32 %v1566, 0.0
        %v1571 = vmax.f32 %v1567, 0.0
        %v1572 = vmax.f32 %v1568, 0.0
        %v1573 = vmax.f32 %v1569, 0.0
        %1574 = vst [vmem:[%s437] sm:$0xff] %v1570
        %1575 = vst [vmem:[%s437 + $0x8] sm:$0xff] %v1571
        %1576 = vst [vmem:[%s437 + $0x10] sm:$0xff] %v1572
        %1577 = vst [vmem:[%s437 + $0x18] sm:$0xff] %v1573
        %v1578 = vld [vmem:[%s284] sm:$0xff]
        %v1579 = vld [vmem:[%s284 + $0x8] sm:$0xff]
        %v1580 = vld [vmem:[%s284 + $0x10] sm:$0xff]
        %v1581 = vld [vmem:[%s284 + $0x18] sm:$0xff]
        %v1582 = vld [vmem:[%s392] sm:$0xff]
        %v1583 = vld [vmem:[%s392 + $0x8] sm:$0xff]
        %v1584 = vld [vmem:[%s392 + $0x10] sm:$0xff]
        %v1585 = vld [vmem:[%s392 + $0x18] sm:$0xff]
        %v1586 = vld [vmem:[%s437] sm:$0xff]
        %v1587 = vld [vmem:[%s437 + $0x8] sm:$0xff]
        %v1588 = vld [vmem:[%s437 + $0x10] sm:$0xff]
        %v1589 = vld [vmem:[%s437 + $0x18] sm:$0xff]
        %vm1590 = vcmp.le.f32.partialorder %v286, 10.0
        %vm1591 = vcmp.le.f32.partialorder %v287, 10.0
        %vm1592 = vcmp.le.f32.partialorder %v288, 10.0
        %vm1593 = vcmp.le.f32.partialorder %v289, 10.0
        %s1594 = sld [smem:[#allocation2 + $0x51]]
        %v1595 = vstv %s1594
        %v1596 = vmul.f32 %v1578, %v1595
        %v1597 = vmul.f32 %v1579, %v1595
        %v1598 = vmul.f32 %v1580, %v1595
        %v1599 = vmul.f32 %v1581, %v1595
        %s1600 = sld [smem:[#allocation2 + $0x52]]
        %v1601 = vstv %s1600
        %v1602 = vmul.f32 %v1582, %v1601
        %v1603 = vmul.f32 %v1583, %v1601
        %v1604 = vmul.f32 %v1584, %v1601
        %v1605 = vmul.f32 %v1585, %v1601
        %v1606 = vadd.f32 %v1596, %v1602
        %v1607 = vadd.f32 %v1597, %v1603
        %v1608 = vadd.f32 %v1598, %v1604
        %v1609 = vadd.f32 %v1599, %v1605
        %s1610 = sld [smem:[#allocation2 + $0x53]]
        %v1611 = vstv %s1610
        %v1612 = vmul.f32 %v1586, %v1611
        %v1613 = vmul.f32 %v1587, %v1611
        %v1614 = vmul.f32 %v1588, %v1611
        %v1615 = vmul.f32 %v1589, %v1611
        %v1616 = vadd.f32 %v1606, %v1612
        %v1617 = vadd.f32 %v1607, %v1613
        %v1618 = vadd.f32 %v1608, %v1614
        %v1619 = vadd.f32 %v1609, %v1615
        %s1620 = sld [smem:[#allocation4 + $0x1b]]
        %v1621 = vstv %s1620
        %v1622 = vsel %vm1590, %v1621, 0.0
        %v1623 = vsel %vm1591, %v1621, 0.0
        %v1624 = vsel %vm1592, %v1621, 0.0
        %v1625 = vsel %vm1593, %v1621, 0.0
        %v1626 = vadd.f32 %v1616, %v1622
        %v1627 = vadd.f32 %v1617, %v1623
        %v1628 = vadd.f32 %v1618, %v1624
        %v1629 = vadd.f32 %v1619, %v1625
        %1630 = vst [vmem:[%s284] sm:$0xff] %v1626
        %1631 = vst [vmem:[%s284 + $0x8] sm:$0xff] %v1627
        %1632 = vst [vmem:[%s284 + $0x10] sm:$0xff] %v1628
        %1633 = vst [vmem:[%s284 + $0x18] sm:$0xff] %v1629
        %s1634 = sld [smem:[#allocation2 + $0x54]]
        %v1635 = vstv %s1634
        %v1636 = vmul.f32 %v1578, %v1635
        %v1637 = vmul.f32 %v1579, %v1635
        %v1638 = vmul.f32 %v1580, %v1635
        %v1639 = vmul.f32 %v1581, %v1635
        %s1640 = sld [smem:[#allocation2 + $0x55]]
        %v1641 = vstv %s1640
        %v1642 = vmul.f32 %v1582, %v1641
        %v1643 = vmul.f32 %v1583, %v1641
        %v1644 = vmul.f32 %v1584, %v1641
        %v1645 = vmul.f32 %v1585, %v1641
        %v1646 = vadd.f32 %v1636, %v1642
        %v1647 = vadd.f32 %v1637, %v1643
        %v1648 = vadd.f32 %v1638, %v1644
        %v1649 = vadd.f32 %v1639, %v1645
        %s1650 = sld [smem:[#allocation2 + $0x56]]
        %v1651 = vstv %s1650
        %v1652 = vmul.f32 %v1586, %v1651
        %v1653 = vmul.f32 %v1587, %v1651
        %v1654 = vmul.f32 %v1588, %v1651
        %v1655 = vmul.f32 %v1589, %v1651
        %v1656 = vadd.f32 %v1646, %v1652
        %v1657 = vadd.f32 %v1647, %v1653
        %v1658 = vadd.f32 %v1648, %v1654
        %v1659 = vadd.f32 %v1649, %v1655
        %s1660 = sld [smem:[#allocation4 + $0x1c]]
        %v1661 = vstv %s1660
        %v1662 = vsel %vm1590, %v1661, 0.0
        %v1663 = vsel %vm1591, %v1661, 0.0
        %v1664 = vsel %vm1592, %v1661, 0.0
        %v1665 = vsel %vm1593, %v1661, 0.0
        %v1666 = vadd.f32 %v1656, %v1662
        %v1667 = vadd.f32 %v1657, %v1663
        %v1668 = vadd.f32 %v1658, %v1664
        %v1669 = vadd.f32 %v1659, %v1665
        %1670 = vst [vmem:[%s392] sm:$0xff] %v1666
        %1671 = vst [vmem:[%s392 + $0x8] sm:$0xff] %v1667
        %1672 = vst [vmem:[%s392 + $0x10] sm:$0xff] %v1668
        %1673 = vst [vmem:[%s392 + $0x18] sm:$0xff] %v1669
        %s1674 = sld [smem:[#allocation2 + $0x57]]
        %v1675 = vstv %s1674
        %v1676 = vmul.f32 %v1578, %v1675
        %v1677 = vmul.f32 %v1579, %v1675
        %v1678 = vmul.f32 %v1580, %v1675
        %v1679 = vmul.f32 %v1581, %v1675
        %s1680 = sld [smem:[#allocation2 + $0x58]]
        %v1681 = vstv %s1680
        %v1682 = vmul.f32 %v1582, %v1681
        %v1683 = vmul.f32 %v1583, %v1681
        %v1684 = vmul.f32 %v1584, %v1681
        %v1685 = vmul.f32 %v1585, %v1681
        %v1686 = vadd.f32 %v1676, %v1682
        %v1687 = vadd.f32 %v1677, %v1683
        %v1688 = vadd.f32 %v1678, %v1684
        %v1689 = vadd.f32 %v1679, %v1685
        %s1690 = sld [smem:[#allocation2 + $0x59]]
        %v1691 = vstv %s1690
        %v1692 = vmul.f32 %v1586, %v1691
        %v1693 = vmul.f32 %v1587, %v1691
        %v1694 = vmul.f32 %v1588, %v1691
        %v1695 = vmul.f32 %v1589, %v1691
        %v1696 = vadd.f32 %v1686, %v1692
        %v1697 = vadd.f32 %v1687, %v1693
        %v1698 = vadd.f32 %v1688, %v1694
        %v1699 = vadd.f32 %v1689, %v1695
        %s1700 = sld [smem:[#allocation4 + $0x1d]]
        %v1701 = vstv %s1700
        %v1702 = vsel %vm1590, %v1701, 0.0
        %v1703 = vsel %vm1591, %v1701, 0.0
        %v1704 = vsel %vm1592, %v1701, 0.0
        %v1705 = vsel %vm1593, %v1701, 0.0
        %v1706 = vadd.f32 %v1696, %v1702
        %v1707 = vadd.f32 %v1697, %v1703
        %v1708 = vadd.f32 %v1698, %v1704
        %v1709 = vadd.f32 %v1699, %v1705
        %1710 = vst [vmem:[%s437] sm:$0xff] %v1706
        %1711 = vst [vmem:[%s437 + $0x8] sm:$0xff] %v1707
        %1712 = vst [vmem:[%s437 + $0x10] sm:$0xff] %v1708
        %1713 = vst [vmem:[%s437 + $0x18] sm:$0xff] %v1709
        %v1714 = vld [vmem:[%s284] sm:$0xff]
        %v1715 = vld [vmem:[%s284 + $0x8] sm:$0xff]
        %v1716 = vld [vmem:[%s284 + $0x10] sm:$0xff]
        %v1717 = vld [vmem:[%s284 + $0x18] sm:$0xff]
        %v1718 = vld [vmem:[%s392] sm:$0xff]
        %v1719 = vld [vmem:[%s392 + $0x8] sm:$0xff]
        %v1720 = vld [vmem:[%s392 + $0x10] sm:$0xff]
        %v1721 = vld [vmem:[%s392 + $0x18] sm:$0xff]
        %v1722 = vld [vmem:[%s437] sm:$0xff]
        %v1723 = vld [vmem:[%s437 + $0x8] sm:$0xff]
        %v1724 = vld [vmem:[%s437 + $0x10] sm:$0xff]
        %v1725 = vld [vmem:[%s437 + $0x18] sm:$0xff]
        %vm1726 = vcmp.le.f32.partialorder %v286, 11.0
        %vm1727 = vcmp.le.f32.partialorder %v287, 11.0
        %vm1728 = vcmp.le.f32.partialorder %v288, 11.0
        %vm1729 = vcmp.le.f32.partialorder %v289, 11.0
        %s1730 = sld [smem:[#allocation2 + $0x5a]]
        %v1731 = vstv %s1730
        %v1732 = vmul.f32 %v1714, %v1731
        %v1733 = vmul.f32 %v1715, %v1731
        %v1734 = vmul.f32 %v1716, %v1731
        %v1735 = vmul.f32 %v1717, %v1731
        %s1736 = sld [smem:[#allocation2 + $0x5b]]
        %v1737 = vstv %s1736
        %v1738 = vmul.f32 %v1718, %v1737
        %v1739 = vmul.f32 %v1719, %v1737
        %v1740 = vmul.f32 %v1720, %v1737
        %v1741 = vmul.f32 %v1721, %v1737
        %v1742 = vadd.f32 %v1732, %v1738
        %v1743 = vadd.f32 %v1733, %v1739
        %v1744 = vadd.f32 %v1734, %v1740
        %v1745 = vadd.f32 %v1735, %v1741
        %s1746 = sld [smem:[#allocation2 + $0x5c]]
        %v1747 = vstv %s1746
        %v1748 = vmul.f32 %v1722, %v1747
        %v1749 = vmul.f32 %v1723, %v1747
        %v1750 = vmul.f32 %v1724, %v1747
        %v1751 = vmul.f32 %v1725, %v1747
        %v1752 = vadd.f32 %v1742, %v1748
        %v1753 = vadd.f32 %v1743, %v1749
        %v1754 = vadd.f32 %v1744, %v1750
        %v1755 = vadd.f32 %v1745, %v1751
        %s1756 = sld [smem:[#allocation4 + $0x1e]]
        %v1757 = vstv %s1756
        %v1758 = vsel %vm1726, %v1757, 0.0
        %v1759 = vsel %vm1727, %v1757, 0.0
        %v1760 = vsel %vm1728, %v1757, 0.0
        %v1761 = vsel %vm1729, %v1757, 0.0
        %v1762 = vadd.f32 %v1752, %v1758
        %v1763 = vadd.f32 %v1753, %v1759
        %v1764 = vadd.f32 %v1754, %v1760
        %v1765 = vadd.f32 %v1755, %v1761
        %v1766 = vmax.f32 %v1762, 0.0
        %v1767 = vmax.f32 %v1763, 0.0
        %v1768 = vmax.f32 %v1764, 0.0
        %v1769 = vmax.f32 %v1765, 0.0
        %1770 = vst [vmem:[%s284] sm:$0xff] %v1766
        %1771 = vst [vmem:[%s284 + $0x8] sm:$0xff] %v1767
        %1772 = vst [vmem:[%s284 + $0x10] sm:$0xff] %v1768
        %1773 = vst [vmem:[%s284 + $0x18] sm:$0xff] %v1769
        %s1774 = sld [smem:[#allocation2 + $0x5d]]
        %v1775 = vstv %s1774
        %v1776 = vmul.f32 %v1714, %v1775
        %v1777 = vmul.f32 %v1715, %v1775
        %v1778 = vmul.f32 %v1716, %v1775
        %v1779 = vmul.f32 %v1717, %v1775
        %s1780 = sld [smem:[#allocation2 + $0x5e]]
        %v1781 = vstv %s1780
        %v1782 = vmul.f32 %v1718, %v1781
        %v1783 = vmul.f32 %v1719, %v1781
        %v1784 = vmul.f32 %v1720, %v1781
        %v1785 = vmul.f32 %v1721, %v1781
        %v1786 = vadd.f32 %v1776, %v1782
        %v1787 = vadd.f32 %v1777, %v1783
        %v1788 = vadd.f32 %v1778, %v1784
        %v1789 = vadd.f32 %v1779, %v1785
        %s1790 = sld [smem:[#allocation2 + $0x5f]]
        %v1791 = vstv %s1790
        %v1792 = vmul.f32 %v1722, %v1791
        %v1793 = vmul.f32 %v1723, %v1791
        %v1794 = vmul.f32 %v1724, %v1791
        %v1795 = vmul.f32 %v1725, %v1791
        %v1796 = vadd.f32 %v1786, %v1792
        %v1797 = vadd.f32 %v1787, %v1793
        %v1798 = vadd.f32 %v1788, %v1794
        %v1799 = vadd.f32 %v1789, %v1795
        %s1800 = sld [smem:[#allocation4 + $0x1f]]
        %v1801 = vstv %s1800
        %v1802 = vsel %vm1726, %v1801, 0.0
        %v1803 = vsel %vm1727, %v1801, 0.0
        %v1804 = vsel %vm1728, %v1801, 0.0
        %v1805 = vsel %vm1729, %v1801, 0.0
        %v1806 = vadd.f32 %v1796, %v1802
        %v1807 = vadd.f32 %v1797, %v1803
        %v1808 = vadd.f32 %v1798, %v1804
        %v1809 = vadd.f32 %v1799, %v1805
        %v1810 = vmax.f32 %v1806, 0.0
        %v1811 = vmax.f32 %v1807, 0.0
        %v1812 = vmax.f32 %v1808, 0.0
        %v1813 = vmax.f32 %v1809, 0.0
        %1814 = vst [vmem:[%s392] sm:$0xff] %v1810
        %1815 = vst [vmem:[%s392 + $0x8] sm:$0xff] %v1811
        %1816 = vst [vmem:[%s392 + $0x10] sm:$0xff] %v1812
        %1817 = vst [vmem:[%s392 + $0x18] sm:$0xff] %v1813
        %s1818 = sld [smem:[#allocation2 + $0x60]]
        %v1819 = vstv %s1818
        %v1820 = vmul.f32 %v1714, %v1819
        %v1821 = vmul.f32 %v1715, %v1819
        %v1822 = vmul.f32 %v1716, %v1819
        %v1823 = vmul.f32 %v1717, %v1819
        %s1824 = sld [smem:[#allocation2 + $0x61]]
        %v1825 = vstv %s1824
        %v1826 = vmul.f32 %v1718, %v1825
        %v1827 = vmul.f32 %v1719, %v1825
        %v1828 = vmul.f32 %v1720, %v1825
        %v1829 = vmul.f32 %v1721, %v1825
        %v1830 = vadd.f32 %v1820, %v1826
        %v1831 = vadd.f32 %v1821, %v1827
        %v1832 = vadd.f32 %v1822, %v1828
        %v1833 = vadd.f32 %v1823, %v1829
        %s1834 = sld [smem:[#allocation2 + $0x62]]
        %v1835 = vstv %s1834
        %v1836 = vmul.f32 %v1722, %v1835
        %v1837 = vmul.f32 %v1723, %v1835
        %v1838 = vmul.f32 %v1724, %v1835
        %v1839 = vmul.f32 %v1725, %v1835
        %v1840 = vadd.f32 %v1830, %v1836
        %v1841 = vadd.f32 %v1831, %v1837
        %v1842 = vadd.f32 %v1832, %v1838
        %v1843 = vadd.f32 %v1833, %v1839
        %s1844 = sld [smem:[#allocation4 + $0x20]]
        %v1845 = vstv %s1844
        %v1846 = vsel %vm1726, %v1845, 0.0
        %v1847 = vsel %vm1727, %v1845, 0.0
        %v1848 = vsel %vm1728, %v1845, 0.0
        %v1849 = vsel %vm1729, %v1845, 0.0
        %v1850 = vadd.f32 %v1840, %v1846
        %v1851 = vadd.f32 %v1841, %v1847
        %v1852 = vadd.f32 %v1842, %v1848
        %v1853 = vadd.f32 %v1843, %v1849
        %v1854 = vmax.f32 %v1850, 0.0
        %v1855 = vmax.f32 %v1851, 0.0
        %v1856 = vmax.f32 %v1852, 0.0
        %v1857 = vmax.f32 %v1853, 0.0
        %1858 = vst [vmem:[%s437] sm:$0xff] %v1854
        %1859 = vst [vmem:[%s437 + $0x8] sm:$0xff] %v1855
        %1860 = vst [vmem:[%s437 + $0x10] sm:$0xff] %v1856
        %1861 = vst [vmem:[%s437 + $0x18] sm:$0xff] %v1857
        %v1862 = vld [vmem:[%s284] sm:$0xff]
        %v1863 = vld [vmem:[%s284 + $0x8] sm:$0xff]
        %v1864 = vld [vmem:[%s284 + $0x10] sm:$0xff]
        %v1865 = vld [vmem:[%s284 + $0x18] sm:$0xff]
        %v1866 = vld [vmem:[%s392] sm:$0xff]
        %v1867 = vld [vmem:[%s392 + $0x8] sm:$0xff]
        %v1868 = vld [vmem:[%s392 + $0x10] sm:$0xff]
        %v1869 = vld [vmem:[%s392 + $0x18] sm:$0xff]
        %v1870 = vld [vmem:[%s437] sm:$0xff]
        %v1871 = vld [vmem:[%s437 + $0x8] sm:$0xff]
        %v1872 = vld [vmem:[%s437 + $0x10] sm:$0xff]
        %v1873 = vld [vmem:[%s437 + $0x18] sm:$0xff]
        %vm1874 = vcmp.le.f32.partialorder %v286, 12.0
        %vm1875 = vcmp.le.f32.partialorder %v287, 12.0
        %vm1876 = vcmp.le.f32.partialorder %v288, 12.0
        %vm1877 = vcmp.le.f32.partialorder %v289, 12.0
        %s1878 = sld [smem:[#allocation2 + $0x63]]
        %v1879 = vstv %s1878
        %v1880 = vmul.f32 %v1862, %v1879
        %v1881 = vmul.f32 %v1863, %v1879
        %v1882 = vmul.f32 %v1864, %v1879
        %v1883 = vmul.f32 %v1865, %v1879
        %s1884 = sld [smem:[#allocation2 + $0x64]]
        %v1885 = vstv %s1884
        %v1886 = vmul.f32 %v1866, %v1885
        %v1887 = vmul.f32 %v1867, %v1885
        %v1888 = vmul.f32 %v1868, %v1885
        %v1889 = vmul.f32 %v1869, %v1885
        %v1890 = vadd.f32 %v1880, %v1886
        %v1891 = vadd.f32 %v1881, %v1887
        %v1892 = vadd.f32 %v1882, %v1888
        %v1893 = vadd.f32 %v1883, %v1889
        %s1894 = sld [smem:[#allocation2 + $0x65]]
        %v1895 = vstv %s1894
        %v1896 = vmul.f32 %v1870, %v1895
        %v1897 = vmul.f32 %v1871, %v1895
        %v1898 = vmul.f32 %v1872, %v1895
        %v1899 = vmul.f32 %v1873, %v1895
        %v1900 = vadd.f32 %v1890, %v1896
        %v1901 = vadd.f32 %v1891, %v1897
        %v1902 = vadd.f32 %v1892, %v1898
        %v1903 = vadd.f32 %v1893, %v1899
        %s1904 = sld [smem:[#allocation4 + $0x21]]
        %v1905 = vstv %s1904
        %v1906 = vsel %vm1874, %v1905, 0.0
        %v1907 = vsel %vm1875, %v1905, 0.0
        %v1908 = vsel %vm1876, %v1905, 0.0
        %v1909 = vsel %vm1877, %v1905, 0.0
        %v1910 = vadd.f32 %v1900, %v1906
        %v1911 = vadd.f32 %v1901, %v1907
        %v1912 = vadd.f32 %v1902, %v1908
        %v1913 = vadd.f32 %v1903, %v1909
        %1914 = vst [vmem:[%s284] sm:$0xff] %v1910
        %1915 = vst [vmem:[%s284 + $0x8] sm:$0xff] %v1911
        %1916 = vst [vmem:[%s284 + $0x10] sm:$0xff] %v1912
        %1917 = vst [vmem:[%s284 + $0x18] sm:$0xff] %v1913
        %s1918 = sld [smem:[#allocation2 + $0x66]]
        %v1919 = vstv %s1918
        %v1920 = vmul.f32 %v1862, %v1919
        %v1921 = vmul.f32 %v1863, %v1919
        %v1922 = vmul.f32 %v1864, %v1919
        %v1923 = vmul.f32 %v1865, %v1919
        %s1924 = sld [smem:[#allocation2 + $0x67]]
        %v1925 = vstv %s1924
        %v1926 = vmul.f32 %v1866, %v1925
        %v1927 = vmul.f32 %v1867, %v1925
        %v1928 = vmul.f32 %v1868, %v1925
        %v1929 = vmul.f32 %v1869, %v1925
        %v1930 = vadd.f32 %v1920, %v1926
        %v1931 = vadd.f32 %v1921, %v1927
        %v1932 = vadd.f32 %v1922, %v1928
        %v1933 = vadd.f32 %v1923, %v1929
        %s1934 = sld [smem:[#allocation2 + $0x68]]
        %v1935 = vstv %s1934
        %v1936 = vmul.f32 %v1870, %v1935
        %v1937 = vmul.f32 %v1871, %v1935
        %v1938 = vmul.f32 %v1872, %v1935
        %v1939 = vmul.f32 %v1873, %v1935
        %v1940 = vadd.f32 %v1930, %v1936
        %v1941 = vadd.f32 %v1931, %v1937
        %v1942 = vadd.f32 %v1932, %v1938
        %v1943 = vadd.f32 %v1933, %v1939
        %s1944 = sld [smem:[#allocation4 + $0x22]]
        %v1945 = vstv %s1944
        %v1946 = vsel %vm1874, %v1945, 0.0
        %v1947 = vsel %vm1875, %v1945, 0.0
        %v1948 = vsel %vm1876, %v1945, 0.0
        %v1949 = vsel %vm1877, %v1945, 0.0
        %v1950 = vadd.f32 %v1940, %v1946
        %v1951 = vadd.f32 %v1941, %v1947
        %v1952 = vadd.f32 %v1942, %v1948
        %v1953 = vadd.f32 %v1943, %v1949
        %1954 = vst [vmem:[%s392] sm:$0xff] %v1950
        %1955 = vst [vmem:[%s392 + $0x8] sm:$0xff] %v1951
        %1956 = vst [vmem:[%s392 + $0x10] sm:$0xff] %v1952
        %1957 = vst [vmem:[%s392 + $0x18] sm:$0xff] %v1953
        %s1958 = sld [smem:[#allocation2 + $0x69]]
        %v1959 = vstv %s1958
        %v1960 = vmul.f32 %v1862, %v1959
        %v1961 = vmul.f32 %v1863, %v1959
        %v1962 = vmul.f32 %v1864, %v1959
        %v1963 = vmul.f32 %v1865, %v1959
        %s1964 = sld [smem:[#allocation2 + $0x6a]]
        %v1965 = vstv %s1964
        %v1966 = vmul.f32 %v1866, %v1965
        %v1967 = vmul.f32 %v1867, %v1965
        %v1968 = vmul.f32 %v1868, %v1965
        %v1969 = vmul.f32 %v1869, %v1965
        %v1970 = vadd.f32 %v1960, %v1966
        %v1971 = vadd.f32 %v1961, %v1967
        %v1972 = vadd.f32 %v1962, %v1968
        %v1973 = vadd.f32 %v1963, %v1969
        %s1974 = sld [smem:[#allocation2 + $0x6b]]
        %v1975 = vstv %s1974
        %v1976 = vmul.f32 %v1870, %v1975
        %v1977 = vmul.f32 %v1871, %v1975
        %v1978 = vmul.f32 %v1872, %v1975
        %v1979 = vmul.f32 %v1873, %v1975
        %v1980 = vadd.f32 %v1970, %v1976
        %v1981 = vadd.f32 %v1971, %v1977
        %v1982 = vadd.f32 %v1972, %v1978
        %v1983 = vadd.f32 %v1973, %v1979
        %s1984 = sld [smem:[#allocation4 + $0x23]]
        %v1985 = vstv %s1984
        %v1986 = vsel %vm1874, %v1985, 0.0
        %v1987 = vsel %vm1875, %v1985, 0.0
        %v1988 = vsel %vm1876, %v1985, 0.0
        %v1989 = vsel %vm1877, %v1985, 0.0
        %v1990 = vadd.f32 %v1980, %v1986
        %v1991 = vadd.f32 %v1981, %v1987
        %v1992 = vadd.f32 %v1982, %v1988
        %v1993 = vadd.f32 %v1983, %v1989
        %1994 = vst [vmem:[%s437] sm:$0xff] %v1990
        %1995 = vst [vmem:[%s437 + $0x8] sm:$0xff] %v1991
        %1996 = vst [vmem:[%s437 + $0x10] sm:$0xff] %v1992
        %1997 = vst [vmem:[%s437 + $0x18] sm:$0xff] %v1993
        %v1998 = vld [vmem:[%s284] sm:$0xff]
        %v1999 = vld [vmem:[%s284 + $0x8] sm:$0xff]
        %v2000 = vld [vmem:[%s284 + $0x10] sm:$0xff]
        %v2001 = vld [vmem:[%s284 + $0x18] sm:$0xff]
        %v2002 = vld [vmem:[%s392] sm:$0xff]
        %v2003 = vld [vmem:[%s392 + $0x8] sm:$0xff]
        %v2004 = vld [vmem:[%s392 + $0x10] sm:$0xff]
        %v2005 = vld [vmem:[%s392 + $0x18] sm:$0xff]
        %v2006 = vld [vmem:[%s437] sm:$0xff]
        %v2007 = vld [vmem:[%s437 + $0x8] sm:$0xff]
        %v2008 = vld [vmem:[%s437 + $0x10] sm:$0xff]
        %v2009 = vld [vmem:[%s437 + $0x18] sm:$0xff]
        %vm2010 = vcmp.le.f32.partialorder %v286, 13.0
        %vm2011 = vcmp.le.f32.partialorder %v287, 13.0
        %vm2012 = vcmp.le.f32.partialorder %v288, 13.0
        %vm2013 = vcmp.le.f32.partialorder %v289, 13.0
        %s2014 = sld [smem:[#allocation2 + $0x6c]]
        %v2015 = vstv %s2014
        %v2016 = vmul.f32 %v1998, %v2015
        %v2017 = vmul.f32 %v1999, %v2015
        %v2018 = vmul.f32 %v2000, %v2015
        %v2019 = vmul.f32 %v2001, %v2015
        %s2020 = sld [smem:[#allocation2 + $0x6d]]
        %v2021 = vstv %s2020
        %v2022 = vmul.f32 %v2002, %v2021
        %v2023 = vmul.f32 %v2003, %v2021
        %v2024 = vmul.f32 %v2004, %v2021
        %v2025 = vmul.f32 %v2005, %v2021
        %v2026 = vadd.f32 %v2016, %v2022
        %v2027 = vadd.f32 %v2017, %v2023
        %v2028 = vadd.f32 %v2018, %v2024
        %v2029 = vadd.f32 %v2019, %v2025
        %s2030 = sld [smem:[#allocation2 + $0x6e]]
        %v2031 = vstv %s2030
        %v2032 = vmul.f32 %v2006, %v2031
        %v2033 = vmul.f32 %v2007, %v2031
        %v2034 = vmul.f32 %v2008, %v2031
        %v2035 = vmul.f32 %v2009, %v2031
        %v2036 = vadd.f32 %v2026, %v2032
        %v2037 = vadd.f32 %v2027, %v2033
        %v2038 = vadd.f32 %v2028, %v2034
        %v2039 = vadd.f32 %v2029, %v2035
        %s2040 = sld [smem:[#allocation4 + $0x24]]
        %v2041 = vstv %s2040
        %v2042 = vsel %vm2010, %v2041, 0.0
        %v2043 = vsel %vm2011, %v2041, 0.0
        %v2044 = vsel %vm2012, %v2041, 0.0
        %v2045 = vsel %vm2013, %v2041, 0.0
        %v2046 = vadd.f32 %v2036, %v2042
        %v2047 = vadd.f32 %v2037, %v2043
        %v2048 = vadd.f32 %v2038, %v2044
        %v2049 = vadd.f32 %v2039, %v2045
        %v2050 = vmax.f32 %v2046, 0.0
        %v2051 = vmax.f32 %v2047, 0.0
        %v2052 = vmax.f32 %v2048, 0.0
        %v2053 = vmax.f32 %v2049, 0.0
        %2054 = vst [vmem:[%s284] sm:$0xff] %v2050
        %2055 = vst [vmem:[%s284 + $0x8] sm:$0xff] %v2051
        %2056 = vst [vmem:[%s284 + $0x10] sm:$0xff] %v2052
        %2057 = vst [vmem:[%s284 + $0x18] sm:$0xff] %v2053
        %s2058 = sld [smem:[#allocation2 + $0x6f]]
        %v2059 = vstv %s2058
        %v2060 = vmul.f32 %v1998, %v2059
        %v2061 = vmul.f32 %v1999, %v2059
        %v2062 = vmul.f32 %v2000, %v2059
        %v2063 = vmul.f32 %v2001, %v2059
        %s2064 = sld [smem:[#allocation2 + $0x70]]
        %v2065 = vstv %s2064
        %v2066 = vmul.f32 %v2002, %v2065
        %v2067 = vmul.f32 %v2003, %v2065
        %v2068 = vmul.f32 %v2004, %v2065
        %v2069 = vmul.f32 %v2005, %v2065
        %v2070 = vadd.f32 %v2060, %v2066
        %v2071 = vadd.f32 %v2061, %v2067
        %v2072 = vadd.f32 %v2062, %v2068
        %v2073 = vadd.f32 %v2063, %v2069
        %s2074 = sld [smem:[#allocation2 + $0x71]]
        %v2075 = vstv %s2074
        %v2076 = vmul.f32 %v2006, %v2075
        %v2077 = vmul.f32 %v2007, %v2075
        %v2078 = vmul.f32 %v2008, %v2075
        %v2079 = vmul.f32 %v2009, %v2075
        %v2080 = vadd.f32 %v2070, %v2076
        %v2081 = vadd.f32 %v2071, %v2077
        %v2082 = vadd.f32 %v2072, %v2078
        %v2083 = vadd.f32 %v2073, %v2079
        %s2084 = sld [smem:[#allocation4 + $0x25]]
        %v2085 = vstv %s2084
        %v2086 = vsel %vm2010, %v2085, 0.0
        %v2087 = vsel %vm2011, %v2085, 0.0
        %v2088 = vsel %vm2012, %v2085, 0.0
        %v2089 = vsel %vm2013, %v2085, 0.0
        %v2090 = vadd.f32 %v2080, %v2086
        %v2091 = vadd.f32 %v2081, %v2087
        %v2092 = vadd.f32 %v2082, %v2088
        %v2093 = vadd.f32 %v2083, %v2089
        %v2094 = vmax.f32 %v2090, 0.0
        %v2095 = vmax.f32 %v2091, 0.0
        %v2096 = vmax.f32 %v2092, 0.0
        %v2097 = vmax.f32 %v2093, 0.0
        %2098 = vst [vmem:[%s392] sm:$0xff] %v2094
        %2099 = vst [vmem:[%s392 + $0x8] sm:$0xff] %v2095
        %2100 = vst [vmem:[%s392 + $0x10] sm:$0xff] %v2096
        %2101 = vst [vmem:[%s392 + $0x18] sm:$0xff] %v2097
        %s2102 = sld [smem:[#allocation2 + $0x72]]
        %v2103 = vstv %s2102
        %v2104 = vmul.f32 %v1998, %v2103
        %v2105 = vmul.f32 %v1999, %v2103
        %v2106 = vmul.f32 %v2000, %v2103
        %v2107 = vmul.f32 %v2001, %v2103
        %s2108 = sld [smem:[#allocation2 + $0x73]]
        %v2109 = vstv %s2108
        %v2110 = vmul.f32 %v2002, %v2109
        %v2111 = vmul.f32 %v2003, %v2109
        %v2112 = vmul.f32 %v2004, %v2109
        %v2113 = vmul.f32 %v2005, %v2109
        %v2114 = vadd.f32 %v2104, %v2110
        %v2115 = vadd.f32 %v2105, %v2111
        %v2116 = vadd.f32 %v2106, %v2112
        %v2117 = vadd.f32 %v2107, %v2113
        %s2118 = sld [smem:[#allocation2 + $0x74]]
        %v2119 = vstv %s2118
        %v2120 = vmul.f32 %v2006, %v2119
        %v2121 = vmul.f32 %v2007, %v2119
        %v2122 = vmul.f32 %v2008, %v2119
        %v2123 = vmul.f32 %v2009, %v2119
        %v2124 = vadd.f32 %v2114, %v2120
        %v2125 = vadd.f32 %v2115, %v2121
        %v2126 = vadd.f32 %v2116, %v2122
        %v2127 = vadd.f32 %v2117, %v2123
        %s2128 = sld [smem:[#allocation4 + $0x26]]
        %v2129 = vstv %s2128
        %v2130 = vsel %vm2010, %v2129, 0.0
        %v2131 = vsel %vm2011, %v2129, 0.0
        %v2132 = vsel %vm2012, %v2129, 0.0
        %v2133 = vsel %vm2013, %v2129, 0.0
        %v2134 = vadd.f32 %v2124, %v2130
        %v2135 = vadd.f32 %v2125, %v2131
        %v2136 = vadd.f32 %v2126, %v2132
        %v2137 = vadd.f32 %v2127, %v2133
        %v2138 = vmax.f32 %v2134, 0.0
        %v2139 = vmax.f32 %v2135, 0.0
        %v2140 = vmax.f32 %v2136, 0.0
        %v2141 = vmax.f32 %v2137, 0.0
        %2142 = vst [vmem:[%s437] sm:$0xff] %v2138
        %2143 = vst [vmem:[%s437 + $0x8] sm:$0xff] %v2139
        %2144 = vst [vmem:[%s437 + $0x10] sm:$0xff] %v2140
        %2145 = vst [vmem:[%s437 + $0x18] sm:$0xff] %v2141
        %v2146 = vld [vmem:[%s284] sm:$0xff]
        %v2147 = vld [vmem:[%s284 + $0x8] sm:$0xff]
        %v2148 = vld [vmem:[%s284 + $0x10] sm:$0xff]
        %v2149 = vld [vmem:[%s284 + $0x18] sm:$0xff]
        %v2150 = vld [vmem:[%s392] sm:$0xff]
        %v2151 = vld [vmem:[%s392 + $0x8] sm:$0xff]
        %v2152 = vld [vmem:[%s392 + $0x10] sm:$0xff]
        %v2153 = vld [vmem:[%s392 + $0x18] sm:$0xff]
        %v2154 = vld [vmem:[%s437] sm:$0xff]
        %v2155 = vld [vmem:[%s437 + $0x8] sm:$0xff]
        %v2156 = vld [vmem:[%s437 + $0x10] sm:$0xff]
        %v2157 = vld [vmem:[%s437 + $0x18] sm:$0xff]
        %vm2158 = vcmp.le.f32.partialorder %v286, 14.0
        %vm2159 = vcmp.le.f32.partialorder %v287, 14.0
        %vm2160 = vcmp.le.f32.partialorder %v288, 14.0
        %vm2161 = vcmp.le.f32.partialorder %v289, 14.0
        %s2162 = sld [smem:[#allocation2 + $0x75]]
        %v2163 = vstv %s2162
        %v2164 = vmul.f32 %v2146, %v2163
        %v2165 = vmul.f32 %v2147, %v2163
        %v2166 = vmul.f32 %v2148, %v2163
        %v2167 = vmul.f32 %v2149, %v2163
        %s2168 = sld [smem:[#allocation2 + $0x76]]
        %v2169 = vstv %s2168
        %v2170 = vmul.f32 %v2150, %v2169
        %v2171 = vmul.f32 %v2151, %v2169
        %v2172 = vmul.f32 %v2152, %v2169
        %v2173 = vmul.f32 %v2153, %v2169
        %v2174 = vadd.f32 %v2164, %v2170
        %v2175 = vadd.f32 %v2165, %v2171
        %v2176 = vadd.f32 %v2166, %v2172
        %v2177 = vadd.f32 %v2167, %v2173
        %s2178 = sld [smem:[#allocation2 + $0x77]]
        %v2179 = vstv %s2178
        %v2180 = vmul.f32 %v2154, %v2179
        %v2181 = vmul.f32 %v2155, %v2179
        %v2182 = vmul.f32 %v2156, %v2179
        %v2183 = vmul.f32 %v2157, %v2179
        %v2184 = vadd.f32 %v2174, %v2180
        %v2185 = vadd.f32 %v2175, %v2181
        %v2186 = vadd.f32 %v2176, %v2182
        %v2187 = vadd.f32 %v2177, %v2183
        %s2188 = sld [smem:[#allocation4 + $0x27]]
        %v2189 = vstv %s2188
        %v2190 = vsel %vm2158, %v2189, 0.0
        %v2191 = vsel %vm2159, %v2189, 0.0
        %v2192 = vsel %vm2160, %v2189, 0.0
        %v2193 = vsel %vm2161, %v2189, 0.0
        %v2194 = vadd.f32 %v2184, %v2190
        %v2195 = vadd.f32 %v2185, %v2191
        %v2196 = vadd.f32 %v2186, %v2192
        %v2197 = vadd.f32 %v2187, %v2193
        %2198 = vst [vmem:[%s284] sm:$0xff] %v2194
        %2199 = vst [vmem:[%s284 + $0x8] sm:$0xff] %v2195
        %2200 = vst [vmem:[%s284 + $0x10] sm:$0xff] %v2196
        %2201 = vst [vmem:[%s284 + $0x18] sm:$0xff] %v2197
        %s2202 = sld [smem:[#allocation2 + $0x78]]
        %v2203 = vstv %s2202
        %v2204 = vmul.f32 %v2146, %v2203
        %v2205 = vmul.f32 %v2147, %v2203
        %v2206 = vmul.f32 %v2148, %v2203
        %v2207 = vmul.f32 %v2149, %v2203
        %s2208 = sld [smem:[#allocation2 + $0x79]]
        %v2209 = vstv %s2208
        %v2210 = vmul.f32 %v2150, %v2209
        %v2211 = vmul.f32 %v2151, %v2209
        %v2212 = vmul.f32 %v2152, %v2209
        %v2213 = vmul.f32 %v2153, %v2209
        %v2214 = vadd.f32 %v2204, %v2210
        %v2215 = vadd.f32 %v2205, %v2211
        %v2216 = vadd.f32 %v2206, %v2212
        %v2217 = vadd.f32 %v2207, %v2213
        %s2218 = sld [smem:[#allocation2 + $0x7a]]
        %v2219 = vstv %s2218
        %v2220 = vmul.f32 %v2154, %v2219
        %v2221 = vmul.f32 %v2155, %v2219
        %v2222 = vmul.f32 %v2156, %v2219
        %v2223 = vmul.f32 %v2157, %v2219
        %v2224 = vadd.f32 %v2214, %v2220
        %v2225 = vadd.f32 %v2215, %v2221
        %v2226 = vadd.f32 %v2216, %v2222
        %v2227 = vadd.f32 %v2217, %v2223
        %s2228 = sld [smem:[#allocation4 + $0x28]]
        %v2229 = vstv %s2228
        %v2230 = vsel %vm2158, %v2229, 0.0
        %v2231 = vsel %vm2159, %v2229, 0.0
        %v2232 = vsel %vm2160, %v2229, 0.0
        %v2233 = vsel %vm2161, %v2229, 0.0
        %v2234 = vadd.f32 %v2224, %v2230
        %v2235 = vadd.f32 %v2225, %v2231
        %v2236 = vadd.f32 %v2226, %v2232
        %v2237 = vadd.f32 %v2227, %v2233
        %2238 = vst [vmem:[%s392] sm:$0xff] %v2234
        %2239 = vst [vmem:[%s392 + $0x8] sm:$0xff] %v2235
        %2240 = vst [vmem:[%s392 + $0x10] sm:$0xff] %v2236
        %2241 = vst [vmem:[%s392 + $0x18] sm:$0xff] %v2237
        %s2242 = sld [smem:[#allocation2 + $0x7b]]
        %v2243 = vstv %s2242
        %v2244 = vmul.f32 %v2146, %v2243
        %v2245 = vmul.f32 %v2147, %v2243
        %v2246 = vmul.f32 %v2148, %v2243
        %v2247 = vmul.f32 %v2149, %v2243
        %s2248 = sld [smem:[#allocation2 + $0x7c]]
        %v2249 = vstv %s2248
        %v2250 = vmul.f32 %v2150, %v2249
        %v2251 = vmul.f32 %v2151, %v2249
        %v2252 = vmul.f32 %v2152, %v2249
        %v2253 = vmul.f32 %v2153, %v2249
        %v2254 = vadd.f32 %v2244, %v2250
        %v2255 = vadd.f32 %v2245, %v2251
        %v2256 = vadd.f32 %v2246, %v2252
        %v2257 = vadd.f32 %v2247, %v2253
        %s2258 = sld [smem:[#allocation2 + $0x7d]]
        %v2259 = vstv %s2258
        %v2260 = vmul.f32 %v2154, %v2259
        %v2261 = vmul.f32 %v2155, %v2259
        %v2262 = vmul.f32 %v2156, %v2259
        %v2263 = vmul.f32 %v2157, %v2259
        %v2264 = vadd.f32 %v2254, %v2260
        %v2265 = vadd.f32 %v2255, %v2261
        %v2266 = vadd.f32 %v2256, %v2262
        %v2267 = vadd.f32 %v2257, %v2263
        %s2268 = sld [smem:[#allocation4 + $0x29]]
        %v2269 = vstv %s2268
        %v2270 = vsel %vm2158, %v2269, 0.0
        %v2271 = vsel %vm2159, %v2269, 0.0
        %v2272 = vsel %vm2160, %v2269, 0.0
        %v2273 = vsel %vm2161, %v2269, 0.0
        %v2274 = vadd.f32 %v2264, %v2270
        %v2275 = vadd.f32 %v2265, %v2271
        %v2276 = vadd.f32 %v2266, %v2272
        %v2277 = vadd.f32 %v2267, %v2273
        %2278 = vst [vmem:[%s437] sm:$0xff] %v2274
        %2279 = vst [vmem:[%s437 + $0x8] sm:$0xff] %v2275
        %2280 = vst [vmem:[%s437 + $0x10] sm:$0xff] %v2276
        %2281 = vst [vmem:[%s437 + $0x18] sm:$0xff] %v2277
        %v2282 = vld [vmem:[%s284] sm:$0xff]
        %v2283 = vld [vmem:[%s284 + $0x8] sm:$0xff]
        %v2284 = vld [vmem:[%s284 + $0x10] sm:$0xff]
        %v2285 = vld [vmem:[%s284 + $0x18] sm:$0xff]
        %v2286 = vld [vmem:[%s392] sm:$0xff]
        %v2287 = vld [vmem:[%s392 + $0x8] sm:$0xff]
        %v2288 = vld [vmem:[%s392 + $0x10] sm:$0xff]
        %v2289 = vld [vmem:[%s392 + $0x18] sm:$0xff]
        %v2290 = vld [vmem:[%s437] sm:$0xff]
        %v2291 = vld [vmem:[%s437 + $0x8] sm:$0xff]
        %v2292 = vld [vmem:[%s437 + $0x10] sm:$0xff]
        %v2293 = vld [vmem:[%s437 + $0x18] sm:$0xff]
        %vm2294 = vcmp.le.f32.partialorder %v286, 15.0
        %vm2295 = vcmp.le.f32.partialorder %v287, 15.0
        %vm2296 = vcmp.le.f32.partialorder %v288, 15.0
        %vm2297 = vcmp.le.f32.partialorder %v289, 15.0
        %s2298 = sld [smem:[#allocation2 + $0x7e]]
        %v2299 = vstv %s2298
        %v2300 = vmul.f32 %v2282, %v2299
        %v2301 = vmul.f32 %v2283, %v2299
        %v2302 = vmul.f32 %v2284, %v2299
        %v2303 = vmul.f32 %v2285, %v2299
        %s2304 = sld [smem:[#allocation2 + $0x7f]]
        %v2305 = vstv %s2304
        %v2306 = vmul.f32 %v2286, %v2305
        %v2307 = vmul.f32 %v2287, %v2305
        %v2308 = vmul.f32 %v2288, %v2305
        %v2309 = vmul.f32 %v2289, %v2305
        %v2310 = vadd.f32 %v2300, %v2306
        %v2311 = vadd.f32 %v2301, %v2307
        %v2312 = vadd.f32 %v2302, %v2308
        %v2313 = vadd.f32 %v2303, %v2309
        %s2314 = sld [smem:[#allocation2 + $0x80]]
        %v2315 = vstv %s2314
        %v2316 = vmul.f32 %v2290, %v2315
        %v2317 = vmul.f32 %v2291, %v2315
        %v2318 = vmul.f32 %v2292, %v2315
        %v2319 = vmul.f32 %v2293, %v2315
        %v2320 = vadd.f32 %v2310, %v2316
        %v2321 = vadd.f32 %v2311, %v2317
        %v2322 = vadd.f32 %v2312, %v2318
        %v2323 = vadd.f32 %v2313, %v2319
        %s2324 = sld [smem:[#allocation4 + $0x2a]]
        %v2325 = vstv %s2324
        %v2326 = vsel %vm2294, %v2325, 0.0
        %v2327 = vsel %vm2295, %v2325, 0.0
        %v2328 = vsel %vm2296, %v2325, 0.0
        %v2329 = vsel %vm2297, %v2325, 0.0
        %v2330 = vadd.f32 %v2320, %v2326
        %v2331 = vadd.f32 %v2321, %v2327
        %v2332 = vadd.f32 %v2322, %v2328
        %v2333 = vadd.f32 %v2323, %v2329
        %v2334 = vmax.f32 %v2330, 0.0
        %v2335 = vmax.f32 %v2331, 0.0
        %v2336 = vmax.f32 %v2332, 0.0
        %v2337 = vmax.f32 %v2333, 0.0
        %2338 = vst [vmem:[%s284] sm:$0xff] %v2334
        %2339 = vst [vmem:[%s284 + $0x8] sm:$0xff] %v2335
        %2340 = vst [vmem:[%s284 + $0x10] sm:$0xff] %v2336
        %2341 = vst [vmem:[%s284 + $0x18] sm:$0xff] %v2337
        %s2342 = sld [smem:[#allocation2 + $0x81]]
        %v2343 = vstv %s2342
        %v2344 = vmul.f32 %v2282, %v2343
        %v2345 = vmul.f32 %v2283, %v2343
        %v2346 = vmul.f32 %v2284, %v2343
        %v2347 = vmul.f32 %v2285, %v2343
        %s2348 = sld [smem:[#allocation2 + $0x82]]
        %v2349 = vstv %s2348
        %v2350 = vmul.f32 %v2286, %v2349
        %v2351 = vmul.f32 %v2287, %v2349
        %v2352 = vmul.f32 %v2288, %v2349
        %v2353 = vmul.f32 %v2289, %v2349
        %v2354 = vadd.f32 %v2344, %v2350
        %v2355 = vadd.f32 %v2345, %v2351
        %v2356 = vadd.f32 %v2346, %v2352
        %v2357 = vadd.f32 %v2347, %v2353
        %s2358 = sld [smem:[#allocation2 + $0x83]]
        %v2359 = vstv %s2358
        %v2360 = vmul.f32 %v2290, %v2359
        %v2361 = vmul.f32 %v2291, %v2359
        %v2362 = vmul.f32 %v2292, %v2359
        %v2363 = vmul.f32 %v2293, %v2359
        %v2364 = vadd.f32 %v2354, %v2360
        %v2365 = vadd.f32 %v2355, %v2361
        %v2366 = vadd.f32 %v2356, %v2362
        %v2367 = vadd.f32 %v2357, %v2363
        %s2368 = sld [smem:[#allocation4 + $0x2b]]
        %v2369 = vstv %s2368
        %v2370 = vsel %vm2294, %v2369, 0.0
        %v2371 = vsel %vm2295, %v2369, 0.0
        %v2372 = vsel %vm2296, %v2369, 0.0
        %v2373 = vsel %vm2297, %v2369, 0.0
        %v2374 = vadd.f32 %v2364, %v2370
        %v2375 = vadd.f32 %v2365, %v2371
        %v2376 = vadd.f32 %v2366, %v2372
        %v2377 = vadd.f32 %v2367, %v2373
        %v2378 = vmax.f32 %v2374, 0.0
        %v2379 = vmax.f32 %v2375, 0.0
        %v2380 = vmax.f32 %v2376, 0.0
        %v2381 = vmax.f32 %v2377, 0.0
        %2382 = vst [vmem:[%s392] sm:$0xff] %v2378
        %2383 = vst [vmem:[%s392 + $0x8] sm:$0xff] %v2379
        %2384 = vst [vmem:[%s392 + $0x10] sm:$0xff] %v2380
        %2385 = vst [vmem:[%s392 + $0x18] sm:$0xff] %v2381
        %s2386 = sld [smem:[#allocation2 + $0x84]]
        %v2387 = vstv %s2386
        %v2388 = vmul.f32 %v2282, %v2387
        %v2389 = vmul.f32 %v2283, %v2387
        %v2390 = vmul.f32 %v2284, %v2387
        %v2391 = vmul.f32 %v2285, %v2387
        %s2392 = sld [smem:[#allocation2 + $0x85]]
        %v2393 = vstv %s2392
        %v2394 = vmul.f32 %v2286, %v2393
        %v2395 = vmul.f32 %v2287, %v2393
        %v2396 = vmul.f32 %v2288, %v2393
        %v2397 = vmul.f32 %v2289, %v2393
        %v2398 = vadd.f32 %v2388, %v2394
        %v2399 = vadd.f32 %v2389, %v2395
        %v2400 = vadd.f32 %v2390, %v2396
        %v2401 = vadd.f32 %v2391, %v2397
        %s2402 = sld [smem:[#allocation2 + $0x86]]
        %v2403 = vstv %s2402
        %v2404 = vmul.f32 %v2290, %v2403
        %v2405 = vmul.f32 %v2291, %v2403
        %v2406 = vmul.f32 %v2292, %v2403
        %v2407 = vmul.f32 %v2293, %v2403
        %v2408 = vadd.f32 %v2398, %v2404
        %v2409 = vadd.f32 %v2399, %v2405
        %v2410 = vadd.f32 %v2400, %v2406
        %v2411 = vadd.f32 %v2401, %v2407
        %s2412 = sld [smem:[#allocation4 + $0x2c]]
        %v2413 = vstv %s2412
        %v2414 = vsel %vm2294, %v2413, 0.0
        %v2415 = vsel %vm2295, %v2413, 0.0
        %v2416 = vsel %vm2296, %v2413, 0.0
        %v2417 = vsel %vm2297, %v2413, 0.0
        %v2418 = vadd.f32 %v2408, %v2414
        %v2419 = vadd.f32 %v2409, %v2415
        %v2420 = vadd.f32 %v2410, %v2416
        %v2421 = vadd.f32 %v2411, %v2417
        %v2422 = vmax.f32 %v2418, 0.0
        %v2423 = vmax.f32 %v2419, 0.0
        %v2424 = vmax.f32 %v2420, 0.0
        %v2425 = vmax.f32 %v2421, 0.0
        %2426 = vst [vmem:[%s437] sm:$0xff] %v2422
        %2427 = vst [vmem:[%s437 + $0x8] sm:$0xff] %v2423
        %2428 = vst [vmem:[%s437 + $0x10] sm:$0xff] %v2424
        %2429 = vst [vmem:[%s437 + $0x18] sm:$0xff] %v2425
        %v2430 = vld [vmem:[%s284] sm:$0xff]
        %v2431 = vld [vmem:[%s284 + $0x8] sm:$0xff]
        %v2432 = vld [vmem:[%s284 + $0x10] sm:$0xff]
        %v2433 = vld [vmem:[%s284 + $0x18] sm:$0xff]
        %v2434 = vld [vmem:[%s392] sm:$0xff]
        %v2435 = vld [vmem:[%s392 + $0x8] sm:$0xff]
        %v2436 = vld [vmem:[%s392 + $0x10] sm:$0xff]
        %v2437 = vld [vmem:[%s392 + $0x18] sm:$0xff]
        %v2438 = vld [vmem:[%s437] sm:$0xff]
        %v2439 = vld [vmem:[%s437 + $0x8] sm:$0xff]
        %v2440 = vld [vmem:[%s437 + $0x10] sm:$0xff]
        %v2441 = vld [vmem:[%s437 + $0x18] sm:$0xff]
        %vm2442 = vcmp.le.f32.partialorder %v286, 16.0
        %vm2443 = vcmp.le.f32.partialorder %v287, 16.0
        %vm2444 = vcmp.le.f32.partialorder %v288, 16.0
        %vm2445 = vcmp.le.f32.partialorder %v289, 16.0
        %s2446 = sld [smem:[#allocation2 + $0x87]]
        %v2447 = vstv %s2446
        %v2448 = vmul.f32 %v2430, %v2447
        %v2449 = vmul.f32 %v2431, %v2447
        %v2450 = vmul.f32 %v2432, %v2447
        %v2451 = vmul.f32 %v2433, %v2447
        %s2452 = sld [smem:[#allocation2 + $0x88]]
        %v2453 = vstv %s2452
        %v2454 = vmul.f32 %v2434, %v2453
        %v2455 = vmul.f32 %v2435, %v2453
        %v2456 = vmul.f32 %v2436, %v2453
        %v2457 = vmul.f32 %v2437, %v2453
        %v2458 = vadd.f32 %v2448, %v2454
        %v2459 = vadd.f32 %v2449, %v2455
        %v2460 = vadd.f32 %v2450, %v2456
        %v2461 = vadd.f32 %v2451, %v2457
        %s2462 = sld [smem:[#allocation2 + $0x89]]
        %v2463 = vstv %s2462
        %v2464 = vmul.f32 %v2438, %v2463
        %v2465 = vmul.f32 %v2439, %v2463
        %v2466 = vmul.f32 %v2440, %v2463
        %v2467 = vmul.f32 %v2441, %v2463
        %v2468 = vadd.f32 %v2458, %v2464
        %v2469 = vadd.f32 %v2459, %v2465
        %v2470 = vadd.f32 %v2460, %v2466
        %v2471 = vadd.f32 %v2461, %v2467
        %s2472 = sld [smem:[#allocation4 + $0x2d]]
        %v2473 = vstv %s2472
        %v2474 = vsel %vm2442, %v2473, 0.0
        %v2475 = vsel %vm2443, %v2473, 0.0
        %v2476 = vsel %vm2444, %v2473, 0.0
        %v2477 = vsel %vm2445, %v2473, 0.0
        %v2478 = vadd.f32 %v2468, %v2474
        %v2479 = vadd.f32 %v2469, %v2475
        %v2480 = vadd.f32 %v2470, %v2476
        %v2481 = vadd.f32 %v2471, %v2477
        %2482 = vst [vmem:[%s284] sm:$0xff] %v2478
        %2483 = vst [vmem:[%s284 + $0x8] sm:$0xff] %v2479
        %2484 = vst [vmem:[%s284 + $0x10] sm:$0xff] %v2480
        %2485 = vst [vmem:[%s284 + $0x18] sm:$0xff] %v2481
        %s2486 = sld [smem:[#allocation2 + $0x8a]]
        %v2487 = vstv %s2486
        %v2488 = vmul.f32 %v2430, %v2487
        %v2489 = vmul.f32 %v2431, %v2487
        %v2490 = vmul.f32 %v2432, %v2487
        %v2491 = vmul.f32 %v2433, %v2487
        %s2492 = sld [smem:[#allocation2 + $0x8b]]
        %v2493 = vstv %s2492
        %v2494 = vmul.f32 %v2434, %v2493
        %v2495 = vmul.f32 %v2435, %v2493
        %v2496 = vmul.f32 %v2436, %v2493
        %v2497 = vmul.f32 %v2437, %v2493
        %v2498 = vadd.f32 %v2488, %v2494
        %v2499 = vadd.f32 %v2489, %v2495
        %v2500 = vadd.f32 %v2490, %v2496
        %v2501 = vadd.f32 %v2491, %v2497
        %s2502 = sld [smem:[#allocation2 + $0x8c]]
        %v2503 = vstv %s2502
        %v2504 = vmul.f32 %v2438, %v2503
        %v2505 = vmul.f32 %v2439, %v2503
        %v2506 = vmul.f32 %v2440, %v2503
        %v2507 = vmul.f32 %v2441, %v2503
        %v2508 = vadd.f32 %v2498, %v2504
        %v2509 = vadd.f32 %v2499, %v2505
        %v2510 = vadd.f32 %v2500, %v2506
        %v2511 = vadd.f32 %v2501, %v2507
        %s2512 = sld [smem:[#allocation4 + $0x2e]]
        %v2513 = vstv %s2512
        %v2514 = vsel %vm2442, %v2513, 0.0
        %v2515 = vsel %vm2443, %v2513, 0.0
        %v2516 = vsel %vm2444, %v2513, 0.0
        %v2517 = vsel %vm2445, %v2513, 0.0
        %v2518 = vadd.f32 %v2508, %v2514
        %v2519 = vadd.f32 %v2509, %v2515
        %v2520 = vadd.f32 %v2510, %v2516
        %v2521 = vadd.f32 %v2511, %v2517
        %2522 = vst [vmem:[%s392] sm:$0xff] %v2518
        %2523 = vst [vmem:[%s392 + $0x8] sm:$0xff] %v2519
        %2524 = vst [vmem:[%s392 + $0x10] sm:$0xff] %v2520
        %2525 = vst [vmem:[%s392 + $0x18] sm:$0xff] %v2521
        %s2526 = sld [smem:[#allocation2 + $0x8d]]
        %v2527 = vstv %s2526
        %v2528 = vmul.f32 %v2430, %v2527
        %v2529 = vmul.f32 %v2431, %v2527
        %v2530 = vmul.f32 %v2432, %v2527
        %v2531 = vmul.f32 %v2433, %v2527
        %s2532 = sld [smem:[#allocation2 + $0x8e]]
        %v2533 = vstv %s2532
        %v2534 = vmul.f32 %v2434, %v2533
        %v2535 = vmul.f32 %v2435, %v2533
        %v2536 = vmul.f32 %v2436, %v2533
        %v2537 = vmul.f32 %v2437, %v2533
        %v2538 = vadd.f32 %v2528, %v2534
        %v2539 = vadd.f32 %v2529, %v2535
        %v2540 = vadd.f32 %v2530, %v2536
        %v2541 = vadd.f32 %v2531, %v2537
        %s2542 = sld [smem:[#allocation2 + $0x8f]]
        %v2543 = vstv %s2542
        %v2544 = vmul.f32 %v2438, %v2543
        %v2545 = vmul.f32 %v2439, %v2543
        %v2546 = vmul.f32 %v2440, %v2543
        %v2547 = vmul.f32 %v2441, %v2543
        %v2548 = vadd.f32 %v2538, %v2544
        %v2549 = vadd.f32 %v2539, %v2545
        %v2550 = vadd.f32 %v2540, %v2546
        %v2551 = vadd.f32 %v2541, %v2547
        %s2552 = sld [smem:[#allocation4 + $0x2f]]
        %v2553 = vstv %s2552
        %v2554 = vsel %vm2442, %v2553, 0.0
        %v2555 = vsel %vm2443, %v2553, 0.0
        %v2556 = vsel %vm2444, %v2553, 0.0
        %v2557 = vsel %vm2445, %v2553, 0.0
        %v2558 = vadd.f32 %v2548, %v2554
        %v2559 = vadd.f32 %v2549, %v2555
        %v2560 = vadd.f32 %v2550, %v2556
        %v2561 = vadd.f32 %v2551, %v2557
        %2562 = vst [vmem:[%s437] sm:$0xff] %v2558
        %2563 = vst [vmem:[%s437 + $0x8] sm:$0xff] %v2559
        %2564 = vst [vmem:[%s437 + $0x10] sm:$0xff] %v2560
        %2565 = vst [vmem:[%s437 + $0x18] sm:$0xff] %v2561
        %v2566 = vld [vmem:[%s284] sm:$0xff]
        %v2567 = vld [vmem:[%s284 + $0x8] sm:$0xff]
        %v2568 = vld [vmem:[%s284 + $0x10] sm:$0xff]
        %v2569 = vld [vmem:[%s284 + $0x18] sm:$0xff]
        %v2570 = vld [vmem:[%s392] sm:$0xff]
        %v2571 = vld [vmem:[%s392 + $0x8] sm:$0xff]
        %v2572 = vld [vmem:[%s392 + $0x10] sm:$0xff]
        %v2573 = vld [vmem:[%s392 + $0x18] sm:$0xff]
        %v2574 = vld [vmem:[%s437] sm:$0xff]
        %v2575 = vld [vmem:[%s437 + $0x8] sm:$0xff]
        %v2576 = vld [vmem:[%s437 + $0x10] sm:$0xff]
        %v2577 = vld [vmem:[%s437 + $0x18] sm:$0xff]
        %vm2578 = vcmp.le.f32.partialorder %v286, 17.0
        %vm2579 = vcmp.le.f32.partialorder %v287, 17.0
        %vm2580 = vcmp.le.f32.partialorder %v288, 17.0
        %vm2581 = vcmp.le.f32.partialorder %v289, 17.0
        %s2582 = sld [smem:[#allocation2 + $0x90]]
        %v2583 = vstv %s2582
        %v2584 = vmul.f32 %v2566, %v2583
        %v2585 = vmul.f32 %v2567, %v2583
        %v2586 = vmul.f32 %v2568, %v2583
        %v2587 = vmul.f32 %v2569, %v2583
        %s2588 = sld [smem:[#allocation2 + $0x91]]
        %v2589 = vstv %s2588
        %v2590 = vmul.f32 %v2570, %v2589
        %v2591 = vmul.f32 %v2571, %v2589
        %v2592 = vmul.f32 %v2572, %v2589
        %v2593 = vmul.f32 %v2573, %v2589
        %v2594 = vadd.f32 %v2584, %v2590
        %v2595 = vadd.f32 %v2585, %v2591
        %v2596 = vadd.f32 %v2586, %v2592
        %v2597 = vadd.f32 %v2587, %v2593
        %s2598 = sld [smem:[#allocation2 + $0x92]]
        %v2599 = vstv %s2598
        %v2600 = vmul.f32 %v2574, %v2599
        %v2601 = vmul.f32 %v2575, %v2599
        %v2602 = vmul.f32 %v2576, %v2599
        %v2603 = vmul.f32 %v2577, %v2599
        %v2604 = vadd.f32 %v2594, %v2600
        %v2605 = vadd.f32 %v2595, %v2601
        %v2606 = vadd.f32 %v2596, %v2602
        %v2607 = vadd.f32 %v2597, %v2603
        %s2608 = sld [smem:[#allocation4 + $0x30]]
        %v2609 = vstv %s2608
        %v2610 = vsel %vm2578, %v2609, 0.0
        %v2611 = vsel %vm2579, %v2609, 0.0
        %v2612 = vsel %vm2580, %v2609, 0.0
        %v2613 = vsel %vm2581, %v2609, 0.0
        %v2614 = vadd.f32 %v2604, %v2610
        %v2615 = vadd.f32 %v2605, %v2611
        %v2616 = vadd.f32 %v2606, %v2612
        %v2617 = vadd.f32 %v2607, %v2613
        %v2618 = vmax.f32 %v2614, 0.0
        %v2619 = vmax.f32 %v2615, 0.0
        %v2620 = vmax.f32 %v2616, 0.0
        %v2621 = vmax.f32 %v2617, 0.0
        %2622 = vst [vmem:[%s284] sm:$0xff] %v2618
        %2623 = vst [vmem:[%s284 + $0x8] sm:$0xff] %v2619
        %2624 = vst [vmem:[%s284 + $0x10] sm:$0xff] %v2620
        %2625 = vst [vmem:[%s284 + $0x18] sm:$0xff] %v2621
        %s2626 = sld [smem:[#allocation2 + $0x93]]
        %v2627 = vstv %s2626
        %v2628 = vmul.f32 %v2566, %v2627
        %v2629 = vmul.f32 %v2567, %v2627
        %v2630 = vmul.f32 %v2568, %v2627
        %v2631 = vmul.f32 %v2569, %v2627
        %s2632 = sld [smem:[#allocation2 + $0x94]]
        %v2633 = vstv %s2632
        %v2634 = vmul.f32 %v2570, %v2633
        %v2635 = vmul.f32 %v2571, %v2633
        %v2636 = vmul.f32 %v2572, %v2633
        %v2637 = vmul.f32 %v2573, %v2633
        %v2638 = vadd.f32 %v2628, %v2634
        %v2639 = vadd.f32 %v2629, %v2635
        %v2640 = vadd.f32 %v2630, %v2636
        %v2641 = vadd.f32 %v2631, %v2637
        %s2642 = sld [smem:[#allocation2 + $0x95]]
        %v2643 = vstv %s2642
        %v2644 = vmul.f32 %v2574, %v2643
        %v2645 = vmul.f32 %v2575, %v2643
        %v2646 = vmul.f32 %v2576, %v2643
        %v2647 = vmul.f32 %v2577, %v2643
        %v2648 = vadd.f32 %v2638, %v2644
        %v2649 = vadd.f32 %v2639, %v2645
        %v2650 = vadd.f32 %v2640, %v2646
        %v2651 = vadd.f32 %v2641, %v2647
        %s2652 = sld [smem:[#allocation4 + $0x31]]
        %v2653 = vstv %s2652
        %v2654 = vsel %vm2578, %v2653, 0.0
        %v2655 = vsel %vm2579, %v2653, 0.0
        %v2656 = vsel %vm2580, %v2653, 0.0
        %v2657 = vsel %vm2581, %v2653, 0.0
        %v2658 = vadd.f32 %v2648, %v2654
        %v2659 = vadd.f32 %v2649, %v2655
        %v2660 = vadd.f32 %v2650, %v2656
        %v2661 = vadd.f32 %v2651, %v2657
        %v2662 = vmax.f32 %v2658, 0.0
        %v2663 = vmax.f32 %v2659, 0.0
        %v2664 = vmax.f32 %v2660, 0.0
        %v2665 = vmax.f32 %v2661, 0.0
        %2666 = vst [vmem:[%s392] sm:$0xff] %v2662
        %2667 = vst [vmem:[%s392 + $0x8] sm:$0xff] %v2663
        %2668 = vst [vmem:[%s392 + $0x10] sm:$0xff] %v2664
        %2669 = vst [vmem:[%s392 + $0x18] sm:$0xff] %v2665
        %s2670 = sld [smem:[#allocation2 + $0x96]]
        %v2671 = vstv %s2670
        %v2672 = vmul.f32 %v2566, %v2671
        %v2673 = vmul.f32 %v2567, %v2671
        %v2674 = vmul.f32 %v2568, %v2671
        %v2675 = vmul.f32 %v2569, %v2671
        %s2676 = sld [smem:[#allocation2 + $0x97]]
        %v2677 = vstv %s2676
        %v2678 = vmul.f32 %v2570, %v2677
        %v2679 = vmul.f32 %v2571, %v2677
        %v2680 = vmul.f32 %v2572, %v2677
        %v2681 = vmul.f32 %v2573, %v2677
        %v2682 = vadd.f32 %v2672, %v2678
        %v2683 = vadd.f32 %v2673, %v2679
        %v2684 = vadd.f32 %v2674, %v2680
        %v2685 = vadd.f32 %v2675, %v2681
        %s2686 = sld [smem:[#allocation2 + $0x98]]
        %v2687 = vstv %s2686
        %v2688 = vmul.f32 %v2574, %v2687
        %v2689 = vmul.f32 %v2575, %v2687
        %v2690 = vmul.f32 %v2576, %v2687
        %v2691 = vmul.f32 %v2577, %v2687
        %v2692 = vadd.f32 %v2682, %v2688
        %v2693 = vadd.f32 %v2683, %v2689
        %v2694 = vadd.f32 %v2684, %v2690
        %v2695 = vadd.f32 %v2685, %v2691
        %s2696 = sld [smem:[#allocation4 + $0x32]]
        %v2697 = vstv %s2696
        %v2698 = vsel %vm2578, %v2697, 0.0
        %v2699 = vsel %vm2579, %v2697, 0.0
        %v2700 = vsel %vm2580, %v2697, 0.0
        %v2701 = vsel %vm2581, %v2697, 0.0
        %v2702 = vadd.f32 %v2692, %v2698
        %v2703 = vadd.f32 %v2693, %v2699
        %v2704 = vadd.f32 %v2694, %v2700
        %v2705 = vadd.f32 %v2695, %v2701
        %v2706 = vmax.f32 %v2702, 0.0
        %v2707 = vmax.f32 %v2703, 0.0
        %v2708 = vmax.f32 %v2704, 0.0
        %v2709 = vmax.f32 %v2705, 0.0
        %2710 = vst [vmem:[%s437] sm:$0xff] %v2706
        %2711 = vst [vmem:[%s437 + $0x8] sm:$0xff] %v2707
        %2712 = vst [vmem:[%s437 + $0x10] sm:$0xff] %v2708
        %2713 = vst [vmem:[%s437 + $0x18] sm:$0xff] %v2709
        %v2714 = vld [vmem:[%s284] sm:$0xff]
        %v2715 = vld [vmem:[%s284 + $0x8] sm:$0xff]
        %v2716 = vld [vmem:[%s284 + $0x10] sm:$0xff]
        %v2717 = vld [vmem:[%s284 + $0x18] sm:$0xff]
        %v2718 = vld [vmem:[%s392] sm:$0xff]
        %v2719 = vld [vmem:[%s392 + $0x8] sm:$0xff]
        %v2720 = vld [vmem:[%s392 + $0x10] sm:$0xff]
        %v2721 = vld [vmem:[%s392 + $0x18] sm:$0xff]
        %v2722 = vld [vmem:[%s437] sm:$0xff]
        %v2723 = vld [vmem:[%s437 + $0x8] sm:$0xff]
        %v2724 = vld [vmem:[%s437 + $0x10] sm:$0xff]
        %v2725 = vld [vmem:[%s437 + $0x18] sm:$0xff]
        %vm2726 = vcmp.le.f32.partialorder %v286, 18.0
        %vm2727 = vcmp.le.f32.partialorder %v287, 18.0
        %vm2728 = vcmp.le.f32.partialorder %v288, 18.0
        %vm2729 = vcmp.le.f32.partialorder %v289, 18.0
        %s2730 = sld [smem:[#allocation2 + $0x99]]
        %v2731 = vstv %s2730
        %v2732 = vmul.f32 %v2714, %v2731
        %v2733 = vmul.f32 %v2715, %v2731
        %v2734 = vmul.f32 %v2716, %v2731
        %v2735 = vmul.f32 %v2717, %v2731
        %s2736 = sld [smem:[#allocation2 + $0x9a]]
        %v2737 = vstv %s2736
        %v2738 = vmul.f32 %v2718, %v2737
        %v2739 = vmul.f32 %v2719, %v2737
        %v2740 = vmul.f32 %v2720, %v2737
        %v2741 = vmul.f32 %v2721, %v2737
        %v2742 = vadd.f32 %v2732, %v2738
        %v2743 = vadd.f32 %v2733, %v2739
        %v2744 = vadd.f32 %v2734, %v2740
        %v2745 = vadd.f32 %v2735, %v2741
        %s2746 = sld [smem:[#allocation2 + $0x9b]]
        %v2747 = vstv %s2746
        %v2748 = vmul.f32 %v2722, %v2747
        %v2749 = vmul.f32 %v2723, %v2747
        %v2750 = vmul.f32 %v2724, %v2747
        %v2751 = vmul.f32 %v2725, %v2747
        %v2752 = vadd.f32 %v2742, %v2748
        %v2753 = vadd.f32 %v2743, %v2749
        %v2754 = vadd.f32 %v2744, %v2750
        %v2755 = vadd.f32 %v2745, %v2751
        %s2756 = sld [smem:[#allocation4 + $0x33]]
        %v2757 = vstv %s2756
        %v2758 = vsel %vm2726, %v2757, 0.0
        %v2759 = vsel %vm2727, %v2757, 0.0
        %v2760 = vsel %vm2728, %v2757, 0.0
        %v2761 = vsel %vm2729, %v2757, 0.0
        %v2762 = vadd.f32 %v2752, %v2758
        %v2763 = vadd.f32 %v2753, %v2759
        %v2764 = vadd.f32 %v2754, %v2760
        %v2765 = vadd.f32 %v2755, %v2761
        %2766 = vst [vmem:[%s284] sm:$0xff] %v2762
        %2767 = vst [vmem:[%s284 + $0x8] sm:$0xff] %v2763
        %2768 = vst [vmem:[%s284 + $0x10] sm:$0xff] %v2764
        %2769 = vst [vmem:[%s284 + $0x18] sm:$0xff] %v2765
        %s2770 = sld [smem:[#allocation2 + $0x9c]]
        %v2771 = vstv %s2770
        %v2772 = vmul.f32 %v2714, %v2771
        %v2773 = vmul.f32 %v2715, %v2771
        %v2774 = vmul.f32 %v2716, %v2771
        %v2775 = vmul.f32 %v2717, %v2771
        %s2776 = sld [smem:[#allocation2 + $0x9d]]
        %v2777 = vstv %s2776
        %v2778 = vmul.f32 %v2718, %v2777
        %v2779 = vmul.f32 %v2719, %v2777
        %v2780 = vmul.f32 %v2720, %v2777
        %v2781 = vmul.f32 %v2721, %v2777
        %v2782 = vadd.f32 %v2772, %v2778
        %v2783 = vadd.f32 %v2773, %v2779
        %v2784 = vadd.f32 %v2774, %v2780
        %v2785 = vadd.f32 %v2775, %v2781
        %s2786 = sld [smem:[#allocation2 + $0x9e]]
        %v2787 = vstv %s2786
        %v2788 = vmul.f32 %v2722, %v2787
        %v2789 = vmul.f32 %v2723, %v2787
        %v2790 = vmul.f32 %v2724, %v2787
        %v2791 = vmul.f32 %v2725, %v2787
        %v2792 = vadd.f32 %v2782, %v2788
        %v2793 = vadd.f32 %v2783, %v2789
        %v2794 = vadd.f32 %v2784, %v2790
        %v2795 = vadd.f32 %v2785, %v2791
        %s2796 = sld [smem:[#allocation4 + $0x34]]
        %v2797 = vstv %s2796
        %v2798 = vsel %vm2726, %v2797, 0.0
        %v2799 = vsel %vm2727, %v2797, 0.0
        %v2800 = vsel %vm2728, %v2797, 0.0
        %v2801 = vsel %vm2729, %v2797, 0.0
        %v2802 = vadd.f32 %v2792, %v2798
        %v2803 = vadd.f32 %v2793, %v2799
        %v2804 = vadd.f32 %v2794, %v2800
        %v2805 = vadd.f32 %v2795, %v2801
        %2806 = vst [vmem:[%s392] sm:$0xff] %v2802
        %2807 = vst [vmem:[%s392 + $0x8] sm:$0xff] %v2803
        %2808 = vst [vmem:[%s392 + $0x10] sm:$0xff] %v2804
        %2809 = vst [vmem:[%s392 + $0x18] sm:$0xff] %v2805
        %s2810 = sld [smem:[#allocation2 + $0x9f]]
        %v2811 = vstv %s2810
        %v2812 = vmul.f32 %v2714, %v2811
        %v2813 = vmul.f32 %v2715, %v2811
        %v2814 = vmul.f32 %v2716, %v2811
        %v2815 = vmul.f32 %v2717, %v2811
        %s2816 = sld [smem:[#allocation2 + $0xa0]]
        %v2817 = vstv %s2816
        %v2818 = vmul.f32 %v2718, %v2817
        %v2819 = vmul.f32 %v2719, %v2817
        %v2820 = vmul.f32 %v2720, %v2817
        %v2821 = vmul.f32 %v2721, %v2817
        %v2822 = vadd.f32 %v2812, %v2818
        %v2823 = vadd.f32 %v2813, %v2819
        %v2824 = vadd.f32 %v2814, %v2820
        %v2825 = vadd.f32 %v2815, %v2821
        %s2826 = sld [smem:[#allocation2 + $0xa1]]
        %v2827 = vstv %s2826
        %v2828 = vmul.f32 %v2722, %v2827
        %v2829 = vmul.f32 %v2723, %v2827
        %v2830 = vmul.f32 %v2724, %v2827
        %v2831 = vmul.f32 %v2725, %v2827
        %v2832 = vadd.f32 %v2822, %v2828
        %v2833 = vadd.f32 %v2823, %v2829
        %v2834 = vadd.f32 %v2824, %v2830
        %v2835 = vadd.f32 %v2825, %v2831
        %s2836 = sld [smem:[#allocation4 + $0x35]]
        %v2837 = vstv %s2836
        %v2838 = vsel %vm2726, %v2837, 0.0
        %v2839 = vsel %vm2727, %v2837, 0.0
        %v2840 = vsel %vm2728, %v2837, 0.0
        %v2841 = vsel %vm2729, %v2837, 0.0
        %v2842 = vadd.f32 %v2832, %v2838
        %v2843 = vadd.f32 %v2833, %v2839
        %v2844 = vadd.f32 %v2834, %v2840
        %v2845 = vadd.f32 %v2835, %v2841
        %2846 = vst [vmem:[%s437] sm:$0xff] %v2842
        %2847 = vst [vmem:[%s437 + $0x8] sm:$0xff] %v2843
        %2848 = vst [vmem:[%s437 + $0x10] sm:$0xff] %v2844
        %2849 = vst [vmem:[%s437 + $0x18] sm:$0xff] %v2845
        %v2850 = vld [vmem:[%s284] sm:$0xff]
        %v2851 = vld [vmem:[%s284 + $0x8] sm:$0xff]
        %v2852 = vld [vmem:[%s284 + $0x10] sm:$0xff]
        %v2853 = vld [vmem:[%s284 + $0x18] sm:$0xff]
        %v2854 = vld [vmem:[%s392] sm:$0xff]
        %v2855 = vld [vmem:[%s392 + $0x8] sm:$0xff]
        %v2856 = vld [vmem:[%s392 + $0x10] sm:$0xff]
        %v2857 = vld [vmem:[%s392 + $0x18] sm:$0xff]
        %v2858 = vld [vmem:[%s437] sm:$0xff]
        %v2859 = vld [vmem:[%s437 + $0x8] sm:$0xff]
        %v2860 = vld [vmem:[%s437 + $0x10] sm:$0xff]
        %v2861 = vld [vmem:[%s437 + $0x18] sm:$0xff]
        %vm2862 = vcmp.le.f32.partialorder %v286, 19.0
        %vm2863 = vcmp.le.f32.partialorder %v287, 19.0
        %vm2864 = vcmp.le.f32.partialorder %v288, 19.0
        %vm2865 = vcmp.le.f32.partialorder %v289, 19.0
        %s2866 = sld [smem:[#allocation2 + $0xa2]]
        %v2867 = vstv %s2866
        %v2868 = vmul.f32 %v2850, %v2867
        %v2869 = vmul.f32 %v2851, %v2867
        %v2870 = vmul.f32 %v2852, %v2867
        %v2871 = vmul.f32 %v2853, %v2867
        %s2872 = sld [smem:[#allocation2 + $0xa3]]
        %v2873 = vstv %s2872
        %v2874 = vmul.f32 %v2854, %v2873
        %v2875 = vmul.f32 %v2855, %v2873
        %v2876 = vmul.f32 %v2856, %v2873
        %v2877 = vmul.f32 %v2857, %v2873
        %v2878 = vadd.f32 %v2868, %v2874
        %v2879 = vadd.f32 %v2869, %v2875
        %v2880 = vadd.f32 %v2870, %v2876
        %v2881 = vadd.f32 %v2871, %v2877
        %s2882 = sld [smem:[#allocation2 + $0xa4]]
        %v2883 = vstv %s2882
        %v2884 = vmul.f32 %v2858, %v2883
        %v2885 = vmul.f32 %v2859, %v2883
        %v2886 = vmul.f32 %v2860, %v2883
        %v2887 = vmul.f32 %v2861, %v2883
        %v2888 = vadd.f32 %v2878, %v2884
        %v2889 = vadd.f32 %v2879, %v2885
        %v2890 = vadd.f32 %v2880, %v2886
        %v2891 = vadd.f32 %v2881, %v2887
        %s2892 = sld [smem:[#allocation4 + $0x36]]
        %v2893 = vstv %s2892
        %v2894 = vsel %vm2862, %v2893, 0.0
        %v2895 = vsel %vm2863, %v2893, 0.0
        %v2896 = vsel %vm2864, %v2893, 0.0
        %v2897 = vsel %vm2865, %v2893, 0.0
        %v2898 = vadd.f32 %v2888, %v2894
        %v2899 = vadd.f32 %v2889, %v2895
        %v2900 = vadd.f32 %v2890, %v2896
        %v2901 = vadd.f32 %v2891, %v2897
        %v2902 = vmax.f32 %v2898, 0.0
        %v2903 = vmax.f32 %v2899, 0.0
        %v2904 = vmax.f32 %v2900, 0.0
        %v2905 = vmax.f32 %v2901, 0.0
        %2906 = vst [vmem:[%s284] sm:$0xff] %v2902
        %2907 = vst [vmem:[%s284 + $0x8] sm:$0xff] %v2903
        %2908 = vst [vmem:[%s284 + $0x10] sm:$0xff] %v2904
        %2909 = vst [vmem:[%s284 + $0x18] sm:$0xff] %v2905
        %s2910 = sld [smem:[#allocation2 + $0xa5]]
        %v2911 = vstv %s2910
        %v2912 = vmul.f32 %v2850, %v2911
        %v2913 = vmul.f32 %v2851, %v2911
        %v2914 = vmul.f32 %v2852, %v2911
        %v2915 = vmul.f32 %v2853, %v2911
        %s2916 = sld [smem:[#allocation2 + $0xa6]]
        %v2917 = vstv %s2916
        %v2918 = vmul.f32 %v2854, %v2917
        %v2919 = vmul.f32 %v2855, %v2917
        %v2920 = vmul.f32 %v2856, %v2917
        %v2921 = vmul.f32 %v2857, %v2917
        %v2922 = vadd.f32 %v2912, %v2918
        %v2923 = vadd.f32 %v2913, %v2919
        %v2924 = vadd.f32 %v2914, %v2920
        %v2925 = vadd.f32 %v2915, %v2921
        %s2926 = sld [smem:[#allocation2 + $0xa7]]
        %v2927 = vstv %s2926
        %v2928 = vmul.f32 %v2858, %v2927
        %v2929 = vmul.f32 %v2859, %v2927
        %v2930 = vmul.f32 %v2860, %v2927
        %v2931 = vmul.f32 %v2861, %v2927
        %v2932 = vadd.f32 %v2922, %v2928
        %v2933 = vadd.f32 %v2923, %v2929
        %v2934 = vadd.f32 %v2924, %v2930
        %v2935 = vadd.f32 %v2925, %v2931
        %s2936 = sld [smem:[#allocation4 + $0x37]]
        %v2937 = vstv %s2936
        %v2938 = vsel %vm2862, %v2937, 0.0
        %v2939 = vsel %vm2863, %v2937, 0.0
        %v2940 = vsel %vm2864, %v2937, 0.0
        %v2941 = vsel %vm2865, %v2937, 0.0
        %v2942 = vadd.f32 %v2932, %v2938
        %v2943 = vadd.f32 %v2933, %v2939
        %v2944 = vadd.f32 %v2934, %v2940
        %v2945 = vadd.f32 %v2935, %v2941
        %v2946 = vmax.f32 %v2942, 0.0
        %v2947 = vmax.f32 %v2943, 0.0
        %v2948 = vmax.f32 %v2944, 0.0
        %v2949 = vmax.f32 %v2945, 0.0
        %2950 = vst [vmem:[%s392] sm:$0xff] %v2946
        %2951 = vst [vmem:[%s392 + $0x8] sm:$0xff] %v2947
        %2952 = vst [vmem:[%s392 + $0x10] sm:$0xff] %v2948
        %2953 = vst [vmem:[%s392 + $0x18] sm:$0xff] %v2949
        %s2954 = sld [smem:[#allocation2 + $0xa8]]
        %v2955 = vstv %s2954
        %v2956 = vmul.f32 %v2850, %v2955
        %v2957 = vmul.f32 %v2851, %v2955
        %v2958 = vmul.f32 %v2852, %v2955
        %v2959 = vmul.f32 %v2853, %v2955
        %s2960 = sld [smem:[#allocation2 + $0xa9]]
        %v2961 = vstv %s2960
        %v2962 = vmul.f32 %v2854, %v2961
        %v2963 = vmul.f32 %v2855, %v2961
        %v2964 = vmul.f32 %v2856, %v2961
        %v2965 = vmul.f32 %v2857, %v2961
        %v2966 = vadd.f32 %v2956, %v2962
        %v2967 = vadd.f32 %v2957, %v2963
        %v2968 = vadd.f32 %v2958, %v2964
        %v2969 = vadd.f32 %v2959, %v2965
        %s2970 = sld [smem:[#allocation2 + $0xaa]]
        %v2971 = vstv %s2970
        %v2972 = vmul.f32 %v2858, %v2971
        %v2973 = vmul.f32 %v2859, %v2971
        %v2974 = vmul.f32 %v2860, %v2971
        %v2975 = vmul.f32 %v2861, %v2971
        %v2976 = vadd.f32 %v2966, %v2972
        %v2977 = vadd.f32 %v2967, %v2973
        %v2978 = vadd.f32 %v2968, %v2974
        %v2979 = vadd.f32 %v2969, %v2975
        %s2980 = sld [smem:[#allocation4 + $0x38]]
        %v2981 = vstv %s2980
        %v2982 = vsel %vm2862, %v2981, 0.0
        %v2983 = vsel %vm2863, %v2981, 0.0
        %v2984 = vsel %vm2864, %v2981, 0.0
        %v2985 = vsel %vm2865, %v2981, 0.0
        %v2986 = vadd.f32 %v2976, %v2982
        %v2987 = vadd.f32 %v2977, %v2983
        %v2988 = vadd.f32 %v2978, %v2984
        %v2989 = vadd.f32 %v2979, %v2985
        %v2990 = vmax.f32 %v2986, 0.0
        %v2991 = vmax.f32 %v2987, 0.0
        %v2992 = vmax.f32 %v2988, 0.0
        %v2993 = vmax.f32 %v2989, 0.0
        %2994 = vst [vmem:[%s437] sm:$0xff] %v2990
        %2995 = vst [vmem:[%s437 + $0x8] sm:$0xff] %v2991
        %2996 = vst [vmem:[%s437 + $0x10] sm:$0xff] %v2992
        %2997 = vst [vmem:[%s437 + $0x18] sm:$0xff] %v2993
        %v2998 = vld [vmem:[%s284] sm:$0xff]
        %v2999 = vld [vmem:[%s284 + $0x8] sm:$0xff]
        %v3000 = vld [vmem:[%s284 + $0x10] sm:$0xff]
        %v3001 = vld [vmem:[%s284 + $0x18] sm:$0xff]
        %v3002 = vld [vmem:[%s392] sm:$0xff]
        %v3003 = vld [vmem:[%s392 + $0x8] sm:$0xff]
        %v3004 = vld [vmem:[%s392 + $0x10] sm:$0xff]
        %v3005 = vld [vmem:[%s392 + $0x18] sm:$0xff]
        %v3006 = vld [vmem:[%s437] sm:$0xff]
        %v3007 = vld [vmem:[%s437 + $0x8] sm:$0xff]
        %v3008 = vld [vmem:[%s437 + $0x10] sm:$0xff]
        %v3009 = vld [vmem:[%s437 + $0x18] sm:$0xff]
        %vm3010 = vcmp.le.f32.partialorder %v286, 20.0
        %vm3011 = vcmp.le.f32.partialorder %v287, 20.0
        %vm3012 = vcmp.le.f32.partialorder %v288, 20.0
        %vm3013 = vcmp.le.f32.partialorder %v289, 20.0
        %s3014 = sld [smem:[#allocation2 + $0xab]]
        %v3015 = vstv %s3014
        %v3016 = vmul.f32 %v2998, %v3015
        %v3017 = vmul.f32 %v2999, %v3015
        %v3018 = vmul.f32 %v3000, %v3015
        %v3019 = vmul.f32 %v3001, %v3015
        %s3020 = sld [smem:[#allocation2 + $0xac]]
        %v3021 = vstv %s3020
        %v3022 = vmul.f32 %v3002, %v3021
        %v3023 = vmul.f32 %v3003, %v3021
        %v3024 = vmul.f32 %v3004, %v3021
        %v3025 = vmul.f32 %v3005, %v3021
        %v3026 = vadd.f32 %v3016, %v3022
        %v3027 = vadd.f32 %v3017, %v3023
        %v3028 = vadd.f32 %v3018, %v3024
        %v3029 = vadd.f32 %v3019, %v3025
        %s3030 = sld [smem:[#allocation2 + $0xad]]
        %v3031 = vstv %s3030
        %v3032 = vmul.f32 %v3006, %v3031
        %v3033 = vmul.f32 %v3007, %v3031
        %v3034 = vmul.f32 %v3008, %v3031
        %v3035 = vmul.f32 %v3009, %v3031
        %v3036 = vadd.f32 %v3026, %v3032
        %v3037 = vadd.f32 %v3027, %v3033
        %v3038 = vadd.f32 %v3028, %v3034
        %v3039 = vadd.f32 %v3029, %v3035
        %s3040 = sld [smem:[#allocation4 + $0x39]]
        %v3041 = vstv %s3040
        %v3042 = vsel %vm3010, %v3041, 0.0
        %v3043 = vsel %vm3011, %v3041, 0.0
        %v3044 = vsel %vm3012, %v3041, 0.0
        %v3045 = vsel %vm3013, %v3041, 0.0
        %v3046 = vadd.f32 %v3036, %v3042
        %v3047 = vadd.f32 %v3037, %v3043
        %v3048 = vadd.f32 %v3038, %v3044
        %v3049 = vadd.f32 %v3039, %v3045
        %3050 = vst [vmem:[%s284] sm:$0xff] %v3046
        %3051 = vst [vmem:[%s284 + $0x8] sm:$0xff] %v3047
        %3052 = vst [vmem:[%s284 + $0x10] sm:$0xff] %v3048
        %3053 = vst [vmem:[%s284 + $0x18] sm:$0xff] %v3049
        %s3054 = sld [smem:[#allocation2 + $0xae]]
        %v3055 = vstv %s3054
        %v3056 = vmul.f32 %v2998, %v3055
        %v3057 = vmul.f32 %v2999, %v3055
        %v3058 = vmul.f32 %v3000, %v3055
        %v3059 = vmul.f32 %v3001, %v3055
        %s3060 = sld [smem:[#allocation2 + $0xaf]]
        %v3061 = vstv %s3060
        %v3062 = vmul.f32 %v3002, %v3061
        %v3063 = vmul.f32 %v3003, %v3061
        %v3064 = vmul.f32 %v3004, %v3061
        %v3065 = vmul.f32 %v3005, %v3061
        %v3066 = vadd.f32 %v3056, %v3062
        %v3067 = vadd.f32 %v3057, %v3063
        %v3068 = vadd.f32 %v3058, %v3064
        %v3069 = vadd.f32 %v3059, %v3065
        %s3070 = sld [smem:[#allocation2 + $0xb0]]
        %v3071 = vstv %s3070
        %v3072 = vmul.f32 %v3006, %v3071
        %v3073 = vmul.f32 %v3007, %v3071
        %v3074 = vmul.f32 %v3008, %v3071
        %v3075 = vmul.f32 %v3009, %v3071
        %v3076 = vadd.f32 %v3066, %v3072
        %v3077 = vadd.f32 %v3067, %v3073
        %v3078 = vadd.f32 %v3068, %v3074
        %v3079 = vadd.f32 %v3069, %v3075
        %s3080 = sld [smem:[#allocation4 + $0x3a]]
        %v3081 = vstv %s3080
        %v3082 = vsel %vm3010, %v3081, 0.0
        %v3083 = vsel %vm3011, %v3081, 0.0
        %v3084 = vsel %vm3012, %v3081, 0.0
        %v3085 = vsel %vm3013, %v3081, 0.0
        %v3086 = vadd.f32 %v3076, %v3082
        %v3087 = vadd.f32 %v3077, %v3083
        %v3088 = vadd.f32 %v3078, %v3084
        %v3089 = vadd.f32 %v3079, %v3085
        %3090 = vst [vmem:[%s392] sm:$0xff] %v3086
        %3091 = vst [vmem:[%s392 + $0x8] sm:$0xff] %v3087
        %3092 = vst [vmem:[%s392 + $0x10] sm:$0xff] %v3088
        %3093 = vst [vmem:[%s392 + $0x18] sm:$0xff] %v3089
        %s3094 = sld [smem:[#allocation2 + $0xb1]]
        %v3095 = vstv %s3094
        %v3096 = vmul.f32 %v2998, %v3095
        %v3097 = vmul.f32 %v2999, %v3095
        %v3098 = vmul.f32 %v3000, %v3095
        %v3099 = vmul.f32 %v3001, %v3095
        %s3100 = sld [smem:[#allocation2 + $0xb2]]
        %v3101 = vstv %s3100
        %v3102 = vmul.f32 %v3002, %v3101
        %v3103 = vmul.f32 %v3003, %v3101
        %v3104 = vmul.f32 %v3004, %v3101
        %v3105 = vmul.f32 %v3005, %v3101
        %v3106 = vadd.f32 %v3096, %v3102
        %v3107 = vadd.f32 %v3097, %v3103
        %v3108 = vadd.f32 %v3098, %v3104
        %v3109 = vadd.f32 %v3099, %v3105
        %s3110 = sld [smem:[#allocation2 + $0xb3]]
        %v3111 = vstv %s3110
        %v3112 = vmul.f32 %v3006, %v3111
        %v3113 = vmul.f32 %v3007, %v3111
        %v3114 = vmul.f32 %v3008, %v3111
        %v3115 = vmul.f32 %v3009, %v3111
        %v3116 = vadd.f32 %v3106, %v3112
        %v3117 = vadd.f32 %v3107, %v3113
        %v3118 = vadd.f32 %v3108, %v3114
        %v3119 = vadd.f32 %v3109, %v3115
        %s3120 = sld [smem:[#allocation4 + $0x3b]]
        %v3121 = vstv %s3120
        %v3122 = vsel %vm3010, %v3121, 0.0
        %v3123 = vsel %vm3011, %v3121, 0.0
        %v3124 = vsel %vm3012, %v3121, 0.0
        %v3125 = vsel %vm3013, %v3121, 0.0
        %v3126 = vadd.f32 %v3116, %v3122
        %v3127 = vadd.f32 %v3117, %v3123
        %v3128 = vadd.f32 %v3118, %v3124
        %v3129 = vadd.f32 %v3119, %v3125
        %3130 = vst [vmem:[%s437] sm:$0xff] %v3126
        %3131 = vst [vmem:[%s437 + $0x8] sm:$0xff] %v3127
        %3132 = vst [vmem:[%s437 + $0x10] sm:$0xff] %v3128
        %3133 = vst [vmem:[%s437 + $0x18] sm:$0xff] %v3129
        %s3134 = smul.u32 4, %s22
        %p3135 = scmp.lt.s32.totalorder %s21, 1
        %s3136 = scalar_select %p3135, %s21, 1
        %p3137 = scmp.lt.s32.totalorder %s3134, 3
        %s3138 = scalar_select %p3137, %s3134, 3
        %s3139 = smul.addr %s3136, 12
        %s3140 = sadd.s32 %s3138, %s3139
        %s3141 = smul.addr %s3140, 8
        %s3142 = scalar_lea.vmem %s4, %s3141
        // Predicated region
        $region45: #{model_with_blocks_forward.1} parent=35 // pred_check
          %p3143 = pneg %p145
        $region46: #{model_with_blocks_forward.1} parent=35 // pred_check_branch
          %3145 = sbr.rel (%p3143) target = $region48
        $region47: #{model_with_blocks_forward.1} parent=35 // pred_region
          %s3146 = smul.u32 4, %s22
        $region48: #{model_with_blocks_forward.1} parent=35 // pred_fallthru
          _
      $region36: #{model_with_blocks_forward.1} parent=5 // pred_fallthru
        _
      %p3147 = scmp.le.s32.totalorder 2, %s12
      // Predicated region
      $region49: #{model_with_blocks_forward.1} parent=5 // pred_check
        %p3148 = pneg %p3147
      $region50: #{model_with_blocks_forward.1} parent=5 // pred_check_branch
        %3150 = sbr.rel (%p3148) target = $region52
      $region51: #{model_with_blocks_forward.1} parent=5 // pred_region
        %s3151 = ssub.s32 %s12, 2
        // Predicated region
        $region53: #{model_with_blocks_forward.1} parent=51 // pred_check
          %p3152 = pneg %p151
        $region54: #{model_with_blocks_forward.1} parent=51 // pred_check_branch
          %3154 = sbr.rel (%p3152) target = $region56
        $region55: #{model_with_blocks_forward.1} parent=51 // pred_region
          %s3155 = smul.u32 4, %s24
          %p3156 = scmp.lt.s32.totalorder %s23, 1
          %s3157 = scalar_select %p3156, %s23, 1
          %p3158 = scmp.lt.s32.totalorder %s3155, 3
          %s3159 = scalar_select %p3158, %s3155, 3
          %s3160 = smul.addr %s3157, 12
          %s3161 = sadd.s32 %s3159, %s3160
          %s3162 = smul.addr %s3161, 8
          %s3163 = scalar_lea.vmem %s4, %s3162
        $region56: #{model_with_blocks_forward.1} parent=51 // pred_fallthru
          _
      $region52: #{model_with_blocks_forward.1} parent=5 // pred_fallthru
        _
    $region6: #{model_with_blocks_forward.1} parent=1 // loop_footer
      %s16 = sadd.s32 1, %s12
    $region7: #{model_with_blocks_forward.1} parent=1 // loop_footer_branch
      %11 = sbr.rel target = $region3
    $region8: #{model_with_blocks_forward.1} parent=1 // loop_exit
      _
    %3164 = vsyncpa [#allocation3], 1
    %s3165 = scalar_lea.sflag [#allocation3], 1
    %3166 = vsyncpa %s3165, 1
    %3167 = vsyncpa [#allocation5], 1

</llo_original>
